<compile_context>
chip_gen: v5e
topology: v5e:2x2
jax: 0.10.0
libtpu: 0.0.40
codegen_flags: <defaults>
</compile_context>

<pallas_src>
import functools

import numpy as np

import jax
import jax.numpy as jnp
from jax.experimental import pallas as pl
from jax.experimental.pallas import tpu as pltpu

BN_EPS = 1e-5
LANE = 128       # conv output channels are zero-padded to this (lane-dense stores)
SUBLANE = 8
# MXU input dtype (taps + weights + stored conv1 intermediate).  Accumulation,
# BN statistics and the final conv output stay float32.
# TODO(synk): add a v7x-only fp8(e4m3) tap/weight path (selected via
# pltpu.get_tpu_info()) once the kernel is compute-bound.
MATMUL_DTYPE = jnp.bfloat16


def _round_up(x, m):
    return (x + m - 1) // m * m


def _vmem_capacity_bytes():
    try:
        return int(pltpu.get_tpu_info().vmem_capacity_bytes)
    except Exception:
        return 64 * 1024 * 1024        # conservative: v7x per-TensorCore VMEM


def _vmem_limit_bytes():
    return int(_vmem_capacity_bytes() * 3 // 4)


def _auto_tile_rows(H, W, cin_p, cout_p, out_bytes=4):
    """Largest multiple-of-8 row tile whose per-step footprint fits the VMEM budget."""
    ws = W + 3
    budget = min(_vmem_capacity_bytes() // 2, 48 * 1024 * 1024)
    in_b = jnp.dtype(MATMUL_DTYPE).itemsize
    best = SUBLANE
    cap = _round_up(H + 1, SUBLANE)
    th = SUBLANE
    while th <= cap:
        rows = th * ws
        rtot = (th + 3) * ws
        fp = (2 * rows * cin_p * in_b            # main activation block (double-buffered)
              + 2 * 3 * ws * cin_p * in_b        # halo block
              + 2 * 9 * cin_p * cout_p * in_b    # resident weights
              + 2 * rows * cout_p * out_bytes    # conv output block
              + 2 * rtot * cin_p * 4             # in-kernel window / masked copy (f32)
              + rows * cin_p * in_b              # tap-slice temporary
              + rows * cout_p * 4                # f32 accumulator
              + 4 * 8 * cout_p * 4)              # stats blocks
        if fp <= budget:
            best = th
        th += SUBLANE
    return best


# ------------------------------ Pallas kernel --------------------------------

def _conv_bn_stage_kernel(x_ref, halo_ref, w_ref, scale_ref, shift_ref,
                          cmask_in_ref, cmask_out_ref,
                          conv_ref, stats_ref,
                          *, th, ws, H, ro_in, apply_bn_relu):
    """One (image, row-tile) grid step: [fused producer BN+ReLU] -> conv3x3 -> BN partial stats.

    x_ref        (1, th*ws, Cin_p)    activation row slab (flattened rows x (W+3), padded layout)
    halo_ref     (1, 1, 3*ws, Cin_p)  next-3-rows halo of the same image
    w_ref        (9, Cin_p, Cout_p)   conv weights, tap-major, resident across the grid
    scale_ref    (1, Cin_p)           producer-BN scale (used iff apply_bn_relu)
    shift_ref    (1, Cin_p)           producer-BN shift
    cmask_*_ref  (rows, 1) int32      1 inside the valid column range, 0 on pad columns
    conv_ref     (1, th*ws, Cout_p)   conv output tile (bf16 intermediate / f32 final)
    stats_ref    (1, 1, 8, Cout_p)    rows 0/1 = per-tile [sum, sum_sq] over valid outputs
    """
    i = pl.program_id(1)
    rows_blk = th * ws

    # Assemble the (th+3)-row halo'd window in VMEM (no HBM im2col stream).
    window = jnp.concatenate([x_ref[0], halo_ref[0, 0]], axis=0)  # ((th+3)*ws, Cin_p)

    if apply_bn_relu:
        # Fused producer BatchNorm + ReLU, applied on load; positions outside
        # the valid image region are forced to exactly zero (conv zero-padding).
        xf = window.astype(jnp.float32) * scale_ref[...] + shift_ref[...]
        xf = jnp.maximum(xf, 0.0)
        ridx = jax.lax.broadcasted_iota(jnp.int32, (window.shape[0], 1), 0)
        row_ok = ((ridx >= (ro_in - i * th) * ws) &
                  (ridx < (ro_in + H - i * th) * ws))
        window = jnp.where(row_ok & (cmask_in_ref[...] > 0), xf, 0.0)
        window = window.astype(MATMUL_DTYPE)

    # 3x3 conv as 9 accumulating K=Cin MXU matmuls over statically shifted
    # views of the flattened window (tap construction stays in VMEM/vregs).
    acc = None
    for ky in range(3):
        for kx in range(3):
            off = ky * ws + kx
            taps = window[off:off + rows_blk, :]
            part = jnp.dot(taps, w_ref[ky * 3 + kx],
                           preferred_element_type=jnp.float32)
            acc = part if acc is None else acc + part

    conv_ref[0] = acc.astype(conv_ref.dtype)

    # Per-tile BatchNorm partial statistics over *valid* output positions only,
    # taken from the f32 accumulator; two direct slice stores (no concatenate).
    # TODO(synk): a Welford-style (count, mean, M2) combine would be more
    # robust than f32 sum / sum-of-squares for very large N*H*W.
    oidx = jax.lax.broadcasted_iota(jnp.int32, (rows_blk, 1), 0)
    ro_out = ro_in - 1
    out_row_ok = ((oidx >= (ro_out - i * th) * ws) &
                  (oidx < (ro_out + H - i * th) * ws))
    masked = jnp.where(out_row_ok & (cmask_out_ref[...] > 0), acc, 0.0)
    stats_ref[0, 0, 0:1, :] = jnp.sum(masked, axis=0, keepdims=True)
    stats_ref[0, 0, 1:2, :] = jnp.sum(masked * masked, axis=0, keepdims=True)


# ------------------------------ stage wrapper --------------------------------

def _extract_halo(x_flat, T, rows_blk, halo_rows):
    """Rows [(i+1)*rows_blk, +halo_rows) per tile i (static indices, clamped; masked in-kernel)."""
    n, total_rows, c = x_flat.shape
    idx = (np.arange(1, T + 1, dtype=np.int64)[:, None] * rows_blk
           + np.arange(halo_rows, dtype=np.int64)[None, :])
    idx = np.minimum(idx, total_rows - 1).astype(np.int32).reshape(-1)
    halo = x_flat[:, jnp.asarray(idx), :]
    return halo.reshape(n, T, halo_rows, c)


def _conv_bn_stage(x_flat, w_oihw, scale_in, shift_in, *, N, H, W, th, T,
                   cin, cin_p, cout, cout_p, ro_in, co_in, apply_bn_relu,
                   out_dtype, vmem_limit):
    ws = W + 3
    rows_blk = th * ws
    rtot = (th + 3) * ws

    halo = _extract_halo(x_flat, T, rows_blk, 3 * ws)

    # (Cout, Cin, 3, 3) -> tap-major (9, Cin_p, Cout_p), zero-padded, MXU dtype.
    w = jnp.transpose(w_oihw, (2, 3, 1, 0)).reshape(9, cin, cout)
    w = jnp.pad(w, ((0, 0), (0, cin_p - cin), (0, cout_p - cout))).astype(MATMUL_DTYPE)

    # Static column-validity masks for the (W+3)-wide padded storage layout.
    col_in = np.arange(rtot, dtype=np.int64) % ws
    cmask_in = ((col_in >= co_in) & (col_in < co_in + W)).astype(np.int32).reshape(rtot, 1)
    co_out = co_in - 1
    col_out = np.arange(rows_blk, dtype=np.int64) % ws
    cmask_out = ((col_out >= co_out) & (col_out < co_out + W)).astype(np.int32).reshape(rows_blk, 1)

    kernel = functools.partial(_conv_bn_stage_kernel, th=th, ws=ws, H=H,
                               ro_in=ro_in, apply_bn_relu=apply_bn_relu)

    in_b = jnp.dtype(MATMUL_DTYPE).itemsize
    out_b = jnp.dtype(out_dtype).itemsize
    flops = 2 * N * T * rows_blk * (9 * cin_p) * cout_p
    bytes_accessed = (N * T * (rows_blk + 3 * ws) * cin_p * in_b
                      + 9 * cin_p * cout_p * in_b
                      + N * T * rows_blk * cout_p * out_b
                      + N * T * 8 * cout_p * 4)

    # NOTE: the resident operands (weights / scale / shift / column masks) keep
    # default double-buffering; single-buffering via pipeline_mode=pl.Buffered(1)
    # (suggested by the perf review) is version-dependent for the classic
    # pallas_call pipeline, so it is intentionally not used here.
    conv, stats = pl.pallas_call(
        kernel,
        grid=(N, T),
        in_specs=(
            pl.BlockSpec((1, rows_blk, cin_p), lambda n, i: (n, i, 0)),
            pl.BlockSpec((1, 1, 3 * ws, cin_p), lambda n, i: (n, i, 0, 0)),
            pl.BlockSpec((9, cin_p, cout_p), lambda n, i: (0, 0, 0)),
            pl.BlockSpec((1, cin_p), lambda n, i: (0, 0)),
            pl.BlockSpec((1, cin_p), lambda n, i: (0, 0)),
            pl.BlockSpec((rtot, 1), lambda n, i: (0, 0)),
            pl.BlockSpec((rows_blk, 1), lambda n, i: (0, 0)),
        ),
        out_specs=(
            pl.BlockSpec((1, rows_blk, cout_p), lambda n, i: (n, i, 0)),
            pl.BlockSpec((1, 1, 8, cout_p), lambda n, i: (n, i, 0, 0)),
        ),
        out_shape=(
            jax.ShapeDtypeStruct((N, T * rows_blk, cout_p), out_dtype),
            jax.ShapeDtypeStruct((N, T, 8, cout_p), jnp.float32),
        ),
        compiler_params=pltpu.CompilerParams(
            dimension_semantics=("parallel", "parallel"),
            vmem_limit_bytes=vmem_limit),
        cost_estimate=pl.CostEstimate(flops=flops, transcendentals=0,
                                      bytes_accessed=bytes_accessed),
    )(x_flat, halo, w, scale_in, shift_in,
      jnp.asarray(cmask_in), jnp.asarray(cmask_out))
    return conv, stats


def _bn_scale_shift(stats, gamma, beta, count, cout):
    s = jnp.sum(stats[:, :, 0, :cout], axis=(0, 1))
    sq = jnp.sum(stats[:, :, 1, :cout], axis=(0, 1))
    mean = s / count
    var = jnp.maximum(sq / count - mean * mean, 0.0)      # biased batch variance
    scale = gamma * jax.lax.rsqrt(var + BN_EPS)
    shift = beta - mean * scale   # conv bias would cancel here (batch-stat BN only)
    return scale, shift


@functools.partial(jax.jit, static_argnames=("tile_rows",))
def conv_block_forward(x_nchw, params, *, tile_rows=None):
    """Pallas implementation of conv_block.forward (training-mode BN).  NCHW in/out."""
    N, cin, H, W = x_nchw.shape
    cout1 = params["w1"].shape[0]
    cout2 = params["w2"].shape[0]

    cin_p = _round_up(max(cin, SUBLANE), SUBLANE)
    c1_p = _round_up(cout1, LANE)
    c2_p = _round_up(cout2, LANE)
    ws = W + 3

    if tile_rows is None:
        tile_rows = _auto_tile_rows(H, W, max(cin_p, c1_p), max(c1_p, c2_p))
    assert tile_rows % SUBLANE == 0, "tile_rows must be a multiple of 8"
    th = tile_rows
    T = -(-(H + 1) // th)          # stage-1 output needs H+1 written storage rows
    vmem_limit = _vmem_limit_bytes()

    # Stage-1 input storage: (N, T*th+3, W+3, Cin_p) bf16, valid data at rows
    # [2, 2+H) and cols [2, 2+W); everything else is an exact zero (= conv pad).
    x = jnp.transpose(x_nchw, (0, 2, 3, 1)).astype(MATMUL_DTYPE)
    x = jnp.pad(x, ((0, 0), (2, T * th + 1 - H), (2, 1), (0, cin_p - cin)))
    x_flat = x.reshape(N, (T * th + 3) * ws, cin_p)

    dummy = jnp.zeros((1, cin_p), jnp.float32)

    # ---- stage 1: conv1 (+ BN1 partial stats); bf16 intermediate -------------
    conv1, stats1 = _conv_bn_stage(
        x_flat, params["w1"], dummy, dummy,
        N=N, H=H, W=W, th=th, T=T, cin=cin, cin_p=cin_p, cout=cout1,
        cout_p=c1_p, ro_in=2, co_in=2, apply_bn_relu=False,
        out_dtype=MATMUL_DTYPE, vmem_limit=vmem_limit)

    scale1, shift1 = _bn_scale_shift(stats1, params["g1"], params["beta1"],
                                     N * H * W, cout1)
    scale1p = jnp.pad(scale1, (0, c1_p - cout1)).reshape(1, c1_p)
    shift1p = jnp.pad(shift1, (0, c1_p - cout1)).reshape(1, c1_p)

    # ---- stage 2: fused BN1+ReLU on load, conv2 (+ BN2 partial stats); f32 ---
    conv2, stats2 = _conv_bn_stage(
        conv1, params["w2"], scale1p, shift1p,
        N=N, H=H, W=W, th=th, T=T, cin=cout1, cin_p=c1_p, cout=cout2,
        cout_p=c2_p, ro_in=1, co_in=1, apply_bn_relu=True,
        out_dtype=jnp.float32, vmem_limit=vmem_limit)

    scale2, shift2 = _bn_scale_shift(stats2, params["g2"], params["beta2"],
                                     N * H * W, cout2)

    # Final BN2 + ReLU fused by XLA with the valid-region slice and the
    # NHWC -> NCHW output transpose (no extra Pallas pass / HBM round trip).
    y = conv2.reshape(N, T * th, ws, c2_p)[:, :H, :W, :cout2]
    y = jnp.maximum(y * scale2[None, None, None, :]
                    + shift2[None, None, None, :], 0.0)
    return jnp.transpose(y, (0, 3, 1, 2))


# ----------------------------- pure-JAX references ----------------------------

def _reference(x, p, *, mimic_kernel_quantization):
    """conv_block reference.  mimic_kernel_quantization=True rounds the conv
    inputs/weights and the stored conv1 intermediate to MATMUL_DTYPE at the
    same points as the kernel (and, like the kernel, drops the mathematically
    cancelling conv bias); False is the faithful f32 module (bias included)."""
    f32 = jnp.float32

    def q(a):
        return a.astype(MATMUL_DTYPE).astype(f32) if mimic_kernel_quantization \
            else a.astype(f32)

    def conv(x_, w, b):
        y = jax.lax.conv_general_dilated(
            q(x_), q(w), window_strides=(1, 1), padding=[(1, 1), (1, 1)],
            dimension_numbers=("NCHW", "OIHW", "NCHW"),
            precision=jax.lax.Precision.HIGHEST)
        if not mimic_kernel_quantization:
            y = y + b[None, :, None, None]     # bias cancels under batch-stat BN
        return y

    def bn_params(y, g, be):
        mean = jnp.mean(y, axis=(0, 2, 3))
        var = jnp.mean(jnp.square(y - mean[None, :, None, None]), axis=(0, 2, 3))
        scale = g * jax.lax.rsqrt(var + BN_EPS)
        return scale, be - mean * scale

    c1 = conv(x, p["w1"], p["b1"])
    s1, t1 = bn_params(c1, p["g1"], p["beta1"])
    a1 = jnp.maximum(q(c1) * s1[None, :, None, None] + t1[None, :, None, None], 0.0)
    c2 = conv(a1, p["w2"], p["b2"])
    s2, t2 = bn_params(c2, p["g2"], p["beta2"])
    return jnp.maximum(c2 * s2[None, :, None, None] + t2[None, :, None, None], 0.0)


# ----------------------------------- main -------------------------------------

def _init_params(key, in_channels, out_channels):
    k1, k2, k3, k4 = jax.random.split(key, 4)
    bnd1 = 1.0 / jnp.sqrt(in_channels * 9)
    bnd2 = 1.0 / jnp.sqrt(out_channels * 9)
    return {
        "w1": jax.random.uniform(k1, (out_channels, in_channels, 3, 3),
                                 jnp.float32, -bnd1, bnd1),
        "b1": jax.random.uniform(k2, (out_channels,), jnp.float32, -bnd1, bnd1),
        "g1": jnp.ones((out_channels,), jnp.float32),
        "beta1": jnp.zeros((out_channels,), jnp.float32),
        "w2": jax.random.uniform(k3, (out_channels, out_channels, 3, 3),
                                 jnp.float32, -bnd2, bnd2),
        "b2": jax.random.uniform(k4, (out_channels,), jnp.float32, -bnd2, bnd2),
        "g2": jnp.ones((out_channels,), jnp.float32),
        "beta2": jnp.zeros((out_channels,), jnp.float32),
    }


if __name__ == "__main__":
    key = jax.random.PRNGKey(0)
    kx, kp = jax.random.split(key)

    N, Cin, Cout, H, W = 2, 4, 8, 16, 16
    x = jax.random.normal(kx, (N, Cin, H, W), jnp.float32)
    params = _init_params(kp, Cin, Cout)

    # tile_rows=8 -> 3 row-tiles per image (exercises the halo / masking path).
    out = jax.block_until_ready(conv_block_forward(x, params, tile_rows=8))
    assert out.shape == (N, Cout, H, W), out.shape

    # Tight check: reference mimicking the kernel's bf16 quantization points.
    ref_q = _reference(x, params, mimic_kernel_quantization=True)
    err_q = float(jnp.max(jnp.abs(out - ref_q)))
    assert jnp.allclose(out, ref_q, atol=2e-2, rtol=2e-2), err_q

    # Loose check: faithful f32 module (bounds the deliberate bf16 approximation).
    ref_f32 = _reference(x, params, mimic_kernel_quantization=False)
    err_f = float(jnp.max(jnp.abs(out - ref_f32)))
    assert jnp.allclose(out, ref_f32, atol=2e-1, rtol=2e-1), err_f

    # Auto-tiled (per-generation VMEM budget) path must agree with the tiled run.
    out_auto = jax.block_until_ready(conv_block_forward(x, params))
    assert jnp.allclose(out_auto, out, atol=1e-2, rtol=1e-2)

    print("KERNEL_OK")
</pallas_src>

<mosaic_0001>
module attributes {stable_mosaic.version = 11 : i64} {
  func.func @_conv_bn_stage_kernel(%arg0: i32, %arg1: i32, %arg2: memref<1x152x8xbf16, #tpu.memory_space<vmem>>, %arg3: memref<1x1x57x8xbf16, #tpu.memory_space<vmem>>, %arg4: memref<9x8x128xbf16, #tpu.memory_space<vmem>>, %arg5: memref<1x8xf32, #tpu.memory_space<vmem>>, %arg6: memref<1x8xf32, #tpu.memory_space<vmem>>, %arg7: memref<209x1xi32, #tpu.memory_space<vmem>>, %arg8: memref<152x1xi32, #tpu.memory_space<vmem>>, %arg9: memref<1x152x128xbf16, #tpu.memory_space<vmem>>, %arg10: memref<1x1x8x128xf32, #tpu.memory_space<vmem>>) attributes {dimension_semantics = [#tpu.dimension_semantics<parallel>, #tpu.dimension_semantics<parallel>], iteration_bounds = array<i64: 2, 3>, scalar_prefetch = 0 : i64, scratch_operands = 0 : i64, tpu.core_type = #tpu.core_type<tc>, window_params = [{transform_indices = @transform_0, window_bounds = array<i64: 1, 152, 8>}, {transform_indices = @transform_1, window_bounds = array<i64: 1, 1, 57, 8>}, {pipeline_mode = #tpu.pipeline_mode<synchronous>, transform_indices = @transform_2, window_bounds = array<i64: 9, 8, 128>}, {pipeline_mode = #tpu.pipeline_mode<synchronous>, transform_indices = @transform_3, window_bounds = array<i64: 1, 8>}, {pipeline_mode = #tpu.pipeline_mode<synchronous>, transform_indices = @transform_4, window_bounds = array<i64: 1, 8>}, {pipeline_mode = #tpu.pipeline_mode<synchronous>, transform_indices = @transform_5, window_bounds = array<i64: 209, 1>}, {pipeline_mode = #tpu.pipeline_mode<synchronous>, transform_indices = @transform_6, window_bounds = array<i64: 152, 1>}, {transform_indices = @transform_7, window_bounds = array<i64: 1, 152, 128>}, {transform_indices = @transform_8, window_bounds = array<i64: 1, 1, 8, 128>}]} {
    %c0 = arith.constant 0 : index
    %c0_0 = arith.constant 0 : index
    %c0_1 = arith.constant 0 : index
    %0 = vector.load %arg2[%c0, %c0_0, %c0_1] : memref<1x152x8xbf16, #tpu.memory_space<vmem>>, vector<1x152x8xbf16>
    %1 = vector.shape_cast %0 : vector<1x152x8xbf16> to vector<152x8xbf16>
    %c0_2 = arith.constant 0 : index
    %c0_3 = arith.constant 0 : index
    %c0_4 = arith.constant 0 : index
    %c0_5 = arith.constant 0 : index
    %2 = vector.load %arg3[%c0_2, %c0_3, %c0_4, %c0_5] : memref<1x1x57x8xbf16, #tpu.memory_space<vmem>>, vector<1x1x57x8xbf16>
    %3 = vector.shape_cast %2 : vector<1x1x57x8xbf16> to vector<57x8xbf16>
    %4 = tpu.concatenate %1, %3 in 0 : vector<152x8xbf16>, vector<57x8xbf16> -> vector<209x8xbf16>
    %5 = vector.extract_strided_slice %4 {offsets = [0, 0], sizes = [152, 8], strides = [1, 1]} : vector<209x8xbf16> to vector<152x8xbf16>
    %c0_6 = arith.constant 0 : index
    %c0_7 = arith.constant 0 : index
    %c0_8 = arith.constant 0 : index
    %6 = vector.load %arg4[%c0_6, %c0_7, %c0_8] : memref<9x8x128xbf16, #tpu.memory_space<vmem>>, vector<1x8x128xbf16>
    %7 = vector.shape_cast %6 : vector<1x8x128xbf16> to vector<8x128xbf16>
    %cst = arith.constant dense<0.000000e+00> : vector<152x128xf32>
    %8 = tpu.matmul %5, %7, %cst {dimension_numbers = #tpu.dot_dimension_numbers<[1], [0], [0], [1], [0, 0, 1, 1], [], []>} : vector<152x8xbf16>, vector<8x128xbf16>, vector<152x128xf32> -> vector<152x128xf32>
    %9 = vector.extract_strided_slice %4 {offsets = [1, 0], sizes = [152, 8], strides = [1, 1]} : vector<209x8xbf16> to vector<152x8xbf16>
    %c1 = arith.constant 1 : index
    %c0_9 = arith.constant 0 : index
    %c0_10 = arith.constant 0 : index
    %10 = vector.load %arg4[%c1, %c0_9, %c0_10] : memref<9x8x128xbf16, #tpu.memory_space<vmem>>, vector<1x8x128xbf16>
    %11 = vector.shape_cast %10 : vector<1x8x128xbf16> to vector<8x128xbf16>
    %cst_11 = arith.constant dense<0.000000e+00> : vector<152x128xf32>
    %12 = tpu.matmul %9, %11, %cst_11 {dimension_numbers = #tpu.dot_dimension_numbers<[1], [0], [0], [1], [0, 0, 1, 1], [], []>} : vector<152x8xbf16>, vector<8x128xbf16>, vector<152x128xf32> -> vector<152x128xf32>
    %13 = arith.addf %8, %12 : vector<152x128xf32>
    %14 = vector.extract_strided_slice %4 {offsets = [2, 0], sizes = [152, 8], strides = [1, 1]} : vector<209x8xbf16> to vector<152x8xbf16>
    %c2 = arith.constant 2 : index
    %c0_12 = arith.constant 0 : index
    %c0_13 = arith.constant 0 : index
    %15 = vector.load %arg4[%c2, %c0_12, %c0_13] : memref<9x8x128xbf16, #tpu.memory_space<vmem>>, vector<1x8x128xbf16>
    %16 = vector.shape_cast %15 : vector<1x8x128xbf16> to vector<8x128xbf16>
    %cst_14 = arith.constant dense<0.000000e+00> : vector<152x128xf32>
    %17 = tpu.matmul %14, %16, %cst_14 {dimension_numbers = #tpu.dot_dimension_numbers<[1], [0], [0], [1], [0, 0, 1, 1], [], []>} : vector<152x8xbf16>, vector<8x128xbf16>, vector<152x128xf32> -> vector<152x128xf32>
    %18 = arith.addf %13, %17 : vector<152x128xf32>
    %19 = vector.extract_strided_slice %4 {offsets = [19, 0], sizes = [152, 8], strides = [1, 1]} : vector<209x8xbf16> to vector<152x8xbf16>
    %c3 = arith.constant 3 : index
    %c0_15 = arith.constant 0 : index
    %c0_16 = arith.constant 0 : index
    %20 = vector.load %arg4[%c3, %c0_15, %c0_16] : memref<9x8x128xbf16, #tpu.memory_space<vmem>>, vector<1x8x128xbf16>
    %21 = vector.shape_cast %20 : vector<1x8x128xbf16> to vector<8x128xbf16>
    %cst_17 = arith.constant dense<0.000000e+00> : vector<152x128xf32>
    %22 = tpu.matmul %19, %21, %cst_17 {dimension_numbers = #tpu.dot_dimension_numbers<[1], [0], [0], [1], [0, 0, 1, 1], [], []>} : vector<152x8xbf16>, vector<8x128xbf16>, vector<152x128xf32> -> vector<152x128xf32>
    %23 = arith.addf %18, %22 : vector<152x128xf32>
    %24 = vector.extract_strided_slice %4 {offsets = [20, 0], sizes = [152, 8], strides = [1, 1]} : vector<209x8xbf16> to vector<152x8xbf16>
    %c4 = arith.constant 4 : index
    %c0_18 = arith.constant 0 : index
    %c0_19 = arith.constant 0 : index
    %25 = vector.load %arg4[%c4, %c0_18, %c0_19] : memref<9x8x128xbf16, #tpu.memory_space<vmem>>, vector<1x8x128xbf16>
    %26 = vector.shape_cast %25 : vector<1x8x128xbf16> to vector<8x128xbf16>
    %cst_20 = arith.constant dense<0.000000e+00> : vector<152x128xf32>
    %27 = tpu.matmul %24, %26, %cst_20 {dimension_numbers = #tpu.dot_dimension_numbers<[1], [0], [0], [1], [0, 0, 1, 1], [], []>} : vector<152x8xbf16>, vector<8x128xbf16>, vector<152x128xf32> -> vector<152x128xf32>
    %28 = arith.addf %23, %27 : vector<152x128xf32>
    %29 = vector.extract_strided_slice %4 {offsets = [21, 0], sizes = [152, 8], strides = [1, 1]} : vector<209x8xbf16> to vector<152x8xbf16>
    %c5 = arith.constant 5 : index
    %c0_21 = arith.constant 0 : index
    %c0_22 = arith.constant 0 : index
    %30 = vector.load %arg4[%c5, %c0_21, %c0_22] : memref<9x8x128xbf16, #tpu.memory_space<vmem>>, vector<1x8x128xbf16>
    %31 = vector.shape_cast %30 : vector<1x8x128xbf16> to vector<8x128xbf16>
    %cst_23 = arith.constant dense<0.000000e+00> : vector<152x128xf32>
    %32 = tpu.matmul %29, %31, %cst_23 {dimension_numbers = #tpu.dot_dimension_numbers<[1], [0], [0], [1], [0, 0, 1, 1], [], []>} : vector<152x8xbf16>, vector<8x128xbf16>, vector<152x128xf32> -> vector<152x128xf32>
    %33 = arith.addf %28, %32 : vector<152x128xf32>
    %34 = vector.extract_strided_slice %4 {offsets = [38, 0], sizes = [152, 8], strides = [1, 1]} : vector<209x8xbf16> to vector<152x8xbf16>
    %c6 = arith.constant 6 : index
    %c0_24 = arith.constant 0 : index
    %c0_25 = arith.constant 0 : index
    %35 = vector.load %arg4[%c6, %c0_24, %c0_25] : memref<9x8x128xbf16, #tpu.memory_space<vmem>>, vector<1x8x128xbf16>
    %36 = vector.shape_cast %35 : vector<1x8x128xbf16> to vector<8x128xbf16>
    %cst_26 = arith.constant dense<0.000000e+00> : vector<152x128xf32>
    %37 = tpu.matmul %34, %36, %cst_26 {dimension_numbers = #tpu.dot_dimension_numbers<[1], [0], [0], [1], [0, 0, 1, 1], [], []>} : vector<152x8xbf16>, vector<8x128xbf16>, vector<152x128xf32> -> vector<152x128xf32>
    %38 = arith.addf %33, %37 : vector<152x128xf32>
    %39 = vector.extract_strided_slice %4 {offsets = [39, 0], sizes = [152, 8], strides = [1, 1]} : vector<209x8xbf16> to vector<152x8xbf16>
    %c7 = arith.constant 7 : index
    %c0_27 = arith.constant 0 : index
    %c0_28 = arith.constant 0 : index
    %40 = vector.load %arg4[%c7, %c0_27, %c0_28] : memref<9x8x128xbf16, #tpu.memory_space<vmem>>, vector<1x8x128xbf16>
    %41 = vector.shape_cast %40 : vector<1x8x128xbf16> to vector<8x128xbf16>
    %cst_29 = arith.constant dense<0.000000e+00> : vector<152x128xf32>
    %42 = tpu.matmul %39, %41, %cst_29 {dimension_numbers = #tpu.dot_dimension_numbers<[1], [0], [0], [1], [0, 0, 1, 1], [], []>} : vector<152x8xbf16>, vector<8x128xbf16>, vector<152x128xf32> -> vector<152x128xf32>
    %43 = arith.addf %38, %42 : vector<152x128xf32>
    %44 = vector.extract_strided_slice %4 {offsets = [40, 0], sizes = [152, 8], strides = [1, 1]} : vector<209x8xbf16> to vector<152x8xbf16>
    %c8 = arith.constant 8 : index
    %c0_30 = arith.constant 0 : index
    %c0_31 = arith.constant 0 : index
    %45 = vector.load %arg4[%c8, %c0_30, %c0_31] : memref<9x8x128xbf16, #tpu.memory_space<vmem>>, vector<1x8x128xbf16>
    %46 = vector.shape_cast %45 : vector<1x8x128xbf16> to vector<8x128xbf16>
    %cst_32 = arith.constant dense<0.000000e+00> : vector<152x128xf32>
    %47 = tpu.matmul %44, %46, %cst_32 {dimension_numbers = #tpu.dot_dimension_numbers<[1], [0], [0], [1], [0, 0, 1, 1], [], []>} : vector<152x8xbf16>, vector<8x128xbf16>, vector<152x128xf32> -> vector<152x128xf32>
    %48 = arith.addf %43, %47 : vector<152x128xf32>
    %49 = arith.truncf %48 : vector<152x128xf32> to vector<152x128xbf16>
    %c0_33 = arith.constant 0 : index
    %c0_34 = arith.constant 0 : index
    %c0_35 = arith.constant 0 : index
    %50 = vector.load %arg9[%c0_33, %c0_34, %c0_35] : memref<1x152x128xbf16, #tpu.memory_space<vmem>>, vector<1x152x128xbf16>
    %51 = vector.shape_cast %50 : vector<1x152x128xbf16> to vector<152x128xbf16>
    %52 = vector.shape_cast %49 : vector<152x128xbf16> to vector<1x152x128xbf16>
    tpu.vector_store %arg9[%c0_33, %c0_34, %c0_35], %52 {strides = array<i32>} : memref<1x152x128xbf16, #tpu.memory_space<vmem>>, vector<1x152x128xbf16>,
    %53 = tpu.iota {dimensions = array<i32: 0>} : vector<152x1xi32>
    %c8_i32 = arith.constant 8 : i32
    %54 = arith.muli %arg1, %c8_i32 : i32
    %c1_i32 = arith.constant 1 : i32
    %55 = arith.subi %c1_i32, %54 : i32
    %c19_i32 = arith.constant 19 : i32
    %56 = arith.muli %55, %c19_i32 : i32
    %57 = vector.broadcast %56 : i32 to vector<152x1xi32>
    %58 = arith.cmpi sge, %53, %57 : vector<152x1xi32>
    %c8_i32_36 = arith.constant 8 : i32
    %59 = arith.muli %arg1, %c8_i32_36 : i32
    %c17_i32 = arith.constant 17 : i32
    %60 = arith.subi %c17_i32, %59 : i32
    %c19_i32_37 = arith.constant 19 : i32
    %61 = arith.muli %60, %c19_i32_37 : i32
    %62 = vector.broadcast %61 : i32 to vector<152x1xi32>
    %63 = arith.cmpi slt, %53, %62 : vector<152x1xi32>
    %64 = arith.andi %58, %63 : vector<152x1xi1>
    %c0_38 = arith.constant 0 : index
    %c0_39 = arith.constant 0 : index
    %65 = vector.load %arg8[%c0_38, %c0_39] : memref<152x1xi32, #tpu.memory_space<vmem>>, vector<152x1xi32>
    %c0_i32 = arith.constant 0 : i32
    %66 = vector.broadcast %c0_i32 : i32 to vector<152x1xi32>
    %67 = arith.cmpi sgt, %65, %66 : vector<152x1xi32>
    %68 = arith.andi %64, %67 : vector<152x1xi1>
    %cst_40 = arith.constant 0.000000e+00 : f32
    %69 = vector.shape_cast %68 : vector<152x1xi1> to vector<152x1xi1>
    %70 = vector.broadcast %69 : vector<152x1xi1> to vector<152x128xi1>
    %71 = vector.broadcast %cst_40 : f32 to vector<152x128xf32>
    %72 = arith.select %70, %48, %71 : vector<152x128xi1>, vector<152x128xf32>
    %cst_41 = arith.constant dense<0.000000e+00> : vector<128xf32>
    %73 = vector.multi_reduction <add>, %72, %cst_41 [0] : vector<152x128xf32> to vector<128xf32>
    %74 = vector.shape_cast %73 : vector<128xf32> to vector<1x128xf32>
    %c0_42 = arith.constant 0 : index
    %c0_43 = arith.constant 0 : index
    %c0_44 = arith.constant 0 : index
    %c0_45 = arith.constant 0 : index
    %75 = vector.load %arg10[%c0_42, %c0_43, %c0_44, %c0_45] : memref<1x1x8x128xf32, #tpu.memory_space<vmem>>, vector<1x1x1x128xf32>
    %76 = vector.shape_cast %75 : vector<1x1x1x128xf32> to vector<1x128xf32>
    %77 = vector.shape_cast %74 : vector<1x128xf32> to vector<1x1x1x128xf32>
    tpu.vector_store %arg10[%c0_42, %c0_43, %c0_44, %c0_45], %77 {strides = array<i32>} : memref<1x1x8x128xf32, #tpu.memory_space<vmem>>, vector<1x1x1x128xf32>,
    %78 = arith.mulf %72, %72 : vector<152x128xf32>
    %cst_46 = arith.constant dense<0.000000e+00> : vector<128xf32>
    %79 = vector.multi_reduction <add>, %78, %cst_46 [0] : vector<152x128xf32> to vector<128xf32>
    %80 = vector.shape_cast %79 : vector<128xf32> to vector<1x128xf32>
    %c0_47 = arith.constant 0 : index
    %c0_48 = arith.constant 0 : index
    %c1_49 = arith.constant 1 : index
    %c0_50 = arith.constant 0 : index
    %81 = vector.load %arg10[%c0_47, %c0_48, %c1_49, %c0_50] : memref<1x1x8x128xf32, #tpu.memory_space<vmem>>, vector<1x1x1x128xf32>
    %82 = vector.shape_cast %81 : vector<1x1x1x128xf32> to vector<1x128xf32>
    %83 = vector.shape_cast %80 : vector<1x128xf32> to vector<1x1x1x128xf32>
    tpu.vector_store %arg10[%c0_47, %c0_48, %c1_49, %c0_50], %83 {strides = array<i32>} : memref<1x1x8x128xf32, #tpu.memory_space<vmem>>, vector<1x1x1x128xf32>,
    return
  }
  func.func @transform_0(%arg0: i32, %arg1: i32) -> (i32, i32, i32) {
    %c0_i32 = arith.constant 0 : i32
    %c0_i32_0 = arith.constant 0 : i32
    return %arg0, %arg1, %c0_i32 : i32, i32, i32
  }
  func.func @transform_1(%arg0: i32, %arg1: i32) -> (i32, i32, i32, i32) {
    %c0_i32 = arith.constant 0 : i32
    %c0_i32_0 = arith.constant 0 : i32
    %c0_i32_1 = arith.constant 0 : i32
    return %arg0, %arg1, %c0_i32, %c0_i32_0 : i32, i32, i32, i32
  }
  func.func @transform_2(%arg0: i32, %arg1: i32) -> (i32, i32, i32) {
    %c0_i32 = arith.constant 0 : i32
    %c0_i32_0 = arith.constant 0 : i32
    %c0_i32_1 = arith.constant 0 : i32
    %c0_i32_2 = arith.constant 0 : i32
    return %c0_i32, %c0_i32_0, %c0_i32_1 : i32, i32, i32
  }
  func.func @transform_3(%arg0: i32, %arg1: i32) -> (i32, i32) {
    %c0_i32 = arith.constant 0 : i32
    %c0_i32_0 = arith.constant 0 : i32
    %c0_i32_1 = arith.constant 0 : i32
    return %c0_i32, %c0_i32_0 : i32, i32
  }
  func.func @transform_4(%arg0: i32, %arg1: i32) -> (i32, i32) {
    %c0_i32 = arith.constant 0 : i32
    %c0_i32_0 = arith.constant 0 : i32
    %c0_i32_1 = arith.constant 0 : i32
    return %c0_i32, %c0_i32_0 : i32, i32
  }
  func.func @transform_5(%arg0: i32, %arg1: i32) -> (i32, i32) {
    %c0_i32 = arith.constant 0 : i32
    %c0_i32_0 = arith.constant 0 : i32
    %c0_i32_1 = arith.constant 0 : i32
    return %c0_i32, %c0_i32_0 : i32, i32
  }
  func.func @transform_6(%arg0: i32, %arg1: i32) -> (i32, i32) {
    %c0_i32 = arith.constant 0 : i32
    %c0_i32_0 = arith.constant 0 : i32
    %c0_i32_1 = arith.constant 0 : i32
    return %c0_i32, %c0_i32_0 : i32, i32
  }
  func.func @transform_7(%arg0: i32, %arg1: i32) -> (i32, i32, i32) {
    %c0_i32 = arith.constant 0 : i32
    %c0_i32_0 = arith.constant 0 : i32
    return %arg0, %arg1, %c0_i32 : i32, i32, i32
  }
  func.func @transform_8(%arg0: i32, %arg1: i32) -> (i32, i32, i32, i32) {
    %c0_i32 = arith.constant 0 : i32
    %c0_i32_0 = arith.constant 0 : i32
    %c0_i32_1 = arith.constant 0 : i32
    return %arg0, %arg1, %c0_i32, %c0_i32_0 : i32, i32, i32, i32
  }
}

module attributes {stable_mosaic.version = 11 : i64} {
  func.func @_conv_bn_stage_kernel(%arg0: i32, %arg1: i32, %arg2: memref<1x152x128xbf16, #tpu.memory_space<vmem>>, %arg3: memref<1x1x57x128xbf16, #tpu.memory_space<vmem>>, %arg4: memref<9x128x128xbf16, #tpu.memory_space<vmem>>, %arg5: memref<1x128xf32, #tpu.memory_space<vmem>>, %arg6: memref<1x128xf32, #tpu.memory_space<vmem>>, %arg7: memref<209x1xi32, #tpu.memory_space<vmem>>, %arg8: memref<152x1xi32, #tpu.memory_space<vmem>>, %arg9: memref<1x152x128xf32, #tpu.memory_space<vmem>>, %arg10: memref<1x1x8x128xf32, #tpu.memory_space<vmem>>) attributes {dimension_semantics = [#tpu.dimension_semantics<parallel>, #tpu.dimension_semantics<parallel>], iteration_bounds = array<i64: 2, 3>, scalar_prefetch = 0 : i64, scratch_operands = 0 : i64, tpu.core_type = #tpu.core_type<tc>, window_params = [{transform_indices = @transform_0, window_bounds = array<i64: 1, 152, 128>}, {transform_indices = @transform_1, window_bounds = array<i64: 1, 1, 57, 128>}, {pipeline_mode = #tpu.pipeline_mode<synchronous>, transform_indices = @transform_2, window_bounds = array<i64: 9, 128, 128>}, {pipeline_mode = #tpu.pipeline_mode<synchronous>, transform_indices = @transform_3, window_bounds = array<i64: 1, 128>}, {pipeline_mode = #tpu.pipeline_mode<synchronous>, transform_indices = @transform_4, window_bounds = array<i64: 1, 128>}, {pipeline_mode = #tpu.pipeline_mode<synchronous>, transform_indices = @transform_5, window_bounds = array<i64: 209, 1>}, {pipeline_mode = #tpu.pipeline_mode<synchronous>, transform_indices = @transform_6, window_bounds = array<i64: 152, 1>}, {transform_indices = @transform_7, window_bounds = array<i64: 1, 152, 128>}, {transform_indices = @transform_8, window_bounds = array<i64: 1, 1, 8, 128>}]} {
    %c0 = arith.constant 0 : index
    %c0_0 = arith.constant 0 : index
    %c0_1 = arith.constant 0 : index
    %0 = vector.load %arg2[%c0, %c0_0, %c0_1] : memref<1x152x128xbf16, #tpu.memory_space<vmem>>, vector<1x152x128xbf16>
    %1 = vector.shape_cast %0 : vector<1x152x128xbf16> to vector<152x128xbf16>
    %c0_2 = arith.constant 0 : index
    %c0_3 = arith.constant 0 : index
    %c0_4 = arith.constant 0 : index
    %c0_5 = arith.constant 0 : index
    %2 = vector.load %arg3[%c0_2, %c0_3, %c0_4, %c0_5] : memref<1x1x57x128xbf16, #tpu.memory_space<vmem>>, vector<1x1x57x128xbf16>
    %3 = vector.shape_cast %2 : vector<1x1x57x128xbf16> to vector<57x128xbf16>
    %4 = tpu.concatenate %1, %3 in 0 : vector<152x128xbf16>, vector<57x128xbf16> -> vector<209x128xbf16>
    %5 = arith.extf %4 : vector<209x128xbf16> to vector<209x128xf32>
    %c0_6 = arith.constant 0 : index
    %c0_7 = arith.constant 0 : index
    %6 = vector.load %arg5[%c0_6, %c0_7] : memref<1x128xf32, #tpu.memory_space<vmem>>, vector<1x128xf32>
    %7 = vector.broadcast %6 : vector<1x128xf32> to vector<209x128xf32>
    %8 = arith.mulf %5, %7 : vector<209x128xf32>
    %c0_8 = arith.constant 0 : index
    %c0_9 = arith.constant 0 : index
    %9 = vector.load %arg6[%c0_8, %c0_9] : memref<1x128xf32, #tpu.memory_space<vmem>>, vector<1x128xf32>
    %10 = vector.broadcast %9 : vector<1x128xf32> to vector<209x128xf32>
    %11 = arith.addf %8, %10 : vector<209x128xf32>
    %cst = arith.constant 0.000000e+00 : f32
    %12 = vector.broadcast %cst : f32 to vector<209x128xf32>
    %13 = arith.maximumf %11, %12 : vector<209x128xf32>
    %14 = tpu.iota {dimensions = array<i32: 0>} : vector<209x1xi32>
    %c8_i32 = arith.constant 8 : i32
    %15 = arith.muli %arg1, %c8_i32 : i32
    %c1_i32 = arith.constant 1 : i32
    %16 = arith.subi %c1_i32, %15 : i32
    %c19_i32 = arith.constant 19 : i32
    %17 = arith.muli %16, %c19_i32 : i32
    %18 = vector.broadcast %17 : i32 to vector<209x1xi32>
    %19 = arith.cmpi sge, %14, %18 : vector<209x1xi32>
    %c8_i32_10 = arith.constant 8 : i32
    %20 = arith.muli %arg1, %c8_i32_10 : i32
    %c17_i32 = arith.constant 17 : i32
    %21 = arith.subi %c17_i32, %20 : i32
    %c19_i32_11 = arith.constant 19 : i32
    %22 = arith.muli %21, %c19_i32_11 : i32
    %23 = vector.broadcast %22 : i32 to vector<209x1xi32>
    %24 = arith.cmpi slt, %14, %23 : vector<209x1xi32>
    %25 = arith.andi %19, %24 : vector<209x1xi1>
    %c0_12 = arith.constant 0 : index
    %c0_13 = arith.constant 0 : index
    %26 = vector.load %arg7[%c0_12, %c0_13] : memref<209x1xi32, #tpu.memory_space<vmem>>, vector<209x1xi32>
    %c0_i32 = arith.constant 0 : i32
    %27 = vector.broadcast %c0_i32 : i32 to vector<209x1xi32>
    %28 = arith.cmpi sgt, %26, %27 : vector<209x1xi32>
    %29 = arith.andi %25, %28 : vector<209x1xi1>
    %cst_14 = arith.constant 0.000000e+00 : f32
    %30 = vector.shape_cast %29 : vector<209x1xi1> to vector<209x1xi1>
    %31 = vector.broadcast %30 : vector<209x1xi1> to vector<209x128xi1>
    %32 = vector.broadcast %cst_14 : f32 to vector<209x128xf32>
    %33 = arith.select %31, %13, %32 : vector<209x128xi1>, vector<209x128xf32>
    %34 = arith.truncf %33 : vector<209x128xf32> to vector<209x128xbf16>
    %35 = vector.extract_strided_slice %34 {offsets = [0, 0], sizes = [152, 128], strides = [1, 1]} : vector<209x128xbf16> to vector<152x128xbf16>
    %c0_15 = arith.constant 0 : index
    %c0_16 = arith.constant 0 : index
    %c0_17 = arith.constant 0 : index
    %36 = vector.load %arg4[%c0_15, %c0_16, %c0_17] : memref<9x128x128xbf16, #tpu.memory_space<vmem>>, vector<1x128x128xbf16>
    %37 = vector.shape_cast %36 : vector<1x128x128xbf16> to vector<128x128xbf16>
    %cst_18 = arith.constant dense<0.000000e+00> : vector<152x128xf32>
    %38 = tpu.matmul %35, %37, %cst_18 {dimension_numbers = #tpu.dot_dimension_numbers<[1], [0], [0], [1], [0, 0, 1, 1], [], []>} : vector<152x128xbf16>, vector<128x128xbf16>, vector<152x128xf32> -> vector<152x128xf32>
    %39 = vector.extract_strided_slice %34 {offsets = [1, 0], sizes = [152, 128], strides = [1, 1]} : vector<209x128xbf16> to vector<152x128xbf16>
    %c1 = arith.constant 1 : index
    %c0_19 = arith.constant 0 : index
    %c0_20 = arith.constant 0 : index
    %40 = vector.load %arg4[%c1, %c0_19, %c0_20] : memref<9x128x128xbf16, #tpu.memory_space<vmem>>, vector<1x128x128xbf16>
    %41 = vector.shape_cast %40 : vector<1x128x128xbf16> to vector<128x128xbf16>
    %cst_21 = arith.constant dense<0.000000e+00> : vector<152x128xf32>
    %42 = tpu.matmul %39, %41, %cst_21 {dimension_numbers = #tpu.dot_dimension_numbers<[1], [0], [0], [1], [0, 0, 1, 1], [], []>} : vector<152x128xbf16>, vector<128x128xbf16>, vector<152x128xf32> -> vector<152x128xf32>
    %43 = arith.addf %38, %42 : vector<152x128xf32>
    %44 = vector.extract_strided_slice %34 {offsets = [2, 0], sizes = [152, 128], strides = [1, 1]} : vector<209x128xbf16> to vector<152x128xbf16>
    %c2 = arith.constant 2 : index
    %c0_22 = arith.constant 0 : index
    %c0_23 = arith.constant 0 : index
    %45 = vector.load %arg4[%c2, %c0_22, %c0_23] : memref<9x128x128xbf16, #tpu.memory_space<vmem>>, vector<1x128x128xbf16>
    %46 = vector.shape_cast %45 : vector<1x128x128xbf16> to vector<128x128xbf16>
    %cst_24 = arith.constant dense<0.000000e+00> : vector<152x128xf32>
    %47 = tpu.matmul %44, %46, %cst_24 {dimension_numbers = #tpu.dot_dimension_numbers<[1], [0], [0], [1], [0, 0, 1, 1], [], []>} : vector<152x128xbf16>, vector<128x128xbf16>, vector<152x128xf32> -> vector<152x128xf32>
    %48 = arith.addf %43, %47 : vector<152x128xf32>
    %49 = vector.extract_strided_slice %34 {offsets = [19, 0], sizes = [152, 128], strides = [1, 1]} : vector<209x128xbf16> to vector<152x128xbf16>
    %c3 = arith.constant 3 : index
    %c0_25 = arith.constant 0 : index
    %c0_26 = arith.constant 0 : index
    %50 = vector.load %arg4[%c3, %c0_25, %c0_26] : memref<9x128x128xbf16, #tpu.memory_space<vmem>>, vector<1x128x128xbf16>
    %51 = vector.shape_cast %50 : vector<1x128x128xbf16> to vector<128x128xbf16>
    %cst_27 = arith.constant dense<0.000000e+00> : vector<152x128xf32>
    %52 = tpu.matmul %49, %51, %cst_27 {dimension_numbers = #tpu.dot_dimension_numbers<[1], [0], [0], [1], [0, 0, 1, 1], [], []>} : vector<152x128xbf16>, vector<128x128xbf16>, vector<152x128xf32> -> vector<152x128xf32>
    %53 = arith.addf %48, %52 : vector<152x128xf32>
    %54 = vector.extract_strided_slice %34 {offsets = [20, 0], sizes = [152, 128], strides = [1, 1]} : vector<209x128xbf16> to vector<152x128xbf16>
    %c4 = arith.constant 4 : index
    %c0_28 = arith.constant 0 : index
    %c0_29 = arith.constant 0 : index
    %55 = vector.load %arg4[%c4, %c0_28, %c0_29] : memref<9x128x128xbf16, #tpu.memory_space<vmem>>, vector<1x128x128xbf16>
    %56 = vector.shape_cast %55 : vector<1x128x128xbf16> to vector<128x128xbf16>
    %cst_30 = arith.constant dense<0.000000e+00> : vector<152x128xf32>
    %57 = tpu.matmul %54, %56, %cst_30 {dimension_numbers = #tpu.dot_dimension_numbers<[1], [0], [0], [1], [0, 0, 1, 1], [], []>} : vector<152x128xbf16>, vector<128x128xbf16>, vector<152x128xf32> -> vector<152x128xf32>
    %58 = arith.addf %53, %57 : vector<152x128xf32>
    %59 = vector.extract_strided_slice %34 {offsets = [21, 0], sizes = [152, 128], strides = [1, 1]} : vector<209x128xbf16> to vector<152x128xbf16>
    %c5 = arith.constant 5 : index
    %c0_31 = arith.constant 0 : index
    %c0_32 = arith.constant 0 : index
    %60 = vector.load %arg4[%c5, %c0_31, %c0_32] : memref<9x128x128xbf16, #tpu.memory_space<vmem>>, vector<1x128x128xbf16>
    %61 = vector.shape_cast %60 : vector<1x128x128xbf16> to vector<128x128xbf16>
    %cst_33 = arith.constant dense<0.000000e+00> : vector<152x128xf32>
    %62 = tpu.matmul %59, %61, %cst_33 {dimension_numbers = #tpu.dot_dimension_numbers<[1], [0], [0], [1], [0, 0, 1, 1], [], []>} : vector<152x128xbf16>, vector<128x128xbf16>, vector<152x128xf32> -> vector<152x128xf32>
    %63 = arith.addf %58, %62 : vector<152x128xf32>
    %64 = vector.extract_strided_slice %34 {offsets = [38, 0], sizes = [152, 128], strides = [1, 1]} : vector<209x128xbf16> to vector<152x128xbf16>
    %c6 = arith.constant 6 : index
    %c0_34 = arith.constant 0 : index
    %c0_35 = arith.constant 0 : index
    %65 = vector.load %arg4[%c6, %c0_34, %c0_35] : memref<9x128x128xbf16, #tpu.memory_space<vmem>>, vector<1x128x128xbf16>
    %66 = vector.shape_cast %65 : vector<1x128x128xbf16> to vector<128x128xbf16>
    %cst_36 = arith.constant dense<0.000000e+00> : vector<152x128xf32>
    %67 = tpu.matmul %64, %66, %cst_36 {dimension_numbers = #tpu.dot_dimension_numbers<[1], [0], [0], [1], [0, 0, 1, 1], [], []>} : vector<152x128xbf16>, vector<128x128xbf16>, vector<152x128xf32> -> vector<152x128xf32>
    %68 = arith.addf %63, %67 : vector<152x128xf32>
    %69 = vector.extract_strided_slice %34 {offsets = [39, 0], sizes = [152, 128], strides = [1, 1]} : vector<209x128xbf16> to vector<152x128xbf16>
    %c7 = arith.constant 7 : index
    %c0_37 = arith.constant 0 : index
    %c0_38 = arith.constant 0 : index
    %70 = vector.load %arg4[%c7, %c0_37, %c0_38] : memref<9x128x128xbf16, #tpu.memory_space<vmem>>, vector<1x128x128xbf16>
    %71 = vector.shape_cast %70 : vector<1x128x128xbf16> to vector<128x128xbf16>
    %cst_39 = arith.constant dense<0.000000e+00> : vector<152x128xf32>
    %72 = tpu.matmul %69, %71, %cst_39 {dimension_numbers = #tpu.dot_dimension_numbers<[1], [0], [0], [1], [0, 0, 1, 1], [], []>} : vector<152x128xbf16>, vector<128x128xbf16>, vector<152x128xf32> -> vector<152x128xf32>
    %73 = arith.addf %68, %72 : vector<152x128xf32>
    %74 = vector.extract_strided_slice %34 {offsets = [40, 0], sizes = [152, 128], strides = [1, 1]} : vector<209x128xbf16> to vector<152x128xbf16>
    %c8 = arith.constant 8 : index
    %c0_40 = arith.constant 0 : index
    %c0_41 = arith.constant 0 : index
    %75 = vector.load %arg4[%c8, %c0_40, %c0_41] : memref<9x128x128xbf16, #tpu.memory_space<vmem>>, vector<1x128x128xbf16>
    %76 = vector.shape_cast %75 : vector<1x128x128xbf16> to vector<128x128xbf16>
    %cst_42 = arith.constant dense<0.000000e+00> : vector<152x128xf32>
    %77 = tpu.matmul %74, %76, %cst_42 {dimension_numbers = #tpu.dot_dimension_numbers<[1], [0], [0], [1], [0, 0, 1, 1], [], []>} : vector<152x128xbf16>, vector<128x128xbf16>, vector<152x128xf32> -> vector<152x128xf32>
    %78 = arith.addf %73, %77 : vector<152x128xf32>
    %c0_43 = arith.constant 0 : index
    %c0_44 = arith.constant 0 : index
    %c0_45 = arith.constant 0 : index
    %79 = vector.load %arg9[%c0_43, %c0_44, %c0_45] : memref<1x152x128xf32, #tpu.memory_space<vmem>>, vector<1x152x128xf32>
    %80 = vector.shape_cast %79 : vector<1x152x128xf32> to vector<152x128xf32>
    %81 = vector.shape_cast %78 : vector<152x128xf32> to vector<1x152x128xf32>
    tpu.vector_store %arg9[%c0_43, %c0_44, %c0_45], %81 {strides = array<i32>} : memref<1x152x128xf32, #tpu.memory_space<vmem>>, vector<1x152x128xf32>,
    %82 = tpu.iota {dimensions = array<i32: 0>} : vector<152x1xi32>
    %c8_i32_46 = arith.constant 8 : i32
    %83 = arith.muli %arg1, %c8_i32_46 : i32
    %c0_i32_47 = arith.constant 0 : i32
    %84 = arith.subi %c0_i32_47, %83 : i32
    %c19_i32_48 = arith.constant 19 : i32
    %85 = arith.muli %84, %c19_i32_48 : i32
    %86 = vector.broadcast %85 : i32 to vector<152x1xi32>
    %87 = arith.cmpi sge, %82, %86 : vector<152x1xi32>
    %c8_i32_49 = arith.constant 8 : i32
    %88 = arith.muli %arg1, %c8_i32_49 : i32
    %c16_i32 = arith.constant 16 : i32
    %89 = arith.subi %c16_i32, %88 : i32
    %c19_i32_50 = arith.constant 19 : i32
    %90 = arith.muli %89, %c19_i32_50 : i32
    %91 = vector.broadcast %90 : i32 to vector<152x1xi32>
    %92 = arith.cmpi slt, %82, %91 : vector<152x1xi32>
    %93 = arith.andi %87, %92 : vector<152x1xi1>
    %c0_51 = arith.constant 0 : index
    %c0_52 = arith.constant 0 : index
    %94 = vector.load %arg8[%c0_51, %c0_52] : memref<152x1xi32, #tpu.memory_space<vmem>>, vector<152x1xi32>
    %c0_i32_53 = arith.constant 0 : i32
    %95 = vector.broadcast %c0_i32_53 : i32 to vector<152x1xi32>
    %96 = arith.cmpi sgt, %94, %95 : vector<152x1xi32>
    %97 = arith.andi %93, %96 : vector<152x1xi1>
    %cst_54 = arith.constant 0.000000e+00 : f32
    %98 = vector.shape_cast %97 : vector<152x1xi1> to vector<152x1xi1>
    %99 = vector.broadcast %98 : vector<152x1xi1> to vector<152x128xi1>
    %100 = vector.broadcast %cst_54 : f32 to vector<152x128xf32>
    %101 = arith.select %99, %78, %100 : vector<152x128xi1>, vector<152x128xf32>
    %cst_55 = arith.constant dense<0.000000e+00> : vector<128xf32>
    %102 = vector.multi_reduction <add>, %101, %cst_55 [0] : vector<152x128xf32> to vector<128xf32>
    %103 = vector.shape_cast %102 : vector<128xf32> to vector<1x128xf32>
    %c0_56 = arith.constant 0 : index
    %c0_57 = arith.constant 0 : index
    %c0_58 = arith.constant 0 : index
    %c0_59 = arith.constant 0 : index
    %104 = vector.load %arg10[%c0_56, %c0_57, %c0_58, %c0_59] : memref<1x1x8x128xf32, #tpu.memory_space<vmem>>, vector<1x1x1x128xf32>
    %105 = vector.shape_cast %104 : vector<1x1x1x128xf32> to vector<1x128xf32>
    %106 = vector.shape_cast %103 : vector<1x128xf32> to vector<1x1x1x128xf32>
    tpu.vector_store %arg10[%c0_56, %c0_57, %c0_58, %c0_59], %106 {strides = array<i32>} : memref<1x1x8x128xf32, #tpu.memory_space<vmem>>, vector<1x1x1x128xf32>,
    %107 = arith.mulf %101, %101 : vector<152x128xf32>
    %cst_60 = arith.constant dense<0.000000e+00> : vector<128xf32>
    %108 = vector.multi_reduction <add>, %107, %cst_60 [0] : vector<152x128xf32> to vector<128xf32>
    %109 = vector.shape_cast %108 : vector<128xf32> to vector<1x128xf32>
    %c0_61 = arith.constant 0 : index
    %c0_62 = arith.constant 0 : index
    %c1_63 = arith.constant 1 : index
    %c0_64 = arith.constant 0 : index
    %110 = vector.load %arg10[%c0_61, %c0_62, %c1_63, %c0_64] : memref<1x1x8x128xf32, #tpu.memory_space<vmem>>, vector<1x1x1x128xf32>
    %111 = vector.shape_cast %110 : vector<1x1x1x128xf32> to vector<1x128xf32>
    %112 = vector.shape_cast %109 : vector<1x128xf32> to vector<1x1x1x128xf32>
    tpu.vector_store %arg10[%c0_61, %c0_62, %c1_63, %c0_64], %112 {strides = array<i32>} : memref<1x1x8x128xf32, #tpu.memory_space<vmem>>, vector<1x1x1x128xf32>,
    return
  }
  func.func @transform_0(%arg0: i32, %arg1: i32) -> (i32, i32, i32) {
    %c0_i32 = arith.constant 0 : i32
    %c0_i32_0 = arith.constant 0 : i32
    return %arg0, %arg1, %c0_i32 : i32, i32, i32
  }
  func.func @transform_1(%arg0: i32, %arg1: i32) -> (i32, i32, i32, i32) {
    %c0_i32 = arith.constant 0 : i32
    %c0_i32_0 = arith.constant 0 : i32
    %c0_i32_1 = arith.constant 0 : i32
    return %arg0, %arg1, %c0_i32, %c0_i32_0 : i32, i32, i32, i32
  }
  func.func @transform_2(%arg0: i32, %arg1: i32) -> (i32, i32, i32) {
    %c0_i32 = arith.constant 0 : i32
    %c0_i32_0 = arith.constant 0 : i32
    %c0_i32_1 = arith.constant 0 : i32
    %c0_i32_2 = arith.constant 0 : i32
    return %c0_i32, %c0_i32_0, %c0_i32_1 : i32, i32, i32
  }
  func.func @transform_3(%arg0: i32, %arg1: i32) -> (i32, i32) {
    %c0_i32 = arith.constant 0 : i32
    %c0_i32_0 = arith.constant 0 : i32
    %c0_i32_1 = arith.constant 0 : i32
    return %c0_i32, %c0_i32_0 : i32, i32
  }
  func.func @transform_4(%arg0: i32, %arg1: i32) -> (i32, i32) {
    %c0_i32 = arith.constant 0 : i32
    %c0_i32_0 = arith.constant 0 : i32
    %c0_i32_1 = arith.constant 0 : i32
    return %c0_i32, %c0_i32_0 : i32, i32
  }
  func.func @transform_5(%arg0: i32, %arg1: i32) -> (i32, i32) {
    %c0_i32 = arith.constant 0 : i32
    %c0_i32_0 = arith.constant 0 : i32
    %c0_i32_1 = arith.constant 0 : i32
    return %c0_i32, %c0_i32_0 : i32, i32
  }
  func.func @transform_6(%arg0: i32, %arg1: i32) -> (i32, i32) {
    %c0_i32 = arith.constant 0 : i32
    %c0_i32_0 = arith.constant 0 : i32
    %c0_i32_1 = arith.constant 0 : i32
    return %c0_i32, %c0_i32_0 : i32, i32
  }
  func.func @transform_7(%arg0: i32, %arg1: i32) -> (i32, i32, i32) {
    %c0_i32 = arith.constant 0 : i32
    %c0_i32_0 = arith.constant 0 : i32
    return %arg0, %arg1, %c0_i32 : i32, i32, i32
  }
  func.func @transform_8(%arg0: i32, %arg1: i32) -> (i32, i32, i32, i32) {
    %c0_i32 = arith.constant 0 : i32
    %c0_i32_0 = arith.constant 0 : i32
    %c0_i32_1 = arith.constant 0 : i32
    return %arg0, %arg1, %c0_i32, %c0_i32_0 : i32, i32, i32, i32
  }
}

</mosaic_0001>

<llo_original>
// kernel: conv_block_forward.2
$region0: #{conv_block_forward.2}
  #allocation0 [shape = 'u32[]', space=smem, size = 0x4, offset = 0x4, fixed_abs, tag = 'smem constant byte address 0x4 - core index']
  #allocation1 [shape = 'u32[72,128]{1,0:T(1,128)}', space=vmem, size = 0x9000, scoped, tag = 'internal scratch']
  %s0 = inlined_call_operand.vmem [shape: bf16[2,513,8], index: 0, kind: input, shape index: {}]
  %s1 = inlined_call_operand.vmem [shape: bf16[2,3,57,8], index: 1, kind: input, shape index: {}]
  %s2 = inlined_call_operand.vmem [shape: bf16[9,8,128], index: 2, kind: input, shape index: {}]
  %s3 = inlined_call_operand.vmem [shape: f32[1,8], index: 3, kind: input, shape index: {}, may-alias: {3,4}]
  %s4 = inlined_call_operand.vmem [shape: f32[1,8], index: 4, kind: input, shape index: {}, may-alias: {3,4}]
  %s5 = inlined_call_operand.vmem [shape: s32[209,1], index: 5, kind: input, shape index: {}]
  %s6 = inlined_call_operand.vmem [shape: s32[152,1], index: 6, kind: input, shape index: {}]
  %s7 = inlined_call_operand.vmem [shape: bf16[2,456,128], index: 7, kind: output, shape index: {0}]
  %s8 = inlined_call_operand.vmem [shape: f32[2,3,8,128], index: 8, kind: output, shape index: {1}]
  %9 = xla_tuple %s7, %s8
  %s10 = sld [smem:[#allocation0]]
  $region69: #{conv_block_forward.2} parent=0
    _
  %s12 = ssub.s32 1, %s10
  %s13 = scalar_select 0, %s12, %s10
  loop: start=0, step=1, limit=8
  $region2: #{conv_block_forward.2} parent=0 // loop_pre_header
    _
  $region3: #{conv_block_forward.2} parent=0 // loop_header
    %s15 = sphi 0, %s19
    %p16 = scmp.ge.s32.totalorder %s15, 8
    %s22 = sphi 0, %s34
    %s23 = sphi 0, %s30
    %s24 = sphi 0, %s22
    %s25 = sphi 0, %s23
    %s26 = sphi 0, %s24
    %s27 = sphi 0, %s25
    %s39 = sphi 0, %s41
    %s42 = sphi 0, %s39
    %s43 = sphi 0, %s42
    %s59 = sphi 0, %s43
    %s67 = sphi 0, %s69
    %s70 = sphi 0, %s67
    %s71 = sphi 0, %s70
    %s87 = sphi 0, %s71
    %s91 = sphi 0, %s91
    %s93 = sphi 0, %s91
    %s94 = sphi 0, %s93
    %s108 = sphi 0, %s94
    %s112 = sphi 0, %s112
    %s114 = sphi 0, %s112
    %s115 = sphi 0, %s114
    %s129 = sphi 0, %s115
    %s133 = sphi 0, %s133
    %s135 = sphi 0, %s133
    %s136 = sphi 0, %s135
    %s150 = sphi 0, %s136
    %s154 = sphi 0, %s154
    %s156 = sphi 0, %s154
    %s157 = sphi 0, %s156
    %s171 = sphi 0, %s157
    %s175 = sphi 0, %s175
    %s177 = sphi 0, %s175
    %s178 = sphi 0, %s177
    %s192 = sphi 0, %s178
    %s200 = sphi 0, %s202
    %s203 = sphi 0, %s200
    %s204 = sphi 0, %s203
    %s220 = sphi 0, %s204
    %s228 = sphi 0, %s230
    %s231 = sphi 0, %s228
    %s232 = sphi 0, %s231
    %s248 = sphi 0, %s232
  $region4: #{conv_block_forward.2} parent=0 // loop_header_branch
    %18 = sbr.rel (%p16) target = $region8
  $region5: #{conv_block_forward.2} parent=0 // loop_body
    %s20 = ssub.s32 %s15, 1
    %s21 = ssub.s32 %s15, 2
    %s28 = sadd.s32 1, %s23
    %p29 = scmp.ge.s32.totalorder %s28, 3
    %s30 = scalar_select %p29, 0, %s28
    %s31 = sadd.s32 1, %s22
    %s32 = scalar_select %p29, %s31, %s22
    %p33 = scmp.ge.s32.totalorder %s32, 2
    %s34 = scalar_select %p33, 0, %s32
    %s35 = ssub.s32 %s22, %s34
    %s36 = ssub.s32 %s23, %s30
    %s37 = sor.u32 %s35, %s36
    %p38 = scmp.eq.s32.totalorder %s37, 0
    %s40 = sadd.s32 %s39, 1
    %s41 = scalar_select %p38, %s39, %s40
    %p44 = pneg %p38
    %p45 = scmp.eq.s32.totalorder %s15, 5
    %p46 = por %p44, %p45
    %p47 = scmp.ne.s32.totalorder %s39, %s42
    %p48 = scmp.eq.s32.totalorder %s15, 0
    %p49 = por %p47, %p48
    %p50 = scmp.ne.s32.totalorder %s39, %s42
    %p51 = scmp.eq.s32.totalorder %s20, 5
    %p52 = por %p50, %p51
    %p53 = scmp.ne.s32.totalorder %s42, %s43
    %p54 = scmp.eq.s32.totalorder %s20, 0
    %p55 = por %p53, %p54
    %p56 = scmp.ne.s32.totalorder %s42, %s43
    %p57 = scmp.eq.s32.totalorder %s21, 5
    %p58 = por %p56, %p57
    %p60 = scmp.ne.s32.totalorder %s43, %s59
    %p61 = scmp.eq.s32.totalorder %s21, 0
    %p62 = por %p60, %p61
    %s63 = ssub.s32 %s22, %s34
    %s64 = ssub.s32 %s23, %s30
    %s65 = sor.u32 %s63, %s64
    %p66 = scmp.eq.s32.totalorder %s65, 0
    %s68 = sadd.s32 %s67, 1
    %s69 = scalar_select %p66, %s67, %s68
    %p72 = pneg %p66
    %p73 = scmp.eq.s32.totalorder %s15, 5
    %p74 = por %p72, %p73
    %p75 = scmp.ne.s32.totalorder %s67, %s70
    %p76 = scmp.eq.s32.totalorder %s15, 0
    %p77 = por %p75, %p76
    %p78 = scmp.ne.s32.totalorder %s67, %s70
    %p79 = scmp.eq.s32.totalorder %s20, 5
    %p80 = por %p78, %p79
    %p81 = scmp.ne.s32.totalorder %s70, %s71
    %p82 = scmp.eq.s32.totalorder %s20, 0
    %p83 = por %p81, %p82
    %p84 = scmp.ne.s32.totalorder %s70, %s71
    %p85 = scmp.eq.s32.totalorder %s21, 5
    %p86 = por %p84, %p85
    %p88 = scmp.ne.s32.totalorder %s71, %s87
    %p89 = scmp.eq.s32.totalorder %s21, 0
    %p90 = por %p88, %p89
    %s92 = sadd.s32 %s91, 1
    %p95 = scmp.eq.s32.totalorder %s15, 5
    %p96 = scmp.ne.s32.totalorder %s91, %s93
    %p97 = scmp.eq.s32.totalorder %s15, 0
    %p98 = por %p96, %p97
    %p99 = scmp.ne.s32.totalorder %s91, %s93
    %p100 = scmp.eq.s32.totalorder %s20, 5
    %p101 = por %p99, %p100
    %p102 = scmp.ne.s32.totalorder %s93, %s94
    %p103 = scmp.eq.s32.totalorder %s20, 0
    %p104 = por %p102, %p103
    %p105 = scmp.ne.s32.totalorder %s93, %s94
    %p106 = scmp.eq.s32.totalorder %s21, 5
    %p107 = por %p105, %p106
    %p109 = scmp.ne.s32.totalorder %s94, %s108
    %p110 = scmp.eq.s32.totalorder %s21, 0
    %p111 = por %p109, %p110
    %s113 = sadd.s32 %s112, 1
    %p116 = scmp.eq.s32.totalorder %s15, 5
    %p117 = scmp.ne.s32.totalorder %s112, %s114
    %p118 = scmp.eq.s32.totalorder %s15, 0
    %p119 = por %p117, %p118
    %p120 = scmp.ne.s32.totalorder %s112, %s114
    %p121 = scmp.eq.s32.totalorder %s20, 5
    %p122 = por %p120, %p121
    %p123 = scmp.ne.s32.totalorder %s114, %s115
    %p124 = scmp.eq.s32.totalorder %s20, 0
    %p125 = por %p123, %p124
    %p126 = scmp.ne.s32.totalorder %s114, %s115
    %p127 = scmp.eq.s32.totalorder %s21, 5
    %p128 = por %p126, %p127
    %p130 = scmp.ne.s32.totalorder %s115, %s129
    %p131 = scmp.eq.s32.totalorder %s21, 0
    %p132 = por %p130, %p131
    %s134 = sadd.s32 %s133, 1
    %p137 = scmp.eq.s32.totalorder %s15, 5
    %p138 = scmp.ne.s32.totalorder %s133, %s135
    %p139 = scmp.eq.s32.totalorder %s15, 0
    %p140 = por %p138, %p139
    %p141 = scmp.ne.s32.totalorder %s133, %s135
    %p142 = scmp.eq.s32.totalorder %s20, 5
    %p143 = por %p141, %p142
    %p144 = scmp.ne.s32.totalorder %s135, %s136
    %p145 = scmp.eq.s32.totalorder %s20, 0
    %p146 = por %p144, %p145
    %p147 = scmp.ne.s32.totalorder %s135, %s136
    %p148 = scmp.eq.s32.totalorder %s21, 5
    %p149 = por %p147, %p148
    %p151 = scmp.ne.s32.totalorder %s136, %s150
    %p152 = scmp.eq.s32.totalorder %s21, 0
    %p153 = por %p151, %p152
    %s155 = sadd.s32 %s154, 1
    %p158 = scmp.eq.s32.totalorder %s15, 5
    %p159 = scmp.ne.s32.totalorder %s154, %s156
    %p160 = scmp.eq.s32.totalorder %s15, 0
    %p161 = por %p159, %p160
    %p162 = scmp.ne.s32.totalorder %s154, %s156
    %p163 = scmp.eq.s32.totalorder %s20, 5
    %p164 = por %p162, %p163
    %p165 = scmp.ne.s32.totalorder %s156, %s157
    %p166 = scmp.eq.s32.totalorder %s20, 0
    %p167 = por %p165, %p166
    %p168 = scmp.ne.s32.totalorder %s156, %s157
    %p169 = scmp.eq.s32.totalorder %s21, 5
    %p170 = por %p168, %p169
    %p172 = scmp.ne.s32.totalorder %s157, %s171
    %p173 = scmp.eq.s32.totalorder %s21, 0
    %p174 = por %p172, %p173
    %s176 = sadd.s32 %s175, 1
    %p179 = scmp.eq.s32.totalorder %s15, 5
    %p180 = scmp.ne.s32.totalorder %s175, %s177
    %p181 = scmp.eq.s32.totalorder %s15, 0
    %p182 = por %p180, %p181
    %p183 = scmp.ne.s32.totalorder %s175, %s177
    %p184 = scmp.eq.s32.totalorder %s20, 5
    %p185 = por %p183, %p184
    %p186 = scmp.ne.s32.totalorder %s177, %s178
    %p187 = scmp.eq.s32.totalorder %s20, 0
    %p188 = por %p186, %p187
    %p189 = scmp.ne.s32.totalorder %s177, %s178
    %p190 = scmp.eq.s32.totalorder %s21, 5
    %p191 = por %p189, %p190
    %p193 = scmp.ne.s32.totalorder %s178, %s192
    %p194 = scmp.eq.s32.totalorder %s21, 0
    %p195 = por %p193, %p194
    %s196 = ssub.s32 %s22, %s34
    %s197 = ssub.s32 %s23, %s30
    %s198 = sor.u32 %s196, %s197
    %p199 = scmp.eq.s32.totalorder %s198, 0
    %s201 = sadd.s32 %s200, 1
    %s202 = scalar_select %p199, %s200, %s201
    %p205 = pneg %p199
    %p206 = scmp.eq.s32.totalorder %s15, 5
    %p207 = por %p205, %p206
    %p208 = scmp.ne.s32.totalorder %s200, %s203
    %p209 = scmp.eq.s32.totalorder %s15, 0
    %p210 = por %p208, %p209
    %p211 = scmp.ne.s32.totalorder %s200, %s203
    %p212 = scmp.eq.s32.totalorder %s20, 5
    %p213 = por %p211, %p212
    %p214 = scmp.ne.s32.totalorder %s203, %s204
    %p215 = scmp.eq.s32.totalorder %s20, 0
    %p216 = por %p214, %p215
    %p217 = scmp.ne.s32.totalorder %s203, %s204
    %p218 = scmp.eq.s32.totalorder %s21, 5
    %p219 = por %p217, %p218
    %p221 = scmp.ne.s32.totalorder %s204, %s220
    %p222 = scmp.eq.s32.totalorder %s21, 0
    %p223 = por %p221, %p222
    %s224 = ssub.s32 %s22, %s34
    %s225 = ssub.s32 %s23, %s30
    %s226 = sor.u32 %s224, %s225
    %p227 = scmp.eq.s32.totalorder %s226, 0
    %s229 = sadd.s32 %s228, 1
    %s230 = scalar_select %p227, %s228, %s229
    %p233 = pneg %p227
    %p234 = scmp.eq.s32.totalorder %s15, 5
    %p235 = por %p233, %p234
    %p236 = scmp.ne.s32.totalorder %s228, %s231
    %p237 = scmp.eq.s32.totalorder %s15, 0
    %p238 = por %p236, %p237
    %p239 = scmp.ne.s32.totalorder %s228, %s231
    %p240 = scmp.eq.s32.totalorder %s20, 5
    %p241 = por %p239, %p240
    %p242 = scmp.ne.s32.totalorder %s231, %s232
    %p243 = scmp.eq.s32.totalorder %s20, 0
    %p244 = por %p242, %p243
    %p245 = scmp.ne.s32.totalorder %s231, %s232
    %p246 = scmp.eq.s32.totalorder %s21, 5
    %p247 = por %p245, %p246
    %p249 = scmp.ne.s32.totalorder %s232, %s248
    %p250 = scmp.eq.s32.totalorder %s21, 0
    %p251 = por %p249, %p250
    %p252 = scmp.le.s32.totalorder 1, %s15
    %p253 = scmp.lt.s32.totalorder %s15, 7
    %p254 = pnand %p252, %p253
    %p255 = pneg %p254
    // Predicated region
    $region9: #{conv_block_forward.2} parent=5 // pred_check
      _
    $region10: #{conv_block_forward.2} parent=5 // pred_check_branch
      %257 = sbr.rel (%p254) target = $region12
    $region11: #{conv_block_forward.2} parent=5 // pred_region
      %s258 = ssub.s32 %s15, 1
      // Predicated region
      $region13: #{conv_block_forward.2} parent=11 // pred_check
        %p259 = pneg %p104
      $region14: #{conv_block_forward.2} parent=11 // pred_check_branch
        %261 = sbr.rel (%p259) target = $region16
      $region15: #{conv_block_forward.2} parent=11 // pred_region
        _
      $region16: #{conv_block_forward.2} parent=11 // pred_fallthru
        _
      // Predicated region
      $region17: #{conv_block_forward.2} parent=11 // pred_check
        %p262 = pneg %p125
      $region18: #{conv_block_forward.2} parent=11 // pred_check_branch
        %264 = sbr.rel (%p262) target = $region20
      $region19: #{conv_block_forward.2} parent=11 // pred_region
        _
      $region20: #{conv_block_forward.2} parent=11 // pred_fallthru
        _
      // Predicated region
      $region21: #{conv_block_forward.2} parent=11 // pred_check
        %p265 = pneg %p146
      $region22: #{conv_block_forward.2} parent=11 // pred_check_branch
        %267 = sbr.rel (%p265) target = $region24
      $region23: #{conv_block_forward.2} parent=11 // pred_region
        _
      $region24: #{conv_block_forward.2} parent=11 // pred_fallthru
        _
      // Predicated region
      $region25: #{conv_block_forward.2} parent=11 // pred_check
        %p268 = pneg %p167
      $region26: #{conv_block_forward.2} parent=11 // pred_check_branch
        %270 = sbr.rel (%p268) target = $region28
      $region27: #{conv_block_forward.2} parent=11 // pred_region
        _
      $region28: #{conv_block_forward.2} parent=11 // pred_fallthru
        _
      // Predicated region
      $region29: #{conv_block_forward.2} parent=11 // pred_check
        %p271 = pneg %p188
      $region30: #{conv_block_forward.2} parent=11 // pred_check_branch
        %273 = sbr.rel (%p271) target = $region32
      $region31: #{conv_block_forward.2} parent=11 // pred_region
        _
      $region32: #{conv_block_forward.2} parent=11 // pred_fallthru
        _
    $region12: #{conv_block_forward.2} parent=5 // pred_fallthru
      _
    %p274 = scmp.lt.s32.totalorder %s15, 6
    // Predicated region
    $region33: #{conv_block_forward.2} parent=5 // pred_check
      %p275 = pneg %p274
    $region34: #{conv_block_forward.2} parent=5 // pred_check_branch
      %277 = sbr.rel (%p275) target = $region36
    $region35: #{conv_block_forward.2} parent=5 // pred_region
      // Predicated region
      $region37: #{conv_block_forward.2} parent=35 // pred_check
        %p278 = pneg %p49
      $region38: #{conv_block_forward.2} parent=35 // pred_check_branch
        %280 = sbr.rel (%p278) target = $region40
      $region39: #{conv_block_forward.2} parent=35 // pred_region
        %s281 = smul.u32 19, %s23
        %s282 = ssub.s32 65, %s281
        %p283 = scmp.lt.s32.totalorder %s282, 19
        %s284 = scalar_select %p283, %s282, 19
        %s285 = smul.u32 4, %s284
        %p286 = scmp.lt.s32.totalorder %s22, 1
        %s287 = scalar_select %p286, %s22, 1
        %p288 = scmp.lt.s32.totalorder %s281, 64
        %s289 = scalar_select %p288, %s281, 64
        %s290 = smul.addr %s287, 65
        %s291 = sadd.s32 %s289, %s290
        %s292 = smul.addr %s291, 4
        %s293 = scalar_lea.vmem %s0, %s292
        %s294 = smul.u32 19, %s23
        %s295 = ssub.s32 65, %s294
        %p296 = scmp.lt.s32.totalorder %s295, 19
        %s297 = scalar_select %p296, %s295, 19
        %s298 = smul.u32 4, %s297
      $region40: #{conv_block_forward.2} parent=35 // pred_fallthru
        _
      // Predicated region
      $region41: #{conv_block_forward.2} parent=35 // pred_check
        %p299 = pneg %p77
      $region42: #{conv_block_forward.2} parent=35 // pred_check_branch
        %301 = sbr.rel (%p299) target = $region44
      $region43: #{conv_block_forward.2} parent=35 // pred_region
        %p302 = scmp.lt.s32.totalorder %s22, 1
        %s303 = scalar_select %p302, %s22, 1
        %p304 = scmp.lt.s32.totalorder %s23, 2
        %s305 = scalar_select %p304, %s23, 2
        %s306 = smul.addr %s305, 8
        %s307 = smul.addr %s303, 24
        %s308 = sadd.s32 %s306, %s307
        %s309 = smul.addr %s308, 4
        %s310 = scalar_lea.vmem %s1, %s309
      $region44: #{conv_block_forward.2} parent=35 // pred_fallthru
        _
    $region36: #{conv_block_forward.2} parent=5 // pred_fallthru
      _
    %p311 = scmp.le.s32.totalorder 1, %s15
    %p312 = scmp.lt.s32.totalorder %s15, 7
    %p313 = pnand %p311, %p312
    %p314 = pneg %p313
    // Predicated region
    $region45: #{conv_block_forward.2} parent=5 // pred_check
      _
    $region46: #{conv_block_forward.2} parent=5 // pred_check_branch
      %316 = sbr.rel (%p313) target = $region48
    $region47: #{conv_block_forward.2} parent=5 // pred_region
      %s317 = ssub.s32 %s15, 1
      %s318 = smul.u32 19, %s25
      %s319 = ssub.s32 65, %s318
      %p320 = scmp.lt.s32.totalorder %s319, 19
      %s321 = scalar_select %p320, %s319, 19
      %s322 = smul.u32 4, %s321
      %p323 = scmp.lt.s32.totalorder %s24, 1
      %s324 = scalar_select %p323, %s24, 1
      %p325 = scmp.lt.s32.totalorder %s318, 64
      %s326 = scalar_select %p325, %s318, 64
      %s327 = smul.addr %s324, 65
      %s328 = sadd.s32 %s326, %s327
      %s329 = smul.addr %s328, 4
      %s330 = scalar_lea.vmem %s0, %s329
      %p331 = pneg %p55
      %p332 = pneg %p52
      %p333 = scmp.lt.s32.totalorder %s24, 1
      %s334 = scalar_select %p333, %s24, 1
      %p335 = scmp.lt.s32.totalorder %s25, 2
      %s336 = scalar_select %p335, %s25, 2
      %s337 = smul.addr %s336, 8
      %s338 = smul.addr %s334, 24
      %s339 = sadd.s32 %s337, %s338
      %s340 = smul.addr %s339, 4
      %s341 = scalar_lea.vmem %s1, %s340
      %p342 = pneg %p83
      %p343 = pneg %p80
      %p344 = pneg %p104
      %p345 = pneg %p101
      %p346 = pneg %p125
      %p347 = pneg %p122
      %p348 = pneg %p146
      %p349 = pneg %p143
      %p350 = pneg %p167
      %p351 = pneg %p164
      %p352 = pneg %p188
      %p353 = pneg %p185
      %p354 = pneg %p216
      %p355 = pneg %p213
      %s356 = smul.u32 19, %s25
      %p357 = scmp.lt.s32.totalorder %s24, 1
      %s358 = scalar_select %p357, %s24, 1
      %p359 = scmp.lt.s32.totalorder %s356, 56
      %s360 = scalar_select %p359, %s356, 56
      %s361 = smul.addr %s358, 57
      %s362 = sadd.s32 %s360, %s361
      %s363 = smul.addr %s362, 4
      %s364 = scalar_lea.vmem %s7, %s363
      %p365 = pneg %p244
      %p366 = pneg %p241
      %p367 = scmp.lt.s32.totalorder %s24, 1
      %s368 = scalar_select %p367, %s24, 1
      %p369 = scmp.lt.s32.totalorder %s25, 2
      %s370 = scalar_select %p369, %s25, 2
      %s371 = smul.addr %s368, 3
      %s372 = sadd.s32 %s370, %s371
      %s373 = smul.addr %s372, 8
      %s374 = scalar_lea.vmem %s8, %s373
      %s375 = smul.u32 19, %s25
      %s376 = ssub.s32 65, %s375
      %p377 = scmp.lt.s32.totalorder %s376, 19
      %s378 = scalar_select %p377, %s376, 19
      %s379 = smul.u32 4, %s378
      %p380 = scmp.lt.s32.totalorder %s24, 1
      %s381 = scalar_select %p380, %s24, 1
      %p382 = scmp.lt.s32.totalorder %s375, 64
      %s383 = scalar_select %p382, %s375, 64
      %s384 = smul.addr %s381, 65
      %s385 = sadd.s32 %s383, %s384
      %s386 = smul.addr %s385, 4
      %s387 = scalar_lea.vmem %s0, %s386
      %s388 = smul.u32 19, %s25
      %s389 = ssub.s32 65, %s388
      %p390 = scmp.lt.s32.totalorder %s389, 19
      %s391 = scalar_select %p390, %s389, 19
      %s392 = smul.u32 4, %s391
      %p393 = scmp.lt.s32.totalorder %s24, 1
      %s394 = scalar_select %p393, %s24, 1
      %p395 = scmp.lt.s32.totalorder %s25, 2
      %s396 = scalar_select %p395, %s25, 2
      %s397 = smul.addr %s396, 8
      %s398 = smul.addr %s394, 24
      %s399 = sadd.s32 %s397, %s398
      %s400 = smul.addr %s399, 4
      %s401 = scalar_lea.vmem %s1, %s400
      %s402 = smul.u32 19, %s25
      %p403 = scmp.lt.s32.totalorder %s24, 1
      %s404 = scalar_select %p403, %s24, 1
      %p405 = scmp.lt.s32.totalorder %s402, 56
      %s406 = scalar_select %p405, %s402, 56
      %s407 = smul.addr %s404, 57
      %s408 = sadd.s32 %s406, %s407
      %s409 = smul.addr %s408, 4
      %s410 = scalar_lea.vmem %s7, %s409
      %s411 = smul.u32 19, %s25
      %p412 = scmp.lt.s32.totalorder %s24, 1
      %s413 = scalar_select %p412, %s24, 1
      %p414 = scmp.lt.s32.totalorder %s25, 2
      %s415 = scalar_select %p414, %s25, 2
      %s416 = smul.addr %s413, 3
      %s417 = sadd.s32 %s415, %s416
      %s418 = smul.addr %s417, 8
      %s419 = scalar_lea.vmem %s8, %s418
      %v421 = vld [vmem:[%s387] sm:$0xf]
      %v422 = vld [vmem:[%s387 + $0x4] sm:$0xf]
      %v423 = vld [vmem:[%s387 + $0x8] sm:$0xf]
      %v424 = vld [vmem:[%s387 + $0xc] sm:$0xf]
      %v425 = vld [vmem:[%s387 + $0x10] sm:$0xf]
      %v426 = vld [vmem:[%s387 + $0x14] sm:$0xf]
      %v427 = vld [vmem:[%s387 + $0x18] sm:$0xf]
      %v428 = vld [vmem:[%s387 + $0x1c] sm:$0xf]
      %v429 = vld [vmem:[%s387 + $0x20] sm:$0xf]
      %v430 = vld [vmem:[%s387 + $0x24] sm:$0xf]
      %v431 = vld [vmem:[%s387 + $0x28] sm:$0xf]
      %v432 = vld [vmem:[%s387 + $0x2c] sm:$0xf]
      %v433 = vld [vmem:[%s387 + $0x30] sm:$0xf]
      %v434 = vld [vmem:[%s387 + $0x34] sm:$0xf]
      %v435 = vld [vmem:[%s387 + $0x38] sm:$0xf]
      %v436 = vld [vmem:[%s387 + $0x3c] sm:$0xf]
      %v437 = vld [vmem:[%s387 + $0x40] sm:$0xf]
      %v438 = vld [vmem:[%s387 + $0x44] sm:$0xf]
      %v439 = vld [vmem:[%s387 + $0x48] sm:$0xf]
      %v440 = vld [vmem:[%s401] sm:$0xf]
      %v441 = vld [vmem:[%s401 + $0x4] sm:$0xf]
      %v442 = vld [vmem:[%s401 + $0x8] sm:$0xf]
      %v443 = vld [vmem:[%s401 + $0xc] sm:$0xf]
      %v444 = vld [vmem:[%s401 + $0x10] sm:$0xf]
      %v464 = vunpack.c.l.b16 %v421
      %v465 = vunpack.c.l.b16 %v422
      %v466 = vunpack.c.l.b16 %v423
      %v467 = vunpack.c.l.b16 %v424
      %v468 = vunpack.c.l.b16 %v425
      %v469 = vunpack.c.l.b16 %v426
      %v470 = vunpack.c.l.b16 %v427
      %v471 = vunpack.c.l.b16 %v428
      %v472 = vunpack.c.l.b16 %v429
      %v473 = vunpack.c.l.b16 %v430
      %v474 = vunpack.c.l.b16 %v431
      %v475 = vunpack.c.l.b16 %v432
      %v476 = vunpack.c.l.b16 %v433
      %v477 = vunpack.c.l.b16 %v434
      %v478 = vunpack.c.l.b16 %v435
      %v479 = vunpack.c.l.b16 %v436
      %v480 = vunpack.c.l.b16 %v437
      %v481 = vunpack.c.l.b16 %v438
      %v482 = vunpack.c.l.b16 %v439
      %v483 = vpack.c.b16 %v465, %v464
      %v484 = vpack.c.b16 %v467, %v466
      %v485 = vpack.c.b16 %v469, %v468
      %v486 = vpack.c.b16 %v471, %v470
      %v487 = vpack.c.b16 %v473, %v472
      %v488 = vpack.c.b16 %v475, %v474
      %v489 = vpack.c.b16 %v477, %v476
      %v490 = vpack.c.b16 %v479, %v478
      %v491 = vpack.c.b16 %v481, %v480
      %v492 = vpack.c.b16 %v482, %v482
      %v498 = vunpack.c.l.b16 %v440
      %v499 = vunpack.c.l.b16 %v441
      %v500 = vunpack.c.l.b16 %v442
      %v501 = vunpack.c.l.b16 %v443
      %v502 = vunpack.c.l.b16 %v444
      %v503 = vpack.c.b16 %v498, %v498
      %v504 = vpack.c.b16 %v500, %v499
      %v505 = vpack.c.b16 %v502, %v501
      %vm506 = vcmask 1043456
      %v509 = vsel %vm506, %v492, %v503
      %v510 = vld [vmem:[%s2] sm:$0xf]
      %s511 = scalar_lea.vmem %s2, 4
      %v512 = vld [vmem:[%s511] sm:$0xf]
      %vm513 = vsmask.f32 7424
      %v515 = vshrl.u32 %v483, 16
      %v517 = vshll.u32 %v483, 16
      %v519 = vrot.slane %v517, 1
      %v520 = vor.u32 %v515, %v519
      %v522 = vshll.u32 %v484, 16
      %v524 = vrot.slane %v522, 1
      %v525 = vsel %vm513, %v520, %v524
      %v526 = vshrl.u32 %v484, 16
      %v528 = vor.u32 %v526, %v524
      %v530 = vshll.u32 %v485, 16
      %v532 = vrot.slane %v530, 1
      %v533 = vsel %vm513, %v528, %v532
      %v534 = vshrl.u32 %v485, 16
      %v536 = vor.u32 %v534, %v532
      %v538 = vshll.u32 %v486, 16
      %v540 = vrot.slane %v538, 1
      %v541 = vsel %vm513, %v536, %v540
      %v542 = vshrl.u32 %v486, 16
      %v544 = vor.u32 %v542, %v540
      %v546 = vshll.u32 %v487, 16
      %v548 = vrot.slane %v546, 1
      %v549 = vsel %vm513, %v544, %v548
      %v550 = vshrl.u32 %v487, 16
      %v552 = vor.u32 %v550, %v548
      %v554 = vshll.u32 %v488, 16
      %v556 = vrot.slane %v554, 1
      %v557 = vsel %vm513, %v552, %v556
      %v558 = vshrl.u32 %v488, 16
      %v560 = vor.u32 %v558, %v556
      %v562 = vshll.u32 %v489, 16
      %v564 = vrot.slane %v562, 1
      %v565 = vsel %vm513, %v560, %v564
      %v566 = vshrl.u32 %v489, 16
      %v568 = vor.u32 %v566, %v564
      %v570 = vshll.u32 %v490, 16
      %v572 = vrot.slane %v570, 1
      %v573 = vsel %vm513, %v568, %v572
      %v574 = vshrl.u32 %v490, 16
      %v576 = vor.u32 %v574, %v572
      %v578 = vshll.u32 %v491, 16
      %v580 = vrot.slane %v578, 1
      %v581 = vsel %vm513, %v576, %v580
      %v582 = vshrl.u32 %v491, 16
      %v584 = vor.u32 %v582, %v580
      %v585 = vshll.u32 %v509, 16
      %v587 = vrot.slane %v585, 1
      %v588 = vsel %vm513, %v584, %v587
      %v589 = vshrl.u32 %v509, 16
      %v591 = vor.u32 %v589, %v587
      %vm592 = vcmask 64512
      %v594 = vsel %vm592, %v525, 0
      %v597 = vsel %vm592, %v533, 0
      %v600 = vsel %vm592, %v541, 0
      %v603 = vsel %vm592, %v549, 0
      %v606 = vsel %vm592, %v557, 0
      %v609 = vsel %vm592, %v565, 0
      %v612 = vsel %vm592, %v573, 0
      %v615 = vsel %vm592, %v581, 0
      %v618 = vsel %vm592, %v588, 0
      %v621 = vsel %vm592, %v591, 0
      %v624 = vsel %vm506, %v512, 0
      %626 = vmatpush.bf16.msra.mxu0 0
      %627 = vmatpush.bf16.msra.mxu0 0
      %628 = vmatpush.bf16.msra.mxu0 0
      %629 = vmatpush.bf16.msra.mxu0 0
      %630 = vmatpush.bf16.msra.mxu0 0
      %631 = vmatpush.bf16.msra.mxu0 0
      %632 = vmatpush.bf16.msra.mxu0 0
      %633 = vmatpush.bf16.msra.mxu0 %v624
      %634 = vmatmul.bf16.gmra.mxu0 %v594
      %v635 = vpop.f32.mrf.mxu0
      %v636 = vadd.f32 0.0, %v635
      %v637 = vpop.f32.mrf.mxu0
      %v638 = vadd.f32 0.0, %v637
      %639 = vmatmul.bf16.gmra.mxu0 %v597
      %v640 = vpop.f32.mrf.mxu0
      %v641 = vadd.f32 0.0, %v640
      %v642 = vpop.f32.mrf.mxu0
      %v643 = vadd.f32 0.0, %v642
      %644 = vmatmul.bf16.gmra.mxu0 %v600
      %v645 = vpop.f32.mrf.mxu0
      %v646 = vadd.f32 0.0, %v645
      %v647 = vpop.f32.mrf.mxu0
      %v648 = vadd.f32 0.0, %v647
      %649 = vmatmul.bf16.gmra.mxu0 %v603
      %v650 = vpop.f32.mrf.mxu0
      %v651 = vadd.f32 0.0, %v650
      %v652 = vpop.f32.mrf.mxu0
      %v653 = vadd.f32 0.0, %v652
      %654 = vmatmul.bf16.gmra.mxu0 %v606
      %v655 = vpop.f32.mrf.mxu0
      %v656 = vadd.f32 0.0, %v655
      %v657 = vpop.f32.mrf.mxu0
      %v658 = vadd.f32 0.0, %v657
      %659 = vmatmul.bf16.gmra.mxu0 %v609
      %v660 = vpop.f32.mrf.mxu0
      %v661 = vadd.f32 0.0, %v660
      %v662 = vpop.f32.mrf.mxu0
      %v663 = vadd.f32 0.0, %v662
      %664 = vmatmul.bf16.gmra.mxu0 %v612
      %v665 = vpop.f32.mrf.mxu0
      %v666 = vadd.f32 0.0, %v665
      %v667 = vpop.f32.mrf.mxu0
      %v668 = vadd.f32 0.0, %v667
      %669 = vmatmul.bf16.gmra.mxu0 %v615
      %v670 = vpop.f32.mrf.mxu0
      %v671 = vadd.f32 0.0, %v670
      %v672 = vpop.f32.mrf.mxu0
      %v673 = vadd.f32 0.0, %v672
      %674 = vmatmul.bf16.gmra.mxu0 %v618
      %v675 = vpop.f32.mrf.mxu0
      %v676 = vadd.f32 0.0, %v675
      %v677 = vpop.f32.mrf.mxu0
      %v678 = vadd.f32 0.0, %v677
      %679 = vmatmul.bf16.gmra.mxu0 %v621
      %v680 = vpop.f32.mrf.mxu0
      %v681 = vadd.f32 0.0, %v680
      %v682 = vpop.f32.mrf.mxu0
      %683 = vdwg.mxu0
      %v684 = vsel %vm592, %v483, 0
      %v686 = vsel %vm592, %v484, 0
      %v688 = vsel %vm592, %v485, 0
      %v690 = vsel %vm592, %v486, 0
      %v692 = vsel %vm592, %v487, 0
      %v694 = vsel %vm592, %v488, 0
      %v696 = vsel %vm592, %v489, 0
      %v698 = vsel %vm592, %v490, 0
      %v700 = vsel %vm592, %v491, 0
      %v702 = vsel %vm592, %v509, 0
      %v705 = vsel %vm506, %v510, 0
      %707 = vmatpush.bf16.msra.mxu0 0
      %708 = vmatpush.bf16.msra.mxu0 0
      %709 = vmatpush.bf16.msra.mxu0 0
      %710 = vmatpush.bf16.msra.mxu0 0
      %711 = vmatpush.bf16.msra.mxu0 0
      %712 = vmatpush.bf16.msra.mxu0 0
      %713 = vmatpush.bf16.msra.mxu0 0
      %714 = vmatpush.bf16.msra.mxu0 %v705
      %715 = vmatmul.bf16.gmra.mxu0 %v684
      %v716 = vpop.f32.mrf.mxu0
      %v717 = vadd.f32 %v636, %v716
      %v718 = vpop.f32.mrf.mxu0
      %v719 = vadd.f32 %v638, %v718
      %720 = vmatmul.bf16.gmra.mxu0 %v686
      %v721 = vpop.f32.mrf.mxu0
      %v722 = vadd.f32 %v641, %v721
      %v723 = vpop.f32.mrf.mxu0
      %v724 = vadd.f32 %v643, %v723
      %725 = vmatmul.bf16.gmra.mxu0 %v688
      %v726 = vpop.f32.mrf.mxu0
      %v727 = vadd.f32 %v646, %v726
      %v728 = vpop.f32.mrf.mxu0
      %v729 = vadd.f32 %v648, %v728
      %730 = vmatmul.bf16.gmra.mxu0 %v690
      %v731 = vpop.f32.mrf.mxu0
      %v732 = vadd.f32 %v651, %v731
      %v733 = vpop.f32.mrf.mxu0
      %v734 = vadd.f32 %v653, %v733
      %735 = vmatmul.bf16.gmra.mxu0 %v692
      %v736 = vpop.f32.mrf.mxu0
      %v737 = vadd.f32 %v656, %v736
      %v738 = vpop.f32.mrf.mxu0
      %v739 = vadd.f32 %v658, %v738
      %740 = vmatmul.bf16.gmra.mxu0 %v694
      %v741 = vpop.f32.mrf.mxu0
      %v742 = vadd.f32 %v661, %v741
      %v743 = vpop.f32.mrf.mxu0
      %v744 = vadd.f32 %v663, %v743
      %745 = vmatmul.bf16.gmra.mxu0 %v696
      %v746 = vpop.f32.mrf.mxu0
      %v747 = vadd.f32 %v666, %v746
      %v748 = vpop.f32.mrf.mxu0
      %v749 = vadd.f32 %v668, %v748
      %750 = vmatmul.bf16.gmra.mxu0 %v698
      %v751 = vpop.f32.mrf.mxu0
      %v752 = vadd.f32 %v671, %v751
      %v753 = vpop.f32.mrf.mxu0
      %v754 = vadd.f32 %v673, %v753
      %755 = vmatmul.bf16.gmra.mxu0 %v700
      %v756 = vpop.f32.mrf.mxu0
      %v757 = vadd.f32 %v676, %v756
      %v758 = vpop.f32.mrf.mxu0
      %v759 = vadd.f32 %v678, %v758
      %760 = vmatmul.bf16.gmra.mxu0 %v702
      %v761 = vpop.f32.mrf.mxu0
      %v762 = vadd.f32 %v681, %v761
      %v763 = vpop.f32.mrf.mxu0
      %764 = vdwg.mxu0
      %s765 = scalar_lea.vmem %s2, 8
      %v766 = vld [vmem:[%s765] sm:$0xf]
      %vm768 = vcmask 1046528
      %v769 = vrot.slane %v483, 1
      %v770 = vrot.slane %v484, 1
      %v771 = vsel %vm768, %v769, %v770
      %v772 = vrot.slane %v485, 1
      %v773 = vsel %vm768, %v770, %v772
      %v774 = vrot.slane %v486, 1
      %v775 = vsel %vm768, %v772, %v774
      %v776 = vrot.slane %v487, 1
      %v777 = vsel %vm768, %v774, %v776
      %v778 = vrot.slane %v488, 1
      %v779 = vsel %vm768, %v776, %v778
      %v780 = vrot.slane %v489, 1
      %v781 = vsel %vm768, %v778, %v780
      %v782 = vrot.slane %v490, 1
      %v783 = vsel %vm768, %v780, %v782
      %v784 = vrot.slane %v491, 1
      %v785 = vsel %vm768, %v782, %v784
      %v786 = vrot.slane %v509, 1
      %v787 = vsel %vm768, %v784, %v786
      %v789 = vsel %vm592, %v771, 0
      %v792 = vsel %vm592, %v773, 0
      %v795 = vsel %vm592, %v775, 0
      %v798 = vsel %vm592, %v777, 0
      %v801 = vsel %vm592, %v779, 0
      %v804 = vsel %vm592, %v781, 0
      %v807 = vsel %vm592, %v783, 0
      %v810 = vsel %vm592, %v785, 0
      %v813 = vsel %vm592, %v787, 0
      %v816 = vsel %vm592, %v786, 0
      %v819 = vsel %vm506, %v766, 0
      %821 = vmatpush.bf16.msra.mxu0 0
      %822 = vmatpush.bf16.msra.mxu0 0
      %823 = vmatpush.bf16.msra.mxu0 0
      %824 = vmatpush.bf16.msra.mxu0 0
      %825 = vmatpush.bf16.msra.mxu0 0
      %826 = vmatpush.bf16.msra.mxu0 0
      %827 = vmatpush.bf16.msra.mxu0 0
      %828 = vmatpush.bf16.msra.mxu0 %v819
      %829 = vmatmul.bf16.gmra.mxu0 %v789
      %v830 = vpop.f32.mrf.mxu0
      %v831 = vadd.f32 0.0, %v830
      %v832 = vpop.f32.mrf.mxu0
      %v833 = vadd.f32 0.0, %v832
      %834 = vmatmul.bf16.gmra.mxu0 %v792
      %v835 = vpop.f32.mrf.mxu0
      %v836 = vadd.f32 0.0, %v835
      %v837 = vpop.f32.mrf.mxu0
      %v838 = vadd.f32 0.0, %v837
      %839 = vmatmul.bf16.gmra.mxu0 %v795
      %v840 = vpop.f32.mrf.mxu0
      %v841 = vadd.f32 0.0, %v840
      %v842 = vpop.f32.mrf.mxu0
      %v843 = vadd.f32 0.0, %v842
      %844 = vmatmul.bf16.gmra.mxu0 %v798
      %v845 = vpop.f32.mrf.mxu0
      %v846 = vadd.f32 0.0, %v845
      %v847 = vpop.f32.mrf.mxu0
      %v848 = vadd.f32 0.0, %v847
      %849 = vmatmul.bf16.gmra.mxu0 %v801
      %v850 = vpop.f32.mrf.mxu0
      %v851 = vadd.f32 0.0, %v850
      %v852 = vpop.f32.mrf.mxu0
      %v853 = vadd.f32 0.0, %v852
      %854 = vmatmul.bf16.gmra.mxu0 %v804
      %v855 = vpop.f32.mrf.mxu0
      %v856 = vadd.f32 0.0, %v855
      %v857 = vpop.f32.mrf.mxu0
      %v858 = vadd.f32 0.0, %v857
      %859 = vmatmul.bf16.gmra.mxu0 %v807
      %v860 = vpop.f32.mrf.mxu0
      %v861 = vadd.f32 0.0, %v860
      %v862 = vpop.f32.mrf.mxu0
      %v863 = vadd.f32 0.0, %v862
      %864 = vmatmul.bf16.gmra.mxu0 %v810
      %v865 = vpop.f32.mrf.mxu0
      %v866 = vadd.f32 0.0, %v865
      %v867 = vpop.f32.mrf.mxu0
      %v868 = vadd.f32 0.0, %v867
      %869 = vmatmul.bf16.gmra.mxu0 %v813
      %v870 = vpop.f32.mrf.mxu0
      %v871 = vadd.f32 0.0, %v870
      %v872 = vpop.f32.mrf.mxu0
      %v873 = vadd.f32 0.0, %v872
      %874 = vmatmul.bf16.gmra.mxu0 %v816
      %v875 = vpop.f32.mrf.mxu0
      %v876 = vadd.f32 0.0, %v875
      %v877 = vpop.f32.mrf.mxu0
      %878 = vdwg.mxu0
      %v879 = vadd.f32 %v717, %v831
      %v880 = vadd.f32 %v719, %v833
      %v881 = vadd.f32 %v722, %v836
      %v882 = vadd.f32 %v724, %v838
      %v883 = vadd.f32 %v727, %v841
      %v884 = vadd.f32 %v729, %v843
      %v885 = vadd.f32 %v732, %v846
      %v886 = vadd.f32 %v734, %v848
      %v887 = vadd.f32 %v737, %v851
      %v888 = vadd.f32 %v739, %v853
      %v889 = vadd.f32 %v742, %v856
      %v890 = vadd.f32 %v744, %v858
      %v891 = vadd.f32 %v747, %v861
      %v892 = vadd.f32 %v749, %v863
      %v893 = vadd.f32 %v752, %v866
      %v894 = vadd.f32 %v754, %v868
      %v895 = vadd.f32 %v757, %v871
      %v896 = vadd.f32 %v759, %v873
      %v897 = vadd.f32 %v762, %v876
      %s898 = scalar_lea.vmem %s2, 12
      %v899 = vld [vmem:[%s898] sm:$0xf]
      %vm900 = vsmask.f32 6400
      %v901 = vrot.slane %v526, 1
      %v902 = vrot.slane %v522, 2
      %v903 = vor.u32 %v901, %v902
      %v904 = vrot.slane %v534, 1
      %v905 = vrot.slane %v530, 2
      %v906 = vor.u32 %v904, %v905
      %v907 = vsel %vm900, %v903, %v906
      %v908 = vrot.slane %v542, 1
      %v909 = vrot.slane %v538, 2
      %v910 = vor.u32 %v908, %v909
      %v911 = vsel %vm900, %v906, %v910
      %v912 = vrot.slane %v550, 1
      %v913 = vrot.slane %v546, 2
      %v914 = vor.u32 %v912, %v913
      %v915 = vsel %vm900, %v910, %v914
      %v916 = vrot.slane %v558, 1
      %v917 = vrot.slane %v554, 2
      %v918 = vor.u32 %v916, %v917
      %v919 = vsel %vm900, %v914, %v918
      %v920 = vrot.slane %v566, 1
      %v921 = vrot.slane %v562, 2
      %v922 = vor.u32 %v920, %v921
      %v923 = vsel %vm900, %v918, %v922
      %v924 = vrot.slane %v574, 1
      %v925 = vrot.slane %v570, 2
      %v926 = vor.u32 %v924, %v925
      %v927 = vsel %vm900, %v922, %v926
      %v928 = vrot.slane %v582, 1
      %v929 = vrot.slane %v578, 2
      %v930 = vor.u32 %v928, %v929
      %v931 = vsel %vm900, %v926, %v930
      %v932 = vrot.slane %v589, 1
      %v933 = vrot.slane %v585, 2
      %v934 = vor.u32 %v932, %v933
      %v935 = vsel %vm900, %v930, %v934
      %v937 = vshrl.u32 %v504, 16
      %v939 = vrot.slane %v937, 1
      %v940 = vshll.u32 %v504, 16
      %v942 = vrot.slane %v940, 2
      %v943 = vor.u32 %v939, %v942
      %v944 = vsel %vm900, %v934, %v943
      %v946 = vsel %vm592, %v907, 0
      %v949 = vsel %vm592, %v911, 0
      %v952 = vsel %vm592, %v915, 0
      %v955 = vsel %vm592, %v919, 0
      %v958 = vsel %vm592, %v923, 0
      %v961 = vsel %vm592, %v927, 0
      %v964 = vsel %vm592, %v931, 0
      %v967 = vsel %vm592, %v935, 0
      %v970 = vsel %vm592, %v944, 0
      %v973 = vsel %vm592, %v943, 0
      %v976 = vsel %vm506, %v899, 0
      %978 = vmatpush.bf16.msra.mxu0 0
      %979 = vmatpush.bf16.msra.mxu0 0
      %980 = vmatpush.bf16.msra.mxu0 0
      %981 = vmatpush.bf16.msra.mxu0 0
      %982 = vmatpush.bf16.msra.mxu0 0
      %983 = vmatpush.bf16.msra.mxu0 0
      %984 = vmatpush.bf16.msra.mxu0 0
      %985 = vmatpush.bf16.msra.mxu0 %v976
      %986 = vmatmul.bf16.gmra.mxu0 %v946
      %v987 = vpop.f32.mrf.mxu0
      %v988 = vadd.f32 0.0, %v987
      %v989 = vpop.f32.mrf.mxu0
      %v990 = vadd.f32 0.0, %v989
      %991 = vmatmul.bf16.gmra.mxu0 %v949
      %v992 = vpop.f32.mrf.mxu0
      %v993 = vadd.f32 0.0, %v992
      %v994 = vpop.f32.mrf.mxu0
      %v995 = vadd.f32 0.0, %v994
      %996 = vmatmul.bf16.gmra.mxu0 %v952
      %v997 = vpop.f32.mrf.mxu0
      %v998 = vadd.f32 0.0, %v997
      %v999 = vpop.f32.mrf.mxu0
      %v1000 = vadd.f32 0.0, %v999
      %1001 = vmatmul.bf16.gmra.mxu0 %v955
      %v1002 = vpop.f32.mrf.mxu0
      %v1003 = vadd.f32 0.0, %v1002
      %v1004 = vpop.f32.mrf.mxu0
      %v1005 = vadd.f32 0.0, %v1004
      %1006 = vmatmul.bf16.gmra.mxu0 %v958
      %v1007 = vpop.f32.mrf.mxu0
      %v1008 = vadd.f32 0.0, %v1007
      %v1009 = vpop.f32.mrf.mxu0
      %v1010 = vadd.f32 0.0, %v1009
      %1011 = vmatmul.bf16.gmra.mxu0 %v961
      %v1012 = vpop.f32.mrf.mxu0
      %v1013 = vadd.f32 0.0, %v1012
      %v1014 = vpop.f32.mrf.mxu0
      %v1015 = vadd.f32 0.0, %v1014
      %1016 = vmatmul.bf16.gmra.mxu0 %v964
      %v1017 = vpop.f32.mrf.mxu0
      %v1018 = vadd.f32 0.0, %v1017
      %v1019 = vpop.f32.mrf.mxu0
      %v1020 = vadd.f32 0.0, %v1019
      %1021 = vmatmul.bf16.gmra.mxu0 %v967
      %v1022 = vpop.f32.mrf.mxu0
      %v1023 = vadd.f32 0.0, %v1022
      %v1024 = vpop.f32.mrf.mxu0
      %v1025 = vadd.f32 0.0, %v1024
      %1026 = vmatmul.bf16.gmra.mxu0 %v970
      %v1027 = vpop.f32.mrf.mxu0
      %v1028 = vadd.f32 0.0, %v1027
      %v1029 = vpop.f32.mrf.mxu0
      %v1030 = vadd.f32 0.0, %v1029
      %1031 = vmatmul.bf16.gmra.mxu0 %v973
      %v1032 = vpop.f32.mrf.mxu0
      %v1033 = vadd.f32 0.0, %v1032
      %v1034 = vpop.f32.mrf.mxu0
      %1035 = vdwg.mxu0
      %v1036 = vadd.f32 %v879, %v988
      %v1037 = vadd.f32 %v880, %v990
      %v1038 = vadd.f32 %v881, %v993
      %v1039 = vadd.f32 %v882, %v995
      %v1040 = vadd.f32 %v883, %v998
      %v1041 = vadd.f32 %v884, %v1000
      %v1042 = vadd.f32 %v885, %v1003
      %v1043 = vadd.f32 %v886, %v1005
      %v1044 = vadd.f32 %v887, %v1008
      %v1045 = vadd.f32 %v888, %v1010
      %v1046 = vadd.f32 %v889, %v1013
      %v1047 = vadd.f32 %v890, %v1015
      %v1048 = vadd.f32 %v891, %v1018
      %v1049 = vadd.f32 %v892, %v1020
      %v1050 = vadd.f32 %v893, %v1023
      %v1051 = vadd.f32 %v894, %v1025
      %v1052 = vadd.f32 %v895, %v1028
      %v1053 = vadd.f32 %v896, %v1030
      %v1054 = vadd.f32 %v897, %v1033
      %s1055 = scalar_lea.vmem %s2, 16
      %v1056 = vld [vmem:[%s1055] sm:$0xf]
      %vm1057 = vcmask 1045504
      %v1058 = vrot.slane %v484, 2
      %v1059 = vrot.slane %v485, 2
      %v1060 = vsel %vm1057, %v1058, %v1059
      %v1061 = vrot.slane %v486, 2
      %v1062 = vsel %vm1057, %v1059, %v1061
      %v1063 = vrot.slane %v487, 2
      %v1064 = vsel %vm1057, %v1061, %v1063
      %v1065 = vrot.slane %v488, 2
      %v1066 = vsel %vm1057, %v1063, %v1065
      %v1067 = vrot.slane %v489, 2
      %v1068 = vsel %vm1057, %v1065, %v1067
      %v1069 = vrot.slane %v490, 2
      %v1070 = vsel %vm1057, %v1067, %v1069
      %v1071 = vrot.slane %v491, 2
      %v1072 = vsel %vm1057, %v1069, %v1071
      %v1073 = vrot.slane %v509, 2
      %v1074 = vsel %vm1057, %v1071, %v1073
      %v1075 = vrot.slane %v504, 2
      %v1076 = vsel %vm1057, %v1073, %v1075
      %v1078 = vsel %vm592, %v1060, 0
      %v1081 = vsel %vm592, %v1062, 0
      %v1084 = vsel %vm592, %v1064, 0
      %v1087 = vsel %vm592, %v1066, 0
      %v1090 = vsel %vm592, %v1068, 0
      %v1093 = vsel %vm592, %v1070, 0
      %v1096 = vsel %vm592, %v1072, 0
      %v1099 = vsel %vm592, %v1074, 0
      %v1102 = vsel %vm592, %v1076, 0
      %v1105 = vsel %vm592, %v1075, 0
      %v1108 = vsel %vm506, %v1056, 0
      %1110 = vmatpush.bf16.msra.mxu0 0
      %1111 = vmatpush.bf16.msra.mxu0 0
      %1112 = vmatpush.bf16.msra.mxu0 0
      %1113 = vmatpush.bf16.msra.mxu0 0
      %1114 = vmatpush.bf16.msra.mxu0 0
      %1115 = vmatpush.bf16.msra.mxu0 0
      %1116 = vmatpush.bf16.msra.mxu0 0
      %1117 = vmatpush.bf16.msra.mxu0 %v1108
      %1118 = vmatmul.bf16.gmra.mxu0 %v1078
      %v1119 = vpop.f32.mrf.mxu0
      %v1120 = vadd.f32 0.0, %v1119
      %v1121 = vpop.f32.mrf.mxu0
      %v1122 = vadd.f32 0.0, %v1121
      %1123 = vmatmul.bf16.gmra.mxu0 %v1081
      %v1124 = vpop.f32.mrf.mxu0
      %v1125 = vadd.f32 0.0, %v1124
      %v1126 = vpop.f32.mrf.mxu0
      %v1127 = vadd.f32 0.0, %v1126
      %1128 = vmatmul.bf16.gmra.mxu0 %v1084
      %v1129 = vpop.f32.mrf.mxu0
      %v1130 = vadd.f32 0.0, %v1129
      %v1131 = vpop.f32.mrf.mxu0
      %v1132 = vadd.f32 0.0, %v1131
      %1133 = vmatmul.bf16.gmra.mxu0 %v1087
      %v1134 = vpop.f32.mrf.mxu0
      %v1135 = vadd.f32 0.0, %v1134
      %v1136 = vpop.f32.mrf.mxu0
      %v1137 = vadd.f32 0.0, %v1136
      %1138 = vmatmul.bf16.gmra.mxu0 %v1090
      %v1139 = vpop.f32.mrf.mxu0
      %v1140 = vadd.f32 0.0, %v1139
      %v1141 = vpop.f32.mrf.mxu0
      %v1142 = vadd.f32 0.0, %v1141
      %1143 = vmatmul.bf16.gmra.mxu0 %v1093
      %v1144 = vpop.f32.mrf.mxu0
      %v1145 = vadd.f32 0.0, %v1144
      %v1146 = vpop.f32.mrf.mxu0
      %v1147 = vadd.f32 0.0, %v1146
      %1148 = vmatmul.bf16.gmra.mxu0 %v1096
      %v1149 = vpop.f32.mrf.mxu0
      %v1150 = vadd.f32 0.0, %v1149
      %v1151 = vpop.f32.mrf.mxu0
      %v1152 = vadd.f32 0.0, %v1151
      %1153 = vmatmul.bf16.gmra.mxu0 %v1099
      %v1154 = vpop.f32.mrf.mxu0
      %v1155 = vadd.f32 0.0, %v1154
      %v1156 = vpop.f32.mrf.mxu0
      %v1157 = vadd.f32 0.0, %v1156
      %1158 = vmatmul.bf16.gmra.mxu0 %v1102
      %v1159 = vpop.f32.mrf.mxu0
      %v1160 = vadd.f32 0.0, %v1159
      %v1161 = vpop.f32.mrf.mxu0
      %v1162 = vadd.f32 0.0, %v1161
      %1163 = vmatmul.bf16.gmra.mxu0 %v1105
      %v1164 = vpop.f32.mrf.mxu0
      %v1165 = vadd.f32 0.0, %v1164
      %v1166 = vpop.f32.mrf.mxu0
      %1167 = vdwg.mxu0
      %v1168 = vadd.f32 %v1036, %v1120
      %v1169 = vadd.f32 %v1037, %v1122
      %v1170 = vadd.f32 %v1038, %v1125
      %v1171 = vadd.f32 %v1039, %v1127
      %v1172 = vadd.f32 %v1040, %v1130
      %v1173 = vadd.f32 %v1041, %v1132
      %v1174 = vadd.f32 %v1042, %v1135
      %v1175 = vadd.f32 %v1043, %v1137
      %v1176 = vadd.f32 %v1044, %v1140
      %v1177 = vadd.f32 %v1045, %v1142
      %v1178 = vadd.f32 %v1046, %v1145
      %v1179 = vadd.f32 %v1047, %v1147
      %v1180 = vadd.f32 %v1048, %v1150
      %v1181 = vadd.f32 %v1049, %v1152
      %v1182 = vadd.f32 %v1050, %v1155
      %v1183 = vadd.f32 %v1051, %v1157
      %v1184 = vadd.f32 %v1052, %v1160
      %v1185 = vadd.f32 %v1053, %v1162
      %v1186 = vadd.f32 %v1054, %v1165
      %s1187 = scalar_lea.vmem %s2, 20
      %v1188 = vld [vmem:[%s1187] sm:$0xf]
      %vm1189 = vsmask.f32 5376
      %v1190 = vrot.slane %v526, 2
      %v1191 = vrot.slane %v522, 3
      %v1192 = vor.u32 %v1190, %v1191
      %v1193 = vrot.slane %v534, 2
      %v1194 = vrot.slane %v530, 3
      %v1195 = vor.u32 %v1193, %v1194
      %v1196 = vsel %vm1189, %v1192, %v1195
      %v1197 = vrot.slane %v542, 2
      %v1198 = vrot.slane %v538, 3
      %v1199 = vor.u32 %v1197, %v1198
      %v1200 = vsel %vm1189, %v1195, %v1199
      %v1201 = vrot.slane %v550, 2
      %v1202 = vrot.slane %v546, 3
      %v1203 = vor.u32 %v1201, %v1202
      %v1204 = vsel %vm1189, %v1199, %v1203
      %v1205 = vrot.slane %v558, 2
      %v1206 = vrot.slane %v554, 3
      %v1207 = vor.u32 %v1205, %v1206
      %v1208 = vsel %vm1189, %v1203, %v1207
      %v1209 = vrot.slane %v566, 2
      %v1210 = vrot.slane %v562, 3
      %v1211 = vor.u32 %v1209, %v1210
      %v1212 = vsel %vm1189, %v1207, %v1211
      %v1213 = vrot.slane %v574, 2
      %v1214 = vrot.slane %v570, 3
      %v1215 = vor.u32 %v1213, %v1214
      %v1216 = vsel %vm1189, %v1211, %v1215
      %v1217 = vrot.slane %v582, 2
      %v1218 = vrot.slane %v578, 3
      %v1219 = vor.u32 %v1217, %v1218
      %v1220 = vsel %vm1189, %v1215, %v1219
      %v1221 = vrot.slane %v589, 2
      %v1222 = vrot.slane %v585, 3
      %v1223 = vor.u32 %v1221, %v1222
      %v1224 = vsel %vm1189, %v1219, %v1223
      %v1225 = vrot.slane %v937, 2
      %v1226 = vrot.slane %v940, 3
      %v1227 = vor.u32 %v1225, %v1226
      %v1228 = vsel %vm1189, %v1223, %v1227
      %v1230 = vsel %vm592, %v1196, 0
      %v1233 = vsel %vm592, %v1200, 0
      %v1236 = vsel %vm592, %v1204, 0
      %v1239 = vsel %vm592, %v1208, 0
      %v1242 = vsel %vm592, %v1212, 0
      %v1245 = vsel %vm592, %v1216, 0
      %v1248 = vsel %vm592, %v1220, 0
      %v1251 = vsel %vm592, %v1224, 0
      %v1254 = vsel %vm592, %v1228, 0
      %v1257 = vsel %vm592, %v1227, 0
      %v1260 = vsel %vm506, %v1188, 0
      %1262 = vmatpush.bf16.msra.mxu0 0
      %1263 = vmatpush.bf16.msra.mxu0 0
      %1264 = vmatpush.bf16.msra.mxu0 0
      %1265 = vmatpush.bf16.msra.mxu0 0
      %1266 = vmatpush.bf16.msra.mxu0 0
      %1267 = vmatpush.bf16.msra.mxu0 0
      %1268 = vmatpush.bf16.msra.mxu0 0
      %1269 = vmatpush.bf16.msra.mxu0 %v1260
      %1270 = vmatmul.bf16.gmra.mxu0 %v1230
      %v1271 = vpop.f32.mrf.mxu0
      %v1272 = vadd.f32 0.0, %v1271
      %v1273 = vpop.f32.mrf.mxu0
      %v1274 = vadd.f32 0.0, %v1273
      %1275 = vmatmul.bf16.gmra.mxu0 %v1233
      %v1276 = vpop.f32.mrf.mxu0
      %v1277 = vadd.f32 0.0, %v1276
      %v1278 = vpop.f32.mrf.mxu0
      %v1279 = vadd.f32 0.0, %v1278
      %1280 = vmatmul.bf16.gmra.mxu0 %v1236
      %v1281 = vpop.f32.mrf.mxu0
      %v1282 = vadd.f32 0.0, %v1281
      %v1283 = vpop.f32.mrf.mxu0
      %v1284 = vadd.f32 0.0, %v1283
      %1285 = vmatmul.bf16.gmra.mxu0 %v1239
      %v1286 = vpop.f32.mrf.mxu0
      %v1287 = vadd.f32 0.0, %v1286
      %v1288 = vpop.f32.mrf.mxu0
      %v1289 = vadd.f32 0.0, %v1288
      %1290 = vmatmul.bf16.gmra.mxu0 %v1242
      %v1291 = vpop.f32.mrf.mxu0
      %v1292 = vadd.f32 0.0, %v1291
      %v1293 = vpop.f32.mrf.mxu0
      %v1294 = vadd.f32 0.0, %v1293
      %1295 = vmatmul.bf16.gmra.mxu0 %v1245
      %v1296 = vpop.f32.mrf.mxu0
      %v1297 = vadd.f32 0.0, %v1296
      %v1298 = vpop.f32.mrf.mxu0
      %v1299 = vadd.f32 0.0, %v1298
      %1300 = vmatmul.bf16.gmra.mxu0 %v1248
      %v1301 = vpop.f32.mrf.mxu0
      %v1302 = vadd.f32 0.0, %v1301
      %v1303 = vpop.f32.mrf.mxu0
      %v1304 = vadd.f32 0.0, %v1303
      %1305 = vmatmul.bf16.gmra.mxu0 %v1251
      %v1306 = vpop.f32.mrf.mxu0
      %v1307 = vadd.f32 0.0, %v1306
      %v1308 = vpop.f32.mrf.mxu0
      %v1309 = vadd.f32 0.0, %v1308
      %1310 = vmatmul.bf16.gmra.mxu0 %v1254
      %v1311 = vpop.f32.mrf.mxu0
      %v1312 = vadd.f32 0.0, %v1311
      %v1313 = vpop.f32.mrf.mxu0
      %v1314 = vadd.f32 0.0, %v1313
      %1315 = vmatmul.bf16.gmra.mxu0 %v1257
      %v1316 = vpop.f32.mrf.mxu0
      %v1317 = vadd.f32 0.0, %v1316
      %v1318 = vpop.f32.mrf.mxu0
      %1319 = vdwg.mxu0
      %v1320 = vadd.f32 %v1168, %v1272
      %v1321 = vadd.f32 %v1169, %v1274
      %v1322 = vadd.f32 %v1170, %v1277
      %v1323 = vadd.f32 %v1171, %v1279
      %v1324 = vadd.f32 %v1172, %v1282
      %v1325 = vadd.f32 %v1173, %v1284
      %v1326 = vadd.f32 %v1174, %v1287
      %v1327 = vadd.f32 %v1175, %v1289
      %v1328 = vadd.f32 %v1176, %v1292
      %v1329 = vadd.f32 %v1177, %v1294
      %v1330 = vadd.f32 %v1178, %v1297
      %v1331 = vadd.f32 %v1179, %v1299
      %v1332 = vadd.f32 %v1180, %v1302
      %v1333 = vadd.f32 %v1181, %v1304
      %v1334 = vadd.f32 %v1182, %v1307
      %v1335 = vadd.f32 %v1183, %v1309
      %v1336 = vadd.f32 %v1184, %v1312
      %v1337 = vadd.f32 %v1185, %v1314
      %v1338 = vadd.f32 %v1186, %v1317
      %s1339 = scalar_lea.vmem %s2, 24
      %v1340 = vld [vmem:[%s1339] sm:$0xf]
      %vm1341 = vcmask 1044480
      %v1342 = vrot.slane %v485, 3
      %v1343 = vrot.slane %v486, 3
      %v1344 = vsel %vm1341, %v1342, %v1343
      %v1345 = vrot.slane %v487, 3
      %v1346 = vsel %vm1341, %v1343, %v1345
      %v1347 = vrot.slane %v488, 3
      %v1348 = vsel %vm1341, %v1345, %v1347
      %v1349 = vrot.slane %v489, 3
      %v1350 = vsel %vm1341, %v1347, %v1349
      %v1351 = vrot.slane %v490, 3
      %v1352 = vsel %vm1341, %v1349, %v1351
      %v1353 = vrot.slane %v491, 3
      %v1354 = vsel %vm1341, %v1351, %v1353
      %v1355 = vrot.slane %v509, 3
      %v1356 = vsel %vm1341, %v1353, %v1355
      %v1357 = vrot.slane %v504, 3
      %v1358 = vsel %vm1341, %v1355, %v1357
      %v1359 = vrot.slane %v505, 3
      %v1360 = vsel %vm1341, %v1357, %v1359
      %v1362 = vsel %vm592, %v1344, 0
      %v1365 = vsel %vm592, %v1346, 0
      %v1368 = vsel %vm592, %v1348, 0
      %v1371 = vsel %vm592, %v1350, 0
      %v1374 = vsel %vm592, %v1352, 0
      %v1377 = vsel %vm592, %v1354, 0
      %v1380 = vsel %vm592, %v1356, 0
      %v1383 = vsel %vm592, %v1358, 0
      %v1386 = vsel %vm592, %v1360, 0
      %v1389 = vsel %vm592, %v1359, 0
      %v1392 = vsel %vm506, %v1340, 0
      %1394 = vmatpush.bf16.msra.mxu0 0
      %1395 = vmatpush.bf16.msra.mxu0 0
      %1396 = vmatpush.bf16.msra.mxu0 0
      %1397 = vmatpush.bf16.msra.mxu0 0
      %1398 = vmatpush.bf16.msra.mxu0 0
      %1399 = vmatpush.bf16.msra.mxu0 0
      %1400 = vmatpush.bf16.msra.mxu0 0
      %1401 = vmatpush.bf16.msra.mxu0 %v1392
      %1402 = vmatmul.bf16.gmra.mxu0 %v1362
      %v1403 = vpop.f32.mrf.mxu0
      %v1404 = vadd.f32 0.0, %v1403
      %v1405 = vpop.f32.mrf.mxu0
      %v1406 = vadd.f32 0.0, %v1405
      %1407 = vmatmul.bf16.gmra.mxu0 %v1365
      %v1408 = vpop.f32.mrf.mxu0
      %v1409 = vadd.f32 0.0, %v1408
      %v1410 = vpop.f32.mrf.mxu0
      %v1411 = vadd.f32 0.0, %v1410
      %1412 = vmatmul.bf16.gmra.mxu0 %v1368
      %v1413 = vpop.f32.mrf.mxu0
      %v1414 = vadd.f32 0.0, %v1413
      %v1415 = vpop.f32.mrf.mxu0
      %v1416 = vadd.f32 0.0, %v1415
      %1417 = vmatmul.bf16.gmra.mxu0 %v1371
      %v1418 = vpop.f32.mrf.mxu0
      %v1419 = vadd.f32 0.0, %v1418
      %v1420 = vpop.f32.mrf.mxu0
      %v1421 = vadd.f32 0.0, %v1420
      %1422 = vmatmul.bf16.gmra.mxu0 %v1374
      %v1423 = vpop.f32.mrf.mxu0
      %v1424 = vadd.f32 0.0, %v1423
      %v1425 = vpop.f32.mrf.mxu0
      %v1426 = vadd.f32 0.0, %v1425
      %1427 = vmatmul.bf16.gmra.mxu0 %v1377
      %v1428 = vpop.f32.mrf.mxu0
      %v1429 = vadd.f32 0.0, %v1428
      %v1430 = vpop.f32.mrf.mxu0
      %v1431 = vadd.f32 0.0, %v1430
      %1432 = vmatmul.bf16.gmra.mxu0 %v1380
      %v1433 = vpop.f32.mrf.mxu0
      %v1434 = vadd.f32 0.0, %v1433
      %v1435 = vpop.f32.mrf.mxu0
      %v1436 = vadd.f32 0.0, %v1435
      %1437 = vmatmul.bf16.gmra.mxu0 %v1383
      %v1438 = vpop.f32.mrf.mxu0
      %v1439 = vadd.f32 0.0, %v1438
      %v1440 = vpop.f32.mrf.mxu0
      %v1441 = vadd.f32 0.0, %v1440
      %1442 = vmatmul.bf16.gmra.mxu0 %v1386
      %v1443 = vpop.f32.mrf.mxu0
      %v1444 = vadd.f32 0.0, %v1443
      %v1445 = vpop.f32.mrf.mxu0
      %v1446 = vadd.f32 0.0, %v1445
      %1447 = vmatmul.bf16.gmra.mxu0 %v1389
      %v1448 = vpop.f32.mrf.mxu0
      %v1449 = vadd.f32 0.0, %v1448
      %v1450 = vpop.f32.mrf.mxu0
      %1451 = vdwg.mxu0
      %v1452 = vadd.f32 %v1320, %v1404
      %v1453 = vadd.f32 %v1321, %v1406
      %v1454 = vadd.f32 %v1322, %v1409
      %v1455 = vadd.f32 %v1323, %v1411
      %v1456 = vadd.f32 %v1324, %v1414
      %v1457 = vadd.f32 %v1325, %v1416
      %v1458 = vadd.f32 %v1326, %v1419
      %v1459 = vadd.f32 %v1327, %v1421
      %v1460 = vadd.f32 %v1328, %v1424
      %v1461 = vadd.f32 %v1329, %v1426
      %v1462 = vadd.f32 %v1330, %v1429
      %v1463 = vadd.f32 %v1331, %v1431
      %v1464 = vadd.f32 %v1332, %v1434
      %v1465 = vadd.f32 %v1333, %v1436
      %v1466 = vadd.f32 %v1334, %v1439
      %v1467 = vadd.f32 %v1335, %v1441
      %v1468 = vadd.f32 %v1336, %v1444
      %v1469 = vadd.f32 %v1337, %v1446
      %v1470 = vadd.f32 %v1338, %v1449
      %s1471 = scalar_lea.vmem %s2, 28
      %v1472 = vld [vmem:[%s1471] sm:$0xf]
      %vm1473 = vsmask.f32 4352
      %v1474 = vrot.slane %v534, 3
      %v1475 = vrot.slane %v530, 4
      %v1476 = vor.u32 %v1474, %v1475
      %v1477 = vrot.slane %v542, 3
      %v1478 = vrot.slane %v538, 4
      %v1479 = vor.u32 %v1477, %v1478
      %v1480 = vsel %vm1473, %v1476, %v1479
      %v1481 = vrot.slane %v550, 3
      %v1482 = vrot.slane %v546, 4
      %v1483 = vor.u32 %v1481, %v1482
      %v1484 = vsel %vm1473, %v1479, %v1483
      %v1485 = vrot.slane %v558, 3
      %v1486 = vrot.slane %v554, 4
      %v1487 = vor.u32 %v1485, %v1486
      %v1488 = vsel %vm1473, %v1483, %v1487
      %v1489 = vrot.slane %v566, 3
      %v1490 = vrot.slane %v562, 4
      %v1491 = vor.u32 %v1489, %v1490
      %v1492 = vsel %vm1473, %v1487, %v1491
      %v1493 = vrot.slane %v574, 3
      %v1494 = vrot.slane %v570, 4
      %v1495 = vor.u32 %v1493, %v1494
      %v1496 = vsel %vm1473, %v1491, %v1495
      %v1497 = vrot.slane %v582, 3
      %v1498 = vrot.slane %v578, 4
      %v1499 = vor.u32 %v1497, %v1498
      %v1500 = vsel %vm1473, %v1495, %v1499
      %v1501 = vrot.slane %v589, 3
      %v1502 = vrot.slane %v585, 4
      %v1503 = vor.u32 %v1501, %v1502
      %v1504 = vsel %vm1473, %v1499, %v1503
      %v1505 = vrot.slane %v937, 3
      %v1506 = vrot.slane %v940, 4
      %v1507 = vor.u32 %v1505, %v1506
      %v1508 = vsel %vm1473, %v1503, %v1507
      %v1510 = vshrl.u32 %v505, 16
      %v1512 = vrot.slane %v1510, 3
      %v1513 = vshll.u32 %v505, 16
      %v1515 = vrot.slane %v1513, 4
      %v1516 = vor.u32 %v1512, %v1515
      %v1517 = vsel %vm1473, %v1507, %v1516
      %v1519 = vsel %vm592, %v1480, 0
      %v1522 = vsel %vm592, %v1484, 0
      %v1525 = vsel %vm592, %v1488, 0
      %v1528 = vsel %vm592, %v1492, 0
      %v1531 = vsel %vm592, %v1496, 0
      %v1534 = vsel %vm592, %v1500, 0
      %v1537 = vsel %vm592, %v1504, 0
      %v1540 = vsel %vm592, %v1508, 0
      %v1543 = vsel %vm592, %v1517, 0
      %v1546 = vsel %vm592, %v1516, 0
      %v1549 = vsel %vm506, %v1472, 0
      %1551 = vmatpush.bf16.msra.mxu0 0
      %1552 = vmatpush.bf16.msra.mxu0 0
      %1553 = vmatpush.bf16.msra.mxu0 0
      %1554 = vmatpush.bf16.msra.mxu0 0
      %1555 = vmatpush.bf16.msra.mxu0 0
      %1556 = vmatpush.bf16.msra.mxu0 0
      %1557 = vmatpush.bf16.msra.mxu0 0
      %1558 = vmatpush.bf16.msra.mxu0 %v1549
      %1559 = vmatmul.bf16.gmra.mxu0 %v1519
      %v1560 = vpop.f32.mrf.mxu0
      %v1561 = vadd.f32 0.0, %v1560
      %v1562 = vpop.f32.mrf.mxu0
      %v1563 = vadd.f32 0.0, %v1562
      %1564 = vmatmul.bf16.gmra.mxu0 %v1522
      %v1565 = vpop.f32.mrf.mxu0
      %v1566 = vadd.f32 0.0, %v1565
      %v1567 = vpop.f32.mrf.mxu0
      %v1568 = vadd.f32 0.0, %v1567
      %1569 = vmatmul.bf16.gmra.mxu0 %v1525
      %v1570 = vpop.f32.mrf.mxu0
      %v1571 = vadd.f32 0.0, %v1570
      %v1572 = vpop.f32.mrf.mxu0
      %v1573 = vadd.f32 0.0, %v1572
      %1574 = vmatmul.bf16.gmra.mxu0 %v1528
      %v1575 = vpop.f32.mrf.mxu0
      %v1576 = vadd.f32 0.0, %v1575
      %v1577 = vpop.f32.mrf.mxu0
      %v1578 = vadd.f32 0.0, %v1577
      %1579 = vmatmul.bf16.gmra.mxu0 %v1531
      %v1580 = vpop.f32.mrf.mxu0
      %v1581 = vadd.f32 0.0, %v1580
      %v1582 = vpop.f32.mrf.mxu0
      %v1583 = vadd.f32 0.0, %v1582
      %1584 = vmatmul.bf16.gmra.mxu0 %v1534
      %v1585 = vpop.f32.mrf.mxu0
      %v1586 = vadd.f32 0.0, %v1585
      %v1587 = vpop.f32.mrf.mxu0
      %v1588 = vadd.f32 0.0, %v1587
      %1589 = vmatmul.bf16.gmra.mxu0 %v1537
      %v1590 = vpop.f32.mrf.mxu0
      %v1591 = vadd.f32 0.0, %v1590
      %v1592 = vpop.f32.mrf.mxu0
      %v1593 = vadd.f32 0.0, %v1592
      %1594 = vmatmul.bf16.gmra.mxu0 %v1540
      %v1595 = vpop.f32.mrf.mxu0
      %v1596 = vadd.f32 0.0, %v1595
      %v1597 = vpop.f32.mrf.mxu0
      %v1598 = vadd.f32 0.0, %v1597
      %1599 = vmatmul.bf16.gmra.mxu0 %v1543
      %v1600 = vpop.f32.mrf.mxu0
      %v1601 = vadd.f32 0.0, %v1600
      %v1602 = vpop.f32.mrf.mxu0
      %v1603 = vadd.f32 0.0, %v1602
      %1604 = vmatmul.bf16.gmra.mxu0 %v1546
      %v1605 = vpop.f32.mrf.mxu0
      %v1606 = vadd.f32 0.0, %v1605
      %v1607 = vpop.f32.mrf.mxu0
      %1608 = vdwg.mxu0
      %v1609 = vadd.f32 %v1452, %v1561
      %v1610 = vadd.f32 %v1453, %v1563
      %v1611 = vadd.f32 %v1454, %v1566
      %v1612 = vadd.f32 %v1455, %v1568
      %v1613 = vadd.f32 %v1456, %v1571
      %v1614 = vadd.f32 %v1457, %v1573
      %v1615 = vadd.f32 %v1458, %v1576
      %v1616 = vadd.f32 %v1459, %v1578
      %v1617 = vadd.f32 %v1460, %v1581
      %v1618 = vadd.f32 %v1461, %v1583
      %v1619 = vadd.f32 %v1462, %v1586
      %v1620 = vadd.f32 %v1463, %v1588
      %v1621 = vadd.f32 %v1464, %v1591
      %v1622 = vadd.f32 %v1465, %v1593
      %v1623 = vadd.f32 %v1466, %v1596
      %v1624 = vadd.f32 %v1467, %v1598
      %v1625 = vadd.f32 %v1468, %v1601
      %v1626 = vadd.f32 %v1469, %v1603
      %v1627 = vadd.f32 %v1470, %v1606
      %s1628 = scalar_lea.vmem %s2, 32
      %v1629 = vld [vmem:[%s1628] sm:$0xf]
      %vm1630 = vcmask 1043456
      %v1631 = vrot.slane %v485, 4
      %v1632 = vrot.slane %v486, 4
      %v1633 = vsel %vm1630, %v1631, %v1632
      %v1634 = vrot.slane %v487, 4
      %v1635 = vsel %vm1630, %v1632, %v1634
      %v1636 = vrot.slane %v488, 4
      %v1637 = vsel %vm1630, %v1634, %v1636
      %v1638 = vrot.slane %v489, 4
      %v1639 = vsel %vm1630, %v1636, %v1638
      %v1640 = vrot.slane %v490, 4
      %v1641 = vsel %vm1630, %v1638, %v1640
      %v1642 = vrot.slane %v491, 4
      %v1643 = vsel %vm1630, %v1640, %v1642
      %v1644 = vrot.slane %v509, 4
      %v1645 = vsel %vm1630, %v1642, %v1644
      %v1646 = vrot.slane %v504, 4
      %v1647 = vsel %vm1630, %v1644, %v1646
      %v1648 = vrot.slane %v505, 4
      %v1649 = vsel %vm1630, %v1646, %v1648
      %v1651 = vsel %vm592, %v1633, 0
      %v1654 = vsel %vm592, %v1635, 0
      %v1657 = vsel %vm592, %v1637, 0
      %v1660 = vsel %vm592, %v1639, 0
      %v1663 = vsel %vm592, %v1641, 0
      %v1666 = vsel %vm592, %v1643, 0
      %v1669 = vsel %vm592, %v1645, 0
      %v1672 = vsel %vm592, %v1647, 0
      %v1675 = vsel %vm592, %v1649, 0
      %v1678 = vsel %vm592, %v1648, 0
      %v1681 = vsel %vm506, %v1629, 0
      %1683 = vmatpush.bf16.msra.mxu0 0
      %1684 = vmatpush.bf16.msra.mxu0 0
      %1685 = vmatpush.bf16.msra.mxu0 0
      %1686 = vmatpush.bf16.msra.mxu0 0
      %1687 = vmatpush.bf16.msra.mxu0 0
      %1688 = vmatpush.bf16.msra.mxu0 0
      %1689 = vmatpush.bf16.msra.mxu0 0
      %1690 = vmatpush.bf16.msra.mxu0 %v1681
      %1691 = vmatmul.bf16.gmra.mxu0 %v1651
      %v1692 = vpop.f32.mrf.mxu0
      %v1693 = vadd.f32 0.0, %v1692
      %v1694 = vpop.f32.mrf.mxu0
      %v1695 = vadd.f32 0.0, %v1694
      %1696 = vmatmul.bf16.gmra.mxu0 %v1654
      %v1697 = vpop.f32.mrf.mxu0
      %v1698 = vadd.f32 0.0, %v1697
      %v1699 = vpop.f32.mrf.mxu0
      %v1700 = vadd.f32 0.0, %v1699
      %1701 = vmatmul.bf16.gmra.mxu0 %v1657
      %v1702 = vpop.f32.mrf.mxu0
      %v1703 = vadd.f32 0.0, %v1702
      %v1704 = vpop.f32.mrf.mxu0
      %v1705 = vadd.f32 0.0, %v1704
      %1706 = vmatmul.bf16.gmra.mxu0 %v1660
      %v1707 = vpop.f32.mrf.mxu0
      %v1708 = vadd.f32 0.0, %v1707
      %v1709 = vpop.f32.mrf.mxu0
      %v1710 = vadd.f32 0.0, %v1709
      %1711 = vmatmul.bf16.gmra.mxu0 %v1663
      %v1712 = vpop.f32.mrf.mxu0
      %v1713 = vadd.f32 0.0, %v1712
      %v1714 = vpop.f32.mrf.mxu0
      %v1715 = vadd.f32 0.0, %v1714
      %1716 = vmatmul.bf16.gmra.mxu0 %v1666
      %v1717 = vpop.f32.mrf.mxu0
      %v1718 = vadd.f32 0.0, %v1717
      %v1719 = vpop.f32.mrf.mxu0
      %v1720 = vadd.f32 0.0, %v1719
      %1721 = vmatmul.bf16.gmra.mxu0 %v1669
      %v1722 = vpop.f32.mrf.mxu0
      %v1723 = vadd.f32 0.0, %v1722
      %v1724 = vpop.f32.mrf.mxu0
      %v1725 = vadd.f32 0.0, %v1724
      %1726 = vmatmul.bf16.gmra.mxu0 %v1672
      %v1727 = vpop.f32.mrf.mxu0
      %v1728 = vadd.f32 0.0, %v1727
      %v1729 = vpop.f32.mrf.mxu0
      %v1730 = vadd.f32 0.0, %v1729
      %1731 = vmatmul.bf16.gmra.mxu0 %v1675
      %v1732 = vpop.f32.mrf.mxu0
      %v1733 = vadd.f32 0.0, %v1732
      %v1734 = vpop.f32.mrf.mxu0
      %v1735 = vadd.f32 0.0, %v1734
      %1736 = vmatmul.bf16.gmra.mxu0 %v1678
      %v1737 = vpop.f32.mrf.mxu0
      %v1738 = vadd.f32 0.0, %v1737
      %v1739 = vpop.f32.mrf.mxu0
      %1740 = vdwg.mxu0
      %v1741 = vadd.f32 %v1609, %v1693
      %v1742 = vadd.f32 %v1610, %v1695
      %v1743 = vadd.f32 %v1611, %v1698
      %v1744 = vadd.f32 %v1612, %v1700
      %v1745 = vadd.f32 %v1613, %v1703
      %v1746 = vadd.f32 %v1614, %v1705
      %v1747 = vadd.f32 %v1615, %v1708
      %v1748 = vadd.f32 %v1616, %v1710
      %v1749 = vadd.f32 %v1617, %v1713
      %v1750 = vadd.f32 %v1618, %v1715
      %v1751 = vadd.f32 %v1619, %v1718
      %v1752 = vadd.f32 %v1620, %v1720
      %v1753 = vadd.f32 %v1621, %v1723
      %v1754 = vadd.f32 %v1622, %v1725
      %v1755 = vadd.f32 %v1623, %v1728
      %v1756 = vadd.f32 %v1624, %v1730
      %v1757 = vadd.f32 %v1625, %v1733
      %v1758 = vadd.f32 %v1626, %v1735
      %v1759 = vadd.f32 %v1627, %v1738
      %v1760 = vpack.c.bf16 %v1741, %v1741
      %v1761 = vpack.c.bf16 %v1742, %v1742
      %v1762 = vpack.c.bf16 %v1743, %v1743
      %v1763 = vpack.c.bf16 %v1744, %v1744
      %v1764 = vpack.c.bf16 %v1745, %v1745
      %v1765 = vpack.c.bf16 %v1746, %v1746
      %v1766 = vpack.c.bf16 %v1747, %v1747
      %v1767 = vpack.c.bf16 %v1748, %v1748
      %v1768 = vpack.c.bf16 %v1749, %v1749
      %v1769 = vpack.c.bf16 %v1750, %v1750
      %v1770 = vpack.c.bf16 %v1751, %v1751
      %v1771 = vpack.c.bf16 %v1752, %v1752
      %v1772 = vpack.c.bf16 %v1753, %v1753
      %v1773 = vpack.c.bf16 %v1754, %v1754
      %v1774 = vpack.c.bf16 %v1755, %v1755
      %v1775 = vpack.c.bf16 %v1756, %v1756
      %v1776 = vpack.c.bf16 %v1757, %v1757
      %v1777 = vpack.c.bf16 %v1758, %v1758
      %v1778 = vpack.c.bf16 %v1759, %v1759
      %1779 = vst [vmem:[%s410] sm:$0xf] %v1760
      %1780 = vst [vmem:[%s410 + $0x4] sm:$0xf] %v1761
      %1781 = vst [vmem:[%s410 + $0x8] sm:$0xf] %v1762
      %1782 = vst [vmem:[%s410 + $0xc] sm:$0xf] %v1763
      %1783 = vst [vmem:[%s410 + $0x10] sm:$0xf] %v1764
      %1784 = vst [vmem:[%s410 + $0x14] sm:$0xf] %v1765
      %1785 = vst [vmem:[%s410 + $0x18] sm:$0xf] %v1766
      %1786 = vst [vmem:[%s410 + $0x1c] sm:$0xf] %v1767
      %1787 = vst [vmem:[%s410 + $0x20] sm:$0xf] %v1768
      %1788 = vst [vmem:[%s410 + $0x24] sm:$0xf] %v1769
      %1789 = vst [vmem:[%s410 + $0x28] sm:$0xf] %v1770
      %1790 = vst [vmem:[%s410 + $0x2c] sm:$0xf] %v1771
      %1791 = vst [vmem:[%s410 + $0x30] sm:$0xf] %v1772
      %1792 = vst [vmem:[%s410 + $0x34] sm:$0xf] %v1773
      %1793 = vst [vmem:[%s410 + $0x38] sm:$0xf] %v1774
      %1794 = vst [vmem:[%s410 + $0x3c] sm:$0xf] %v1775
      %1795 = vst [vmem:[%s410 + $0x40] sm:$0xf] %v1776
      %1796 = vst [vmem:[%s410 + $0x44] sm:$0xf] %v1777
      %1797 = vst [vmem:[%s410 + $0x48] sm:$0xf] %v1778
      %v1798 = vlaneseq
      %v1799 = vshrl.u32 %v1798, 7
      %v1800 = vadd.s32 %v1799, 8
      %v1801 = vadd.s32 %v1799, 16
      %v1802 = vadd.s32 %v1799, 24
      %v1803 = vadd.s32 %v1799, 32
      %v1804 = vadd.s32 %v1799, 40
      %v1805 = vadd.s32 %v1799, 48
      %v1806 = vadd.s32 %v1799, 56
      %v1807 = vadd.s32 %v1799, 64
      %v1808 = vadd.s32 %v1799, 72
      %v1809 = vadd.s32 %v1799, 80
      %v1810 = vadd.s32 %v1799, 88
      %v1811 = vadd.s32 %v1799, 96
      %v1812 = vadd.s32 %v1799, 104
      %v1813 = vadd.s32 %v1799, 112
      %v1814 = vadd.s32 %v1799, 120
      %v1815 = vadd.s32 %v1799, 128
      %v1816 = vadd.s32 %v1799, 136
      %v1817 = vadd.s32 %v1799, 144
      %s1818 = smul.u32 %s25, 8
      %s1819 = ssub.s32 1, %s1818
      %s1820 = smul.u32 %s1819, 19
      %v1821 = vstv %s1820
      %vm1822 = vcmp.ge.s32.totalorder %v1799, %v1821
      %vm1823 = vcmp.ge.s32.totalorder %v1800, %v1821
      %vm1824 = vcmp.ge.s32.totalorder %v1801, %v1821
      %vm1825 = vcmp.ge.s32.totalorder %v1802, %v1821
      %vm1826 = vcmp.ge.s32.totalorder %v1803, %v1821
      %vm1827 = vcmp.ge.s32.totalorder %v1804, %v1821
      %vm1828 = vcmp.ge.s32.totalorder %v1805, %v1821
      %vm1829 = vcmp.ge.s32.totalorder %v1806, %v1821
      %vm1830 = vcmp.ge.s32.totalorder %v1807, %v1821
      %vm1831 = vcmp.ge.s32.totalorder %v1808, %v1821
      %vm1832 = vcmp.ge.s32.totalorder %v1809, %v1821
      %vm1833 = vcmp.ge.s32.totalorder %v1810, %v1821
      %vm1834 = vcmp.ge.s32.totalorder %v1811, %v1821
      %vm1835 = vcmp.ge.s32.totalorder %v1812, %v1821
      %vm1836 = vcmp.ge.s32.totalorder %v1813, %v1821
      %vm1837 = vcmp.ge.s32.totalorder %v1814, %v1821
      %vm1838 = vcmp.ge.s32.totalorder %v1815, %v1821
      %vm1839 = vcmp.ge.s32.totalorder %v1816, %v1821
      %vm1840 = vcmp.ge.s32.totalorder %v1817, %v1821
      %s1841 = ssub.s32 17, %s1818
      %s1842 = smul.u32 %s1841, 19
      %v1843 = vstv %s1842
      %vm1844 = vcmp.lt.s32.totalorder %v1799, %v1843
      %vm1845 = vcmp.lt.s32.totalorder %v1800, %v1843
      %vm1846 = vcmp.lt.s32.totalorder %v1801, %v1843
      %vm1847 = vcmp.lt.s32.totalorder %v1802, %v1843
      %vm1848 = vcmp.lt.s32.totalorder %v1803, %v1843
      %vm1849 = vcmp.lt.s32.totalorder %v1804, %v1843
      %vm1850 = vcmp.lt.s32.totalorder %v1805, %v1843
      %vm1851 = vcmp.lt.s32.totalorder %v1806, %v1843
      %vm1852 = vcmp.lt.s32.totalorder %v1807, %v1843
      %vm1853 = vcmp.lt.s32.totalorder %v1808, %v1843
      %vm1854 = vcmp.lt.s32.totalorder %v1809, %v1843
      %vm1855 = vcmp.lt.s32.totalorder %v1810, %v1843
      %vm1856 = vcmp.lt.s32.totalorder %v1811, %v1843
      %vm1857 = vcmp.lt.s32.totalorder %v1812, %v1843
      %vm1858 = vcmp.lt.s32.totalorder %v1813, %v1843
      %vm1859 = vcmp.lt.s32.totalorder %v1814, %v1843
      %vm1860 = vcmp.lt.s32.totalorder %v1815, %v1843
      %vm1861 = vcmp.lt.s32.totalorder %v1816, %v1843
      %vm1862 = vcmp.lt.s32.totalorder %v1817, %v1843
      %vm1863 = vmand %vm1822, %vm1844
      %vm1864 = vmand %vm1823, %vm1845
      %vm1865 = vmand %vm1824, %vm1846
      %vm1866 = vmand %vm1825, %vm1847
      %vm1867 = vmand %vm1826, %vm1848
      %vm1868 = vmand %vm1827, %vm1849
      %vm1869 = vmand %vm1828, %vm1850
      %vm1870 = vmand %vm1829, %vm1851
      %vm1871 = vmand %vm1830, %vm1852
      %vm1872 = vmand %vm1831, %vm1853
      %vm1873 = vmand %vm1832, %vm1854
      %vm1874 = vmand %vm1833, %vm1855
      %vm1875 = vmand %vm1834, %vm1856
      %vm1876 = vmand %vm1835, %vm1857
      %vm1877 = vmand %vm1836, %vm1858
      %vm1878 = vmand %vm1837, %vm1859
      %vm1879 = vmand %vm1838, %vm1860
      %vm1880 = vmand %vm1839, %vm1861
      %vm1881 = vmand %vm1840, %vm1862
      %v1882 = vld [vmem:[%s6] sm:$0xff]
      %v1883 = vld [vmem:[%s6 + $0x8] sm:$0xff]
      %v1884 = vld [vmem:[%s6 + $0x10] sm:$0xff]
      %v1885 = vld [vmem:[%s6 + $0x18] sm:$0xff]
      %v1886 = vld [vmem:[%s6 + $0x20] sm:$0xff]
      %v1887 = vld [vmem:[%s6 + $0x28] sm:$0xff]
      %v1888 = vld [vmem:[%s6 + $0x30] sm:$0xff]
      %v1889 = vld [vmem:[%s6 + $0x38] sm:$0xff]
      %v1890 = vld [vmem:[%s6 + $0x40] sm:$0xff]
      %v1891 = vld [vmem:[%s6 + $0x48] sm:$0xff]
      %v1892 = vld [vmem:[%s6 + $0x50] sm:$0xff]
      %v1893 = vld [vmem:[%s6 + $0x58] sm:$0xff]
      %v1894 = vld [vmem:[%s6 + $0x60] sm:$0xff]
      %v1895 = vld [vmem:[%s6 + $0x68] sm:$0xff]
      %v1896 = vld [vmem:[%s6 + $0x70] sm:$0xff]
      %v1897 = vld [vmem:[%s6 + $0x78] sm:$0xff]
      %v1898 = vld [vmem:[%s6 + $0x80] sm:$0xff]
      %v1899 = vld [vmem:[%s6 + $0x88] sm:$0xff]
      %v1900 = vld [vmem:[%s6 + $0x90] sm:$0xff]
      %vm1901 = vcmp.gt.s32.totalorder %v1882, 0
      %vm1902 = vcmp.gt.s32.totalorder %v1883, 0
      %vm1903 = vcmp.gt.s32.totalorder %v1884, 0
      %vm1904 = vcmp.gt.s32.totalorder %v1885, 0
      %vm1905 = vcmp.gt.s32.totalorder %v1886, 0
      %vm1906 = vcmp.gt.s32.totalorder %v1887, 0
      %vm1907 = vcmp.gt.s32.totalorder %v1888, 0
      %vm1908 = vcmp.gt.s32.totalorder %v1889, 0
      %vm1909 = vcmp.gt.s32.totalorder %v1890, 0
      %vm1910 = vcmp.gt.s32.totalorder %v1891, 0
      %vm1911 = vcmp.gt.s32.totalorder %v1892, 0
      %vm1912 = vcmp.gt.s32.totalorder %v1893, 0
      %vm1913 = vcmp.gt.s32.totalorder %v1894, 0
      %vm1914 = vcmp.gt.s32.totalorder %v1895, 0
      %vm1915 = vcmp.gt.s32.totalorder %v1896, 0
      %vm1916 = vcmp.gt.s32.totalorder %v1897, 0
      %vm1917 = vcmp.gt.s32.totalorder %v1898, 0
      %vm1918 = vcmp.gt.s32.totalorder %v1899, 0
      %vm1919 = vcmp.gt.s32.totalorder %v1900, 0
      %vm1920 = vmand %vm1863, %vm1901
      %vm1921 = vmand %vm1864, %vm1902
      %vm1922 = vmand %vm1865, %vm1903
      %vm1923 = vmand %vm1866, %vm1904
      %vm1924 = vmand %vm1867, %vm1905
      %vm1925 = vmand %vm1868, %vm1906
      %vm1926 = vmand %vm1869, %vm1907
      %vm1927 = vmand %vm1870, %vm1908
      %vm1928 = vmand %vm1871, %vm1909
      %vm1929 = vmand %vm1872, %vm1910
      %vm1930 = vmand %vm1873, %vm1911
      %vm1931 = vmand %vm1874, %vm1912
      %vm1932 = vmand %vm1875, %vm1913
      %vm1933 = vmand %vm1876, %vm1914
      %vm1934 = vmand %vm1877, %vm1915
      %vm1935 = vmand %vm1878, %vm1916
      %vm1936 = vmand %vm1879, %vm1917
      %vm1937 = vmand %vm1880, %vm1918
      %vm1938 = vmand %vm1881, %vm1919
      %v1939 = vsel %vm1920, 1, 0
      %v1940 = vsel %vm1921, 1, 0
      %v1941 = vsel %vm1922, 1, 0
      %v1942 = vsel %vm1923, 1, 0
      %v1943 = vsel %vm1924, 1, 0
      %v1944 = vsel %vm1925, 1, 0
      %v1945 = vsel %vm1926, 1, 0
      %v1946 = vsel %vm1927, 1, 0
      %v1947 = vsel %vm1928, 1, 0
      %v1948 = vsel %vm1929, 1, 0
      %v1949 = vsel %vm1930, 1, 0
      %v1950 = vsel %vm1931, 1, 0
      %v1951 = vsel %vm1932, 1, 0
      %v1952 = vsel %vm1933, 1, 0
      %v1953 = vsel %vm1934, 1, 0
      %v1954 = vsel %vm1935, 1, 0
      %v1955 = vsel %vm1936, 1, 0
      %v1956 = vsel %vm1937, 1, 0
      %v1957 = vsel %vm1938, 1, 0
      %1958 = vset.pattern.permute.xlu0 0
      %1959 = vperm.xlu0 %1958, %v1939
      %v1960 = vpop.permute.xlu0 %1959
      %1961 = vset.pattern.permute.xlu0 0
      %1962 = vperm.xlu0 %1961, %v1940
      %v1963 = vpop.permute.xlu0 %1962
      %1964 = vset.pattern.permute.xlu0 0
      %1965 = vperm.xlu0 %1964, %v1941
      %v1966 = vpop.permute.xlu0 %1965
      %1967 = vset.pattern.permute.xlu0 0
      %1968 = vperm.xlu0 %1967, %v1942
      %v1969 = vpop.permute.xlu0 %1968
      %1970 = vset.pattern.permute.xlu0 0
      %1971 = vperm.xlu0 %1970, %v1943
      %v1972 = vpop.permute.xlu0 %1971
      %1973 = vset.pattern.permute.xlu0 0
      %1974 = vperm.xlu0 %1973, %v1944
      %v1975 = vpop.permute.xlu0 %1974
      %1976 = vset.pattern.permute.xlu0 0
      %1977 = vperm.xlu0 %1976, %v1945
      %v1978 = vpop.permute.xlu0 %1977
      %1979 = vset.pattern.permute.xlu0 0
      %1980 = vperm.xlu0 %1979, %v1946
      %v1981 = vpop.permute.xlu0 %1980
      %1982 = vset.pattern.permute.xlu0 0
      %1983 = vperm.xlu0 %1982, %v1947
      %v1984 = vpop.permute.xlu0 %1983
      %1985 = vset.pattern.permute.xlu0 0
      %1986 = vperm.xlu0 %1985, %v1948
      %v1987 = vpop.permute.xlu0 %1986
      %1988 = vset.pattern.permute.xlu0 0
      %1989 = vperm.xlu0 %1988, %v1949
      %v1990 = vpop.permute.xlu0 %1989
      %1991 = vset.pattern.permute.xlu0 0
      %1992 = vperm.xlu0 %1991, %v1950
      %v1993 = vpop.permute.xlu0 %1992
      %1994 = vset.pattern.permute.xlu0 0
      %1995 = vperm.xlu0 %1994, %v1951
      %v1996 = vpop.permute.xlu0 %1995
      %1997 = vset.pattern.permute.xlu0 0
      %1998 = vperm.xlu0 %1997, %v1952
      %v1999 = vpop.permute.xlu0 %1998
      %2000 = vset.pattern.permute.xlu0 0
      %2001 = vperm.xlu0 %2000, %v1953
      %v2002 = vpop.permute.xlu0 %2001
      %2003 = vset.pattern.permute.xlu0 0
      %2004 = vperm.xlu0 %2003, %v1954
      %v2005 = vpop.permute.xlu0 %2004
      %2006 = vset.pattern.permute.xlu0 0
      %2007 = vperm.xlu0 %2006, %v1955
      %v2008 = vpop.permute.xlu0 %2007
      %2009 = vset.pattern.permute.xlu0 0
      %2010 = vperm.xlu0 %2009, %v1956
      %v2011 = vpop.permute.xlu0 %2010
      %2012 = vset.pattern.permute.xlu0 0
      %2013 = vperm.xlu0 %2012, %v1957
      %v2014 = vpop.permute.xlu0 %2013
      %vm2015 = vcmp.eq.s32.totalorder %v1960, 1
      %vm2016 = vcmp.eq.s32.totalorder %v1963, 1
      %vm2017 = vcmp.eq.s32.totalorder %v1966, 1
      %vm2018 = vcmp.eq.s32.totalorder %v1969, 1
      %vm2019 = vcmp.eq.s32.totalorder %v1972, 1
      %vm2020 = vcmp.eq.s32.totalorder %v1975, 1
      %vm2021 = vcmp.eq.s32.totalorder %v1978, 1
      %vm2022 = vcmp.eq.s32.totalorder %v1981, 1
      %vm2023 = vcmp.eq.s32.totalorder %v1984, 1
      %vm2024 = vcmp.eq.s32.totalorder %v1987, 1
      %vm2025 = vcmp.eq.s32.totalorder %v1990, 1
      %vm2026 = vcmp.eq.s32.totalorder %v1993, 1
      %vm2027 = vcmp.eq.s32.totalorder %v1996, 1
      %vm2028 = vcmp.eq.s32.totalorder %v1999, 1
      %vm2029 = vcmp.eq.s32.totalorder %v2002, 1
      %vm2030 = vcmp.eq.s32.totalorder %v2005, 1
      %vm2031 = vcmp.eq.s32.totalorder %v2008, 1
      %vm2032 = vcmp.eq.s32.totalorder %v2011, 1
      %vm2033 = vcmp.eq.s32.totalorder %v2014, 1
      %v2034 = vsel %vm2015, %v1741, 0.0
      %v2035 = vsel %vm2016, %v1742, 0.0
      %v2036 = vsel %vm2017, %v1743, 0.0
      %v2037 = vsel %vm2018, %v1744, 0.0
      %v2038 = vsel %vm2019, %v1745, 0.0
      %v2039 = vsel %vm2020, %v1746, 0.0
      %v2040 = vsel %vm2021, %v1747, 0.0
      %v2041 = vsel %vm2022, %v1748, 0.0
      %v2042 = vsel %vm2023, %v1749, 0.0
      %v2043 = vsel %vm2024, %v1750, 0.0
      %v2044 = vsel %vm2025, %v1751, 0.0
      %v2045 = vsel %vm2026, %v1752, 0.0
      %v2046 = vsel %vm2027, %v1753, 0.0
      %v2047 = vsel %vm2028, %v1754, 0.0
      %v2048 = vsel %vm2029, %v1755, 0.0
      %v2049 = vsel %vm2030, %v1756, 0.0
      %v2050 = vsel %vm2031, %v1757, 0.0
      %v2051 = vsel %vm2032, %v1758, 0.0
      %v2052 = vsel %vm2033, %v1759, 0.0
      %v2053 = vadd.f32 %v2034, %v2035
      %v2054 = vadd.f32 %v2053, %v2036
      %v2055 = vadd.f32 %v2054, %v2037
      %v2056 = vadd.f32 %v2055, %v2038
      %v2057 = vadd.f32 %v2056, %v2039
      %v2058 = vadd.f32 %v2057, %v2040
      %v2059 = vadd.f32 %v2058, %v2041
      %v2060 = vadd.f32 %v2059, %v2042
      %v2061 = vadd.f32 %v2060, %v2043
      %v2062 = vadd.f32 %v2061, %v2044
      %v2063 = vadd.f32 %v2062, %v2045
      %v2064 = vadd.f32 %v2063, %v2046
      %v2065 = vadd.f32 %v2064, %v2047
      %v2066 = vadd.f32 %v2065, %v2048
      %v2067 = vadd.f32 %v2066, %v2049
      %v2068 = vadd.f32 %v2067, %v2050
      %v2069 = vadd.f32 %v2068, %v2051
      %v2070 = vadd.f32 %v2069, %v2052
      %v2071 = vrot.slane %v2070, 4
      %v2072 = vadd.f32 %v2070, %v2071
      %v2073 = vrot.slane %v2072, 2
      %v2074 = vadd.f32 %v2072, %v2073
      %v2075 = vrot.slane %v2074, 1
      %v2076 = vadd.f32 %v2074, %v2075
      %2077 = vst [vmem:[%s419] sm:$0x1] %v2076
      %v2078 = vmul.f32 %v2034, %v2034
      %v2079 = vmul.f32 %v2035, %v2035
      %v2080 = vmul.f32 %v2036, %v2036
      %v2081 = vmul.f32 %v2037, %v2037
      %v2082 = vmul.f32 %v2038, %v2038
      %v2083 = vmul.f32 %v2039, %v2039
      %v2084 = vmul.f32 %v2040, %v2040
      %v2085 = vmul.f32 %v2041, %v2041
      %v2086 = vmul.f32 %v2042, %v2042
      %v2087 = vmul.f32 %v2043, %v2043
      %v2088 = vmul.f32 %v2044, %v2044
      %v2089 = vmul.f32 %v2045, %v2045
      %v2090 = vmul.f32 %v2046, %v2046
      %v2091 = vmul.f32 %v2047, %v2047
      %v2092 = vmul.f32 %v2048, %v2048
      %v2093 = vmul.f32 %v2049, %v2049
      %v2094 = vmul.f32 %v2050, %v2050
      %v2095 = vmul.f32 %v2051, %v2051
      %v2096 = vmul.f32 %v2052, %v2052
      %v2097 = vadd.f32 %v2078, %v2079
      %v2098 = vadd.f32 %v2097, %v2080
      %v2099 = vadd.f32 %v2098, %v2081
      %v2100 = vadd.f32 %v2099, %v2082
      %v2101 = vadd.f32 %v2100, %v2083
      %v2102 = vadd.f32 %v2101, %v2084
      %v2103 = vadd.f32 %v2102, %v2085
      %v2104 = vadd.f32 %v2103, %v2086
      %v2105 = vadd.f32 %v2104, %v2087
      %v2106 = vadd.f32 %v2105, %v2088
      %v2107 = vadd.f32 %v2106, %v2089
      %v2108 = vadd.f32 %v2107, %v2090
      %v2109 = vadd.f32 %v2108, %v2091
      %v2110 = vadd.f32 %v2109, %v2092
      %v2111 = vadd.f32 %v2110, %v2093
      %v2112 = vadd.f32 %v2111, %v2094
      %v2113 = vadd.f32 %v2112, %v2095
      %v2114 = vadd.f32 %v2113, %v2096
      %v2115 = vrot.slane %v2114, 4
      %v2116 = vadd.f32 %v2114, %v2115
      %v2117 = vrot.slane %v2116, 2
      %v2118 = vadd.f32 %v2116, %v2117
      %v2119 = vrot.slane %v2118, 1
      %v2120 = vadd.f32 %v2118, %v2119
      %2121 = vst [vmem:[%s419 + $0x1] sm:$0x1] %v2120
      %s2122 = smul.u32 19, %s25
      %p2123 = scmp.lt.s32.totalorder %s24, 1
      %s2124 = scalar_select %p2123, %s24, 1
      %p2125 = scmp.lt.s32.totalorder %s2122, 56
      %s2126 = scalar_select %p2125, %s2122, 56
      %s2127 = smul.addr %s2124, 57
      %s2128 = sadd.s32 %s2126, %s2127
      %s2129 = smul.addr %s2128, 4
      %s2130 = scalar_lea.vmem %s7, %s2129
      %p2131 = scmp.lt.s32.totalorder %s24, 1
      %s2132 = scalar_select %p2131, %s24, 1
      %p2133 = scmp.lt.s32.totalorder %s25, 2
      %s2134 = scalar_select %p2133, %s25, 2
      %s2135 = smul.addr %s2132, 3
      %s2136 = sadd.s32 %s2134, %s2135
      %s2137 = smul.addr %s2136, 8
      %s2138 = scalar_lea.vmem %s8, %s2137
      // Predicated region
      $region49: #{conv_block_forward.2} parent=47 // pred_check
        %p2139 = pneg %p213
      $region50: #{conv_block_forward.2} parent=47 // pred_check_branch
        %2141 = sbr.rel (%p2139) target = $region52
      $region51: #{conv_block_forward.2} parent=47 // pred_region
        %s2142 = smul.u32 19, %s25
      $region52: #{conv_block_forward.2} parent=47 // pred_fallthru
        _
      // Predicated region
      $region53: #{conv_block_forward.2} parent=47 // pred_check
        %p2143 = pneg %p241
      $region54: #{conv_block_forward.2} parent=47 // pred_check_branch
        %2145 = sbr.rel (%p2143) target = $region56
      $region55: #{conv_block_forward.2} parent=47 // pred_region
        _
      $region56: #{conv_block_forward.2} parent=47 // pred_fallthru
        _
    $region48: #{conv_block_forward.2} parent=5 // pred_fallthru
      _
    %p2146 = scmp.le.s32.totalorder 2, %s15
    // Predicated region
    $region57: #{conv_block_forward.2} parent=5 // pred_check
      %p2147 = pneg %p2146
    $region58: #{conv_block_forward.2} parent=5 // pred_check_branch
      %2149 = sbr.rel (%p2147) target = $region60
    $region59: #{conv_block_forward.2} parent=5 // pred_region
      %s2150 = ssub.s32 %s15, 2
      // Predicated region
      $region61: #{conv_block_forward.2} parent=59 // pred_check
        %p2151 = pneg %p219
      $region62: #{conv_block_forward.2} parent=59 // pred_check_branch
        %2153 = sbr.rel (%p2151) target = $region64
      $region63: #{conv_block_forward.2} parent=59 // pred_region
        %s2154 = smul.u32 19, %s27
        %p2155 = scmp.lt.s32.totalorder %s26, 1
        %s2156 = scalar_select %p2155, %s26, 1
        %p2157 = scmp.lt.s32.totalorder %s2154, 56
        %s2158 = scalar_select %p2157, %s2154, 56
        %s2159 = smul.addr %s2156, 57
        %s2160 = sadd.s32 %s2158, %s2159
        %s2161 = smul.addr %s2160, 4
        %s2162 = scalar_lea.vmem %s7, %s2161
      $region64: #{conv_block_forward.2} parent=59 // pred_fallthru
        _
      // Predicated region
      $region65: #{conv_block_forward.2} parent=59 // pred_check
        %p2163 = pneg %p247
      $region66: #{conv_block_forward.2} parent=59 // pred_check_branch
        %2165 = sbr.rel (%p2163) target = $region68
      $region67: #{conv_block_forward.2} parent=59 // pred_region
        %p2166 = scmp.lt.s32.totalorder %s26, 1
        %s2167 = scalar_select %p2166, %s26, 1
        %p2168 = scmp.lt.s32.totalorder %s27, 2
        %s2169 = scalar_select %p2168, %s27, 2
        %s2170 = smul.addr %s2167, 3
        %s2171 = sadd.s32 %s2169, %s2170
        %s2172 = smul.addr %s2171, 8
        %s2173 = scalar_lea.vmem %s8, %s2172
      $region68: #{conv_block_forward.2} parent=59 // pred_fallthru
        _
    $region60: #{conv_block_forward.2} parent=5 // pred_fallthru
      _
  $region6: #{conv_block_forward.2} parent=0 // loop_footer
    %s19 = sadd.s32 1, %s15
  $region7: #{conv_block_forward.2} parent=0 // loop_footer_branch
    %14 = sbr.rel target = $region3
  $region8: #{conv_block_forward.2} parent=0 // loop_exit
    _

// kernel: conv_block_forward.3
$region0: #{conv_block_forward.3}
  #allocation0 [shape = 'u32[]', space=smem, size = 0x4, offset = 0x4, fixed_abs, tag = 'smem constant byte address 0x4 - core index']
  #allocation1 [shape = 'u32[72,128]{1,0:T(1,128)}', space=vmem, size = 0x9000, scoped, tag = 'internal scratch']
  %s0 = inlined_call_operand.vmem [shape: bf16[2,456,128], index: 0, kind: input, shape index: {}]
  %s1 = inlined_call_operand.vmem [shape: bf16[2,3,57,128], index: 1, kind: input, shape index: {}]
  %s2 = inlined_call_operand.vmem [shape: bf16[9,128,128], index: 2, kind: input, shape index: {}]
  %s3 = inlined_call_operand.vmem [shape: f32[1,128], index: 3, kind: input, shape index: {}]
  %s4 = inlined_call_operand.vmem [shape: f32[1,128], index: 4, kind: input, shape index: {}]
  %s5 = inlined_call_operand.vmem [shape: s32[209,1], index: 5, kind: input, shape index: {}]
  %s6 = inlined_call_operand.vmem [shape: s32[152,1], index: 6, kind: input, shape index: {}]
  %s7 = inlined_call_operand.vmem [shape: f32[2,456,128], index: 7, kind: output, shape index: {0}]
  %s8 = inlined_call_operand.vmem [shape: f32[2,3,8,128], index: 8, kind: output, shape index: {1}]
  %9 = xla_tuple %s7, %s8
  %s10 = sld [smem:[#allocation0]]
  $region69: #{conv_block_forward.3} parent=0
    _
  %s12 = ssub.s32 1, %s10
  %s13 = scalar_select 0, %s12, %s10
  loop: start=0, step=1, limit=8
  $region2: #{conv_block_forward.3} parent=0 // loop_pre_header
    _
  $region3: #{conv_block_forward.3} parent=0 // loop_header
    %s15 = sphi 0, %s19
    %p16 = scmp.ge.s32.totalorder %s15, 8
    %s22 = sphi 0, %s34
    %s23 = sphi 0, %s30
    %s24 = sphi 0, %s22
    %s25 = sphi 0, %s23
    %s26 = sphi 0, %s24
    %s27 = sphi 0, %s25
    %s39 = sphi 0, %s41
    %s42 = sphi 0, %s39
    %s43 = sphi 0, %s42
    %s59 = sphi 0, %s43
    %s67 = sphi 0, %s69
    %s70 = sphi 0, %s67
    %s71 = sphi 0, %s70
    %s87 = sphi 0, %s71
    %s91 = sphi 0, %s91
    %s93 = sphi 0, %s91
    %s94 = sphi 0, %s93
    %s108 = sphi 0, %s94
    %s112 = sphi 0, %s112
    %s114 = sphi 0, %s112
    %s115 = sphi 0, %s114
    %s129 = sphi 0, %s115
    %s133 = sphi 0, %s133
    %s135 = sphi 0, %s133
    %s136 = sphi 0, %s135
    %s150 = sphi 0, %s136
    %s154 = sphi 0, %s154
    %s156 = sphi 0, %s154
    %s157 = sphi 0, %s156
    %s171 = sphi 0, %s157
    %s175 = sphi 0, %s175
    %s177 = sphi 0, %s175
    %s178 = sphi 0, %s177
    %s192 = sphi 0, %s178
    %s200 = sphi 0, %s202
    %s203 = sphi 0, %s200
    %s204 = sphi 0, %s203
    %s220 = sphi 0, %s204
    %s228 = sphi 0, %s230
    %s231 = sphi 0, %s228
    %s232 = sphi 0, %s231
    %s248 = sphi 0, %s232
  $region4: #{conv_block_forward.3} parent=0 // loop_header_branch
    %18 = sbr.rel (%p16) target = $region8
  $region5: #{conv_block_forward.3} parent=0 // loop_body
    %s20 = ssub.s32 %s15, 1
    %s21 = ssub.s32 %s15, 2
    %s28 = sadd.s32 1, %s23
    %p29 = scmp.ge.s32.totalorder %s28, 3
    %s30 = scalar_select %p29, 0, %s28
    %s31 = sadd.s32 1, %s22
    %s32 = scalar_select %p29, %s31, %s22
    %p33 = scmp.ge.s32.totalorder %s32, 2
    %s34 = scalar_select %p33, 0, %s32
    %s35 = ssub.s32 %s22, %s34
    %s36 = ssub.s32 %s23, %s30
    %s37 = sor.u32 %s35, %s36
    %p38 = scmp.eq.s32.totalorder %s37, 0
    %s40 = sadd.s32 %s39, 1
    %s41 = scalar_select %p38, %s39, %s40
    %p44 = pneg %p38
    %p45 = scmp.eq.s32.totalorder %s15, 5
    %p46 = por %p44, %p45
    %p47 = scmp.ne.s32.totalorder %s39, %s42
    %p48 = scmp.eq.s32.totalorder %s15, 0
    %p49 = por %p47, %p48
    %p50 = scmp.ne.s32.totalorder %s39, %s42
    %p51 = scmp.eq.s32.totalorder %s20, 5
    %p52 = por %p50, %p51
    %p53 = scmp.ne.s32.totalorder %s42, %s43
    %p54 = scmp.eq.s32.totalorder %s20, 0
    %p55 = por %p53, %p54
    %p56 = scmp.ne.s32.totalorder %s42, %s43
    %p57 = scmp.eq.s32.totalorder %s21, 5
    %p58 = por %p56, %p57
    %p60 = scmp.ne.s32.totalorder %s43, %s59
    %p61 = scmp.eq.s32.totalorder %s21, 0
    %p62 = por %p60, %p61
    %s63 = ssub.s32 %s22, %s34
    %s64 = ssub.s32 %s23, %s30
    %s65 = sor.u32 %s63, %s64
    %p66 = scmp.eq.s32.totalorder %s65, 0
    %s68 = sadd.s32 %s67, 1
    %s69 = scalar_select %p66, %s67, %s68
    %p72 = pneg %p66
    %p73 = scmp.eq.s32.totalorder %s15, 5
    %p74 = por %p72, %p73
    %p75 = scmp.ne.s32.totalorder %s67, %s70
    %p76 = scmp.eq.s32.totalorder %s15, 0
    %p77 = por %p75, %p76
    %p78 = scmp.ne.s32.totalorder %s67, %s70
    %p79 = scmp.eq.s32.totalorder %s20, 5
    %p80 = por %p78, %p79
    %p81 = scmp.ne.s32.totalorder %s70, %s71
    %p82 = scmp.eq.s32.totalorder %s20, 0
    %p83 = por %p81, %p82
    %p84 = scmp.ne.s32.totalorder %s70, %s71
    %p85 = scmp.eq.s32.totalorder %s21, 5
    %p86 = por %p84, %p85
    %p88 = scmp.ne.s32.totalorder %s71, %s87
    %p89 = scmp.eq.s32.totalorder %s21, 0
    %p90 = por %p88, %p89
    %s92 = sadd.s32 %s91, 1
    %p95 = scmp.eq.s32.totalorder %s15, 5
    %p96 = scmp.ne.s32.totalorder %s91, %s93
    %p97 = scmp.eq.s32.totalorder %s15, 0
    %p98 = por %p96, %p97
    %p99 = scmp.ne.s32.totalorder %s91, %s93
    %p100 = scmp.eq.s32.totalorder %s20, 5
    %p101 = por %p99, %p100
    %p102 = scmp.ne.s32.totalorder %s93, %s94
    %p103 = scmp.eq.s32.totalorder %s20, 0
    %p104 = por %p102, %p103
    %p105 = scmp.ne.s32.totalorder %s93, %s94
    %p106 = scmp.eq.s32.totalorder %s21, 5
    %p107 = por %p105, %p106
    %p109 = scmp.ne.s32.totalorder %s94, %s108
    %p110 = scmp.eq.s32.totalorder %s21, 0
    %p111 = por %p109, %p110
    %s113 = sadd.s32 %s112, 1
    %p116 = scmp.eq.s32.totalorder %s15, 5
    %p117 = scmp.ne.s32.totalorder %s112, %s114
    %p118 = scmp.eq.s32.totalorder %s15, 0
    %p119 = por %p117, %p118
    %p120 = scmp.ne.s32.totalorder %s112, %s114
    %p121 = scmp.eq.s32.totalorder %s20, 5
    %p122 = por %p120, %p121
    %p123 = scmp.ne.s32.totalorder %s114, %s115
    %p124 = scmp.eq.s32.totalorder %s20, 0
    %p125 = por %p123, %p124
    %p126 = scmp.ne.s32.totalorder %s114, %s115
    %p127 = scmp.eq.s32.totalorder %s21, 5
    %p128 = por %p126, %p127
    %p130 = scmp.ne.s32.totalorder %s115, %s129
    %p131 = scmp.eq.s32.totalorder %s21, 0
    %p132 = por %p130, %p131
    %s134 = sadd.s32 %s133, 1
    %p137 = scmp.eq.s32.totalorder %s15, 5
    %p138 = scmp.ne.s32.totalorder %s133, %s135
    %p139 = scmp.eq.s32.totalorder %s15, 0
    %p140 = por %p138, %p139
    %p141 = scmp.ne.s32.totalorder %s133, %s135
    %p142 = scmp.eq.s32.totalorder %s20, 5
    %p143 = por %p141, %p142
    %p144 = scmp.ne.s32.totalorder %s135, %s136
    %p145 = scmp.eq.s32.totalorder %s20, 0
    %p146 = por %p144, %p145
    %p147 = scmp.ne.s32.totalorder %s135, %s136
    %p148 = scmp.eq.s32.totalorder %s21, 5
    %p149 = por %p147, %p148
    %p151 = scmp.ne.s32.totalorder %s136, %s150
    %p152 = scmp.eq.s32.totalorder %s21, 0
    %p153 = por %p151, %p152
    %s155 = sadd.s32 %s154, 1
    %p158 = scmp.eq.s32.totalorder %s15, 5
    %p159 = scmp.ne.s32.totalorder %s154, %s156
    %p160 = scmp.eq.s32.totalorder %s15, 0
    %p161 = por %p159, %p160
    %p162 = scmp.ne.s32.totalorder %s154, %s156
    %p163 = scmp.eq.s32.totalorder %s20, 5
    %p164 = por %p162, %p163
    %p165 = scmp.ne.s32.totalorder %s156, %s157
    %p166 = scmp.eq.s32.totalorder %s20, 0
    %p167 = por %p165, %p166
    %p168 = scmp.ne.s32.totalorder %s156, %s157
    %p169 = scmp.eq.s32.totalorder %s21, 5
    %p170 = por %p168, %p169
    %p172 = scmp.ne.s32.totalorder %s157, %s171
    %p173 = scmp.eq.s32.totalorder %s21, 0
    %p174 = por %p172, %p173
    %s176 = sadd.s32 %s175, 1
    %p179 = scmp.eq.s32.totalorder %s15, 5
    %p180 = scmp.ne.s32.totalorder %s175, %s177
    %p181 = scmp.eq.s32.totalorder %s15, 0
    %p182 = por %p180, %p181
    %p183 = scmp.ne.s32.totalorder %s175, %s177
    %p184 = scmp.eq.s32.totalorder %s20, 5
    %p185 = por %p183, %p184
    %p186 = scmp.ne.s32.totalorder %s177, %s178
    %p187 = scmp.eq.s32.totalorder %s20, 0
    %p188 = por %p186, %p187
    %p189 = scmp.ne.s32.totalorder %s177, %s178
    %p190 = scmp.eq.s32.totalorder %s21, 5
    %p191 = por %p189, %p190
    %p193 = scmp.ne.s32.totalorder %s178, %s192
    %p194 = scmp.eq.s32.totalorder %s21, 0
    %p195 = por %p193, %p194
    %s196 = ssub.s32 %s22, %s34
    %s197 = ssub.s32 %s23, %s30
    %s198 = sor.u32 %s196, %s197
    %p199 = scmp.eq.s32.totalorder %s198, 0
    %s201 = sadd.s32 %s200, 1
    %s202 = scalar_select %p199, %s200, %s201
    %p205 = pneg %p199
    %p206 = scmp.eq.s32.totalorder %s15, 5
    %p207 = por %p205, %p206
    %p208 = scmp.ne.s32.totalorder %s200, %s203
    %p209 = scmp.eq.s32.totalorder %s15, 0
    %p210 = por %p208, %p209
    %p211 = scmp.ne.s32.totalorder %s200, %s203
    %p212 = scmp.eq.s32.totalorder %s20, 5
    %p213 = por %p211, %p212
    %p214 = scmp.ne.s32.totalorder %s203, %s204
    %p215 = scmp.eq.s32.totalorder %s20, 0
    %p216 = por %p214, %p215
    %p217 = scmp.ne.s32.totalorder %s203, %s204
    %p218 = scmp.eq.s32.totalorder %s21, 5
    %p219 = por %p217, %p218
    %p221 = scmp.ne.s32.totalorder %s204, %s220
    %p222 = scmp.eq.s32.totalorder %s21, 0
    %p223 = por %p221, %p222
    %s224 = ssub.s32 %s22, %s34
    %s225 = ssub.s32 %s23, %s30
    %s226 = sor.u32 %s224, %s225
    %p227 = scmp.eq.s32.totalorder %s226, 0
    %s229 = sadd.s32 %s228, 1
    %s230 = scalar_select %p227, %s228, %s229
    %p233 = pneg %p227
    %p234 = scmp.eq.s32.totalorder %s15, 5
    %p235 = por %p233, %p234
    %p236 = scmp.ne.s32.totalorder %s228, %s231
    %p237 = scmp.eq.s32.totalorder %s15, 0
    %p238 = por %p236, %p237
    %p239 = scmp.ne.s32.totalorder %s228, %s231
    %p240 = scmp.eq.s32.totalorder %s20, 5
    %p241 = por %p239, %p240
    %p242 = scmp.ne.s32.totalorder %s231, %s232
    %p243 = scmp.eq.s32.totalorder %s20, 0
    %p244 = por %p242, %p243
    %p245 = scmp.ne.s32.totalorder %s231, %s232
    %p246 = scmp.eq.s32.totalorder %s21, 5
    %p247 = por %p245, %p246
    %p249 = scmp.ne.s32.totalorder %s232, %s248
    %p250 = scmp.eq.s32.totalorder %s21, 0
    %p251 = por %p249, %p250
    %p252 = scmp.le.s32.totalorder 1, %s15
    %p253 = scmp.lt.s32.totalorder %s15, 7
    %p254 = pnand %p252, %p253
    %p255 = pneg %p254
    // Predicated region
    $region9: #{conv_block_forward.3} parent=5 // pred_check
      _
    $region10: #{conv_block_forward.3} parent=5 // pred_check_branch
      %257 = sbr.rel (%p254) target = $region12
    $region11: #{conv_block_forward.3} parent=5 // pred_region
      %s258 = ssub.s32 %s15, 1
      // Predicated region
      $region13: #{conv_block_forward.3} parent=11 // pred_check
        %p259 = pneg %p104
      $region14: #{conv_block_forward.3} parent=11 // pred_check_branch
        %261 = sbr.rel (%p259) target = $region16
      $region15: #{conv_block_forward.3} parent=11 // pred_region
        _
      $region16: #{conv_block_forward.3} parent=11 // pred_fallthru
        _
      // Predicated region
      $region17: #{conv_block_forward.3} parent=11 // pred_check
        %p262 = pneg %p125
      $region18: #{conv_block_forward.3} parent=11 // pred_check_branch
        %264 = sbr.rel (%p262) target = $region20
      $region19: #{conv_block_forward.3} parent=11 // pred_region
        _
      $region20: #{conv_block_forward.3} parent=11 // pred_fallthru
        _
      // Predicated region
      $region21: #{conv_block_forward.3} parent=11 // pred_check
        %p265 = pneg %p146
      $region22: #{conv_block_forward.3} parent=11 // pred_check_branch
        %267 = sbr.rel (%p265) target = $region24
      $region23: #{conv_block_forward.3} parent=11 // pred_region
        _
      $region24: #{conv_block_forward.3} parent=11 // pred_fallthru
        _
      // Predicated region
      $region25: #{conv_block_forward.3} parent=11 // pred_check
        %p268 = pneg %p167
      $region26: #{conv_block_forward.3} parent=11 // pred_check_branch
        %270 = sbr.rel (%p268) target = $region28
      $region27: #{conv_block_forward.3} parent=11 // pred_region
        _
      $region28: #{conv_block_forward.3} parent=11 // pred_fallthru
        _
      // Predicated region
      $region29: #{conv_block_forward.3} parent=11 // pred_check
        %p271 = pneg %p188
      $region30: #{conv_block_forward.3} parent=11 // pred_check_branch
        %273 = sbr.rel (%p271) target = $region32
      $region31: #{conv_block_forward.3} parent=11 // pred_region
        _
      $region32: #{conv_block_forward.3} parent=11 // pred_fallthru
        _
    $region12: #{conv_block_forward.3} parent=5 // pred_fallthru
      _
    %p274 = scmp.lt.s32.totalorder %s15, 6
    // Predicated region
    $region33: #{conv_block_forward.3} parent=5 // pred_check
      %p275 = pneg %p274
    $region34: #{conv_block_forward.3} parent=5 // pred_check_branch
      %277 = sbr.rel (%p275) target = $region36
    $region35: #{conv_block_forward.3} parent=5 // pred_region
      // Predicated region
      $region37: #{conv_block_forward.3} parent=35 // pred_check
        %p278 = pneg %p49
      $region38: #{conv_block_forward.3} parent=35 // pred_check_branch
        %280 = sbr.rel (%p278) target = $region40
      $region39: #{conv_block_forward.3} parent=35 // pred_region
        %s281 = smul.u32 19, %s23
        %p282 = scmp.lt.s32.totalorder %s22, 1
        %s283 = scalar_select %p282, %s22, 1
        %p284 = scmp.lt.s32.totalorder %s281, 56
        %s285 = scalar_select %p284, %s281, 56
        %s286 = smul.addr %s283, 57
        %s287 = sadd.s32 %s285, %s286
        %s288 = smul.addr %s287, 4
        %s289 = scalar_lea.vmem %s0, %s288
        %s290 = smul.u32 19, %s23
      $region40: #{conv_block_forward.3} parent=35 // pred_fallthru
        _
      // Predicated region
      $region41: #{conv_block_forward.3} parent=35 // pred_check
        %p291 = pneg %p77
      $region42: #{conv_block_forward.3} parent=35 // pred_check_branch
        %293 = sbr.rel (%p291) target = $region44
      $region43: #{conv_block_forward.3} parent=35 // pred_region
        %p294 = scmp.lt.s32.totalorder %s22, 1
        %s295 = scalar_select %p294, %s22, 1
        %p296 = scmp.lt.s32.totalorder %s23, 2
        %s297 = scalar_select %p296, %s23, 2
        %s298 = smul.addr %s297, 8
        %s299 = smul.addr %s295, 24
        %s300 = sadd.s32 %s298, %s299
        %s301 = smul.addr %s300, 4
        %s302 = scalar_lea.vmem %s1, %s301
      $region44: #{conv_block_forward.3} parent=35 // pred_fallthru
        _
    $region36: #{conv_block_forward.3} parent=5 // pred_fallthru
      _
    %p303 = scmp.le.s32.totalorder 1, %s15
    %p304 = scmp.lt.s32.totalorder %s15, 7
    %p305 = pnand %p303, %p304
    %p306 = pneg %p305
    // Predicated region
    $region45: #{conv_block_forward.3} parent=5 // pred_check
      _
    $region46: #{conv_block_forward.3} parent=5 // pred_check_branch
      %308 = sbr.rel (%p305) target = $region48
    $region47: #{conv_block_forward.3} parent=5 // pred_region
      %s309 = ssub.s32 %s15, 1
      %s310 = smul.u32 19, %s25
      %p311 = scmp.lt.s32.totalorder %s24, 1
      %s312 = scalar_select %p311, %s24, 1
      %p313 = scmp.lt.s32.totalorder %s310, 56
      %s314 = scalar_select %p313, %s310, 56
      %s315 = smul.addr %s312, 57
      %s316 = sadd.s32 %s314, %s315
      %s317 = smul.addr %s316, 4
      %s318 = scalar_lea.vmem %s0, %s317
      %p319 = pneg %p55
      %p320 = pneg %p52
      %p321 = scmp.lt.s32.totalorder %s24, 1
      %s322 = scalar_select %p321, %s24, 1
      %p323 = scmp.lt.s32.totalorder %s25, 2
      %s324 = scalar_select %p323, %s25, 2
      %s325 = smul.addr %s324, 8
      %s326 = smul.addr %s322, 24
      %s327 = sadd.s32 %s325, %s326
      %s328 = smul.addr %s327, 4
      %s329 = scalar_lea.vmem %s1, %s328
      %p330 = pneg %p83
      %p331 = pneg %p80
      %p332 = pneg %p104
      %p333 = pneg %p101
      %p334 = pneg %p125
      %p335 = pneg %p122
      %p336 = pneg %p146
      %p337 = pneg %p143
      %p338 = pneg %p167
      %p339 = pneg %p164
      %p340 = pneg %p188
      %p341 = pneg %p185
      %p342 = pneg %p216
      %p343 = pneg %p213
      %s344 = smul.u32 19, %s25
      %p345 = scmp.lt.s32.totalorder %s24, 1
      %s346 = scalar_select %p345, %s24, 1
      %p347 = scmp.lt.s32.totalorder %s344, 56
      %s348 = scalar_select %p347, %s344, 56
      %s349 = smul.addr %s346, 57
      %s350 = sadd.s32 %s348, %s349
      %s351 = smul.addr %s350, 8
      %s352 = scalar_lea.vmem %s7, %s351
      %p353 = pneg %p244
      %p354 = pneg %p241
      %p355 = scmp.lt.s32.totalorder %s24, 1
      %s356 = scalar_select %p355, %s24, 1
      %p357 = scmp.lt.s32.totalorder %s25, 2
      %s358 = scalar_select %p357, %s25, 2
      %s359 = smul.addr %s356, 3
      %s360 = sadd.s32 %s358, %s359
      %s361 = smul.addr %s360, 8
      %s362 = scalar_lea.vmem %s8, %s361
      %s363 = smul.u32 19, %s25
      %p364 = scmp.lt.s32.totalorder %s24, 1
      %s365 = scalar_select %p364, %s24, 1
      %p366 = scmp.lt.s32.totalorder %s363, 56
      %s367 = scalar_select %p366, %s363, 56
      %s368 = smul.addr %s365, 57
      %s369 = sadd.s32 %s367, %s368
      %s370 = smul.addr %s369, 4
      %s371 = scalar_lea.vmem %s0, %s370
      %s372 = smul.u32 19, %s25
      %p373 = scmp.lt.s32.totalorder %s24, 1
      %s374 = scalar_select %p373, %s24, 1
      %p375 = scmp.lt.s32.totalorder %s25, 2
      %s376 = scalar_select %p375, %s25, 2
      %s377 = smul.addr %s376, 8
      %s378 = smul.addr %s374, 24
      %s379 = sadd.s32 %s377, %s378
      %s380 = smul.addr %s379, 4
      %s381 = scalar_lea.vmem %s1, %s380
      %s382 = smul.u32 19, %s25
      %p383 = scmp.lt.s32.totalorder %s24, 1
      %s384 = scalar_select %p383, %s24, 1
      %p385 = scmp.lt.s32.totalorder %s382, 56
      %s386 = scalar_select %p385, %s382, 56
      %s387 = smul.addr %s384, 57
      %s388 = sadd.s32 %s386, %s387
      %s389 = smul.addr %s388, 8
      %s390 = scalar_lea.vmem %s7, %s389
      %s391 = smul.u32 19, %s25
      %p392 = scmp.lt.s32.totalorder %s24, 1
      %s393 = scalar_select %p392, %s24, 1
      %p394 = scmp.lt.s32.totalorder %s25, 2
      %s395 = scalar_select %p394, %s25, 2
      %s396 = smul.addr %s393, 3
      %s397 = sadd.s32 %s395, %s396
      %s398 = smul.addr %s397, 8
      %s399 = scalar_lea.vmem %s8, %s398
      %v400 = vld [vmem:[%s371] sm:$0xf]
      %v401 = vld [vmem:[%s371 + $0x4] sm:$0xf]
      %v402 = vld [vmem:[%s371 + $0x8] sm:$0xf]
      %v403 = vld [vmem:[%s371 + $0xc] sm:$0xf]
      %v404 = vld [vmem:[%s371 + $0x10] sm:$0xf]
      %v405 = vld [vmem:[%s371 + $0x14] sm:$0xf]
      %v406 = vld [vmem:[%s371 + $0x18] sm:$0xf]
      %v407 = vld [vmem:[%s371 + $0x1c] sm:$0xf]
      %v408 = vld [vmem:[%s371 + $0x20] sm:$0xf]
      %v409 = vld [vmem:[%s371 + $0x24] sm:$0xf]
      %v410 = vld [vmem:[%s371 + $0x28] sm:$0xf]
      %v411 = vld [vmem:[%s371 + $0x2c] sm:$0xf]
      %v412 = vld [vmem:[%s371 + $0x30] sm:$0xf]
      %v413 = vld [vmem:[%s371 + $0x34] sm:$0xf]
      %v414 = vld [vmem:[%s371 + $0x38] sm:$0xf]
      %v415 = vld [vmem:[%s371 + $0x3c] sm:$0xf]
      %v416 = vld [vmem:[%s371 + $0x40] sm:$0xf]
      %v417 = vld [vmem:[%s371 + $0x44] sm:$0xf]
      %v418 = vld [vmem:[%s371 + $0x48] sm:$0xf]
      %v419 = vld [vmem:[%s381] sm:$0xf]
      %v420 = vld [vmem:[%s381 + $0x4] sm:$0xf]
      %v421 = vld [vmem:[%s381 + $0x8] sm:$0xf]
      %v422 = vld [vmem:[%s381 + $0xc] sm:$0xf]
      %v423 = vld [vmem:[%s381 + $0x10] sm:$0xf]
      %v443 = vunpack.c.l.b16 %v400
      %v444 = vunpack.c.l.b16 %v401
      %v445 = vunpack.c.l.b16 %v402
      %v446 = vunpack.c.l.b16 %v403
      %v447 = vunpack.c.l.b16 %v404
      %v448 = vunpack.c.l.b16 %v405
      %v449 = vunpack.c.l.b16 %v406
      %v450 = vunpack.c.l.b16 %v407
      %v451 = vunpack.c.l.b16 %v408
      %v452 = vunpack.c.l.b16 %v409
      %v453 = vunpack.c.l.b16 %v410
      %v454 = vunpack.c.l.b16 %v411
      %v455 = vunpack.c.l.b16 %v412
      %v456 = vunpack.c.l.b16 %v413
      %v457 = vunpack.c.l.b16 %v414
      %v458 = vunpack.c.l.b16 %v415
      %v459 = vunpack.c.l.b16 %v416
      %v460 = vunpack.c.l.b16 %v417
      %v461 = vunpack.c.l.b16 %v418
      %v462 = vpack.c.b16 %v444, %v443
      %v463 = vpack.c.b16 %v446, %v445
      %v464 = vpack.c.b16 %v448, %v447
      %v465 = vpack.c.b16 %v450, %v449
      %v466 = vpack.c.b16 %v452, %v451
      %v467 = vpack.c.b16 %v454, %v453
      %v468 = vpack.c.b16 %v456, %v455
      %v469 = vpack.c.b16 %v458, %v457
      %v470 = vpack.c.b16 %v460, %v459
      %v471 = vpack.c.b16 %v461, %v461
      %v486 = vunpack.c.l.b16 %v419
      %v487 = vunpack.c.l.b16 %v420
      %v488 = vunpack.c.l.b16 %v421
      %v489 = vunpack.c.l.b16 %v422
      %v490 = vunpack.c.l.b16 %v423
      %v491 = vpack.c.b16 %v486, %v486
      %v492 = vpack.c.b16 %v488, %v487
      %v493 = vpack.c.b16 %v490, %v489
      %vm496 = vcmask 1043456
      %v499 = vsel %vm496, %v471, %v491
      %v501 = vunpack.c.l.bf16 %v462
      %v502 = vunpack.c.h.bf16 %v462
      %v503 = vunpack.c.l.bf16 %v463
      %v504 = vunpack.c.h.bf16 %v463
      %v505 = vunpack.c.l.bf16 %v464
      %v506 = vunpack.c.h.bf16 %v464
      %v507 = vunpack.c.l.bf16 %v465
      %v508 = vunpack.c.h.bf16 %v465
      %v509 = vunpack.c.l.bf16 %v466
      %v510 = vunpack.c.h.bf16 %v466
      %v511 = vunpack.c.l.bf16 %v467
      %v512 = vunpack.c.h.bf16 %v467
      %v513 = vunpack.c.l.bf16 %v468
      %v514 = vunpack.c.h.bf16 %v468
      %v515 = vunpack.c.l.bf16 %v469
      %v516 = vunpack.c.h.bf16 %v469
      %v517 = vunpack.c.l.bf16 %v470
      %v518 = vunpack.c.h.bf16 %v470
      %v519 = vunpack.c.l.bf16 %v499
      %v520 = vunpack.c.h.bf16 %v499
      %v521 = vunpack.c.l.bf16 %v492
      %v522 = vunpack.c.h.bf16 %v492
      %v523 = vunpack.c.l.bf16 %v493
      %v524 = vunpack.c.h.bf16 %v493
      %v525 = vld [vmem:[%s3] sm:$0x1]
      %v527 = vperm.slane %v525, 0
      %v529 = vmul.f32 %v501, %v527
      %v530 = vmul.f32 %v502, %v527
      %v531 = vmul.f32 %v503, %v527
      %v532 = vmul.f32 %v504, %v527
      %v533 = vmul.f32 %v505, %v527
      %v534 = vmul.f32 %v506, %v527
      %v535 = vmul.f32 %v507, %v527
      %v536 = vmul.f32 %v508, %v527
      %v537 = vmul.f32 %v509, %v527
      %v538 = vmul.f32 %v510, %v527
      %v539 = vmul.f32 %v511, %v527
      %v540 = vmul.f32 %v512, %v527
      %v541 = vmul.f32 %v513, %v527
      %v542 = vmul.f32 %v514, %v527
      %v543 = vmul.f32 %v515, %v527
      %v544 = vmul.f32 %v516, %v527
      %v545 = vmul.f32 %v517, %v527
      %v546 = vmul.f32 %v518, %v527
      %v547 = vmul.f32 %v519, %v527
      %v548 = vmul.f32 %v520, %v527
      %v549 = vmul.f32 %v521, %v527
      %v550 = vmul.f32 %v522, %v527
      %v551 = vmul.f32 %v523, %v527
      %v552 = vmul.f32 %v524, %v527
      %v553 = vld [vmem:[%s4] sm:$0x1]
      %v555 = vperm.slane %v553, 0
      %v557 = vadd.f32 %v529, %v555
      %v558 = vadd.f32 %v530, %v555
      %v559 = vadd.f32 %v531, %v555
      %v560 = vadd.f32 %v532, %v555
      %v561 = vadd.f32 %v533, %v555
      %v562 = vadd.f32 %v534, %v555
      %v563 = vadd.f32 %v535, %v555
      %v564 = vadd.f32 %v536, %v555
      %v565 = vadd.f32 %v537, %v555
      %v566 = vadd.f32 %v538, %v555
      %v567 = vadd.f32 %v539, %v555
      %v568 = vadd.f32 %v540, %v555
      %v569 = vadd.f32 %v541, %v555
      %v570 = vadd.f32 %v542, %v555
      %v571 = vadd.f32 %v543, %v555
      %v572 = vadd.f32 %v544, %v555
      %v573 = vadd.f32 %v545, %v555
      %v574 = vadd.f32 %v546, %v555
      %v575 = vadd.f32 %v547, %v555
      %v576 = vadd.f32 %v548, %v555
      %v577 = vadd.f32 %v549, %v555
      %v578 = vadd.f32 %v550, %v555
      %v579 = vadd.f32 %v551, %v555
      %v580 = vadd.f32 %v552, %v555
      %v581 = vmax.f32 %v557, 0.0
      %v582 = vmax.f32 %v558, 0.0
      %v583 = vmax.f32 %v559, 0.0
      %v584 = vmax.f32 %v560, 0.0
      %v585 = vmax.f32 %v561, 0.0
      %v586 = vmax.f32 %v562, 0.0
      %v587 = vmax.f32 %v563, 0.0
      %v588 = vmax.f32 %v564, 0.0
      %v589 = vmax.f32 %v565, 0.0
      %v590 = vmax.f32 %v566, 0.0
      %v591 = vmax.f32 %v567, 0.0
      %v592 = vmax.f32 %v568, 0.0
      %v593 = vmax.f32 %v569, 0.0
      %v594 = vmax.f32 %v570, 0.0
      %v595 = vmax.f32 %v571, 0.0
      %v596 = vmax.f32 %v572, 0.0
      %v597 = vmax.f32 %v573, 0.0
      %v598 = vmax.f32 %v574, 0.0
      %v599 = vmax.f32 %v575, 0.0
      %v600 = vmax.f32 %v576, 0.0
      %v601 = vmax.f32 %v577, 0.0
      %v602 = vmax.f32 %v578, 0.0
      %v603 = vmax.f32 %v579, 0.0
      %v604 = vmax.f32 %v580, 0.0
      %v605 = vlaneseq
      %v606 = vshrl.u32 %v605, 7
      %v607 = vadd.s32 %v606, 8
      %v608 = vadd.s32 %v606, 16
      %v609 = vadd.s32 %v606, 24
      %v610 = vadd.s32 %v606, 32
      %v611 = vadd.s32 %v606, 40
      %v612 = vadd.s32 %v606, 48
      %v613 = vadd.s32 %v606, 56
      %v614 = vadd.s32 %v606, 64
      %v615 = vadd.s32 %v606, 72
      %v616 = vadd.s32 %v606, 80
      %v617 = vadd.s32 %v606, 88
      %v618 = vadd.s32 %v606, 96
      %v619 = vadd.s32 %v606, 104
      %v620 = vadd.s32 %v606, 112
      %v621 = vadd.s32 %v606, 120
      %v622 = vadd.s32 %v606, 128
      %v623 = vadd.s32 %v606, 136
      %v624 = vadd.s32 %v606, 144
      %v625 = vadd.s32 %v606, 152
      %v626 = vadd.s32 %v606, 160
      %v627 = vadd.s32 %v606, 168
      %v628 = vadd.s32 %v606, 176
      %v629 = vadd.s32 %v606, 184
      %s630 = smul.u32 %s25, 8
      %s631 = ssub.s32 1, %s630
      %s632 = smul.u32 %s631, 19
      %v633 = vstv %s632
      %vm634 = vcmp.ge.s32.totalorder %v606, %v633
      %vm635 = vcmp.ge.s32.totalorder %v607, %v633
      %vm636 = vcmp.ge.s32.totalorder %v608, %v633
      %vm637 = vcmp.ge.s32.totalorder %v609, %v633
      %vm638 = vcmp.ge.s32.totalorder %v610, %v633
      %vm639 = vcmp.ge.s32.totalorder %v611, %v633
      %vm640 = vcmp.ge.s32.totalorder %v612, %v633
      %vm641 = vcmp.ge.s32.totalorder %v613, %v633
      %vm642 = vcmp.ge.s32.totalorder %v614, %v633
      %vm643 = vcmp.ge.s32.totalorder %v615, %v633
      %vm644 = vcmp.ge.s32.totalorder %v616, %v633
      %vm645 = vcmp.ge.s32.totalorder %v617, %v633
      %vm646 = vcmp.ge.s32.totalorder %v618, %v633
      %vm647 = vcmp.ge.s32.totalorder %v619, %v633
      %vm648 = vcmp.ge.s32.totalorder %v620, %v633
      %vm649 = vcmp.ge.s32.totalorder %v621, %v633
      %vm650 = vcmp.ge.s32.totalorder %v622, %v633
      %vm651 = vcmp.ge.s32.totalorder %v623, %v633
      %vm652 = vcmp.ge.s32.totalorder %v624, %v633
      %vm653 = vcmp.ge.s32.totalorder %v625, %v633
      %vm654 = vcmp.ge.s32.totalorder %v626, %v633
      %vm655 = vcmp.ge.s32.totalorder %v627, %v633
      %vm656 = vcmp.ge.s32.totalorder %v628, %v633
      %vm657 = vcmp.ge.s32.totalorder %v629, %v633
      %s658 = ssub.s32 17, %s630
      %s659 = smul.u32 %s658, 19
      %v660 = vstv %s659
      %vm661 = vcmp.lt.s32.totalorder %v606, %v660
      %vm662 = vcmp.lt.s32.totalorder %v607, %v660
      %vm663 = vcmp.lt.s32.totalorder %v608, %v660
      %vm664 = vcmp.lt.s32.totalorder %v609, %v660
      %vm665 = vcmp.lt.s32.totalorder %v610, %v660
      %vm666 = vcmp.lt.s32.totalorder %v611, %v660
      %vm667 = vcmp.lt.s32.totalorder %v612, %v660
      %vm668 = vcmp.lt.s32.totalorder %v613, %v660
      %vm669 = vcmp.lt.s32.totalorder %v614, %v660
      %vm670 = vcmp.lt.s32.totalorder %v615, %v660
      %vm671 = vcmp.lt.s32.totalorder %v616, %v660
      %vm672 = vcmp.lt.s32.totalorder %v617, %v660
      %vm673 = vcmp.lt.s32.totalorder %v618, %v660
      %vm674 = vcmp.lt.s32.totalorder %v619, %v660
      %vm675 = vcmp.lt.s32.totalorder %v620, %v660
      %vm676 = vcmp.lt.s32.totalorder %v621, %v660
      %vm677 = vcmp.lt.s32.totalorder %v622, %v660
      %vm678 = vcmp.lt.s32.totalorder %v623, %v660
      %vm679 = vcmp.lt.s32.totalorder %v624, %v660
      %vm680 = vcmp.lt.s32.totalorder %v625, %v660
      %vm681 = vcmp.lt.s32.totalorder %v626, %v660
      %vm682 = vcmp.lt.s32.totalorder %v627, %v660
      %vm683 = vcmp.lt.s32.totalorder %v628, %v660
      %vm684 = vcmp.lt.s32.totalorder %v629, %v660
      %vm685 = vmand %vm634, %vm661
      %vm686 = vmand %vm635, %vm662
      %vm687 = vmand %vm636, %vm663
      %vm688 = vmand %vm637, %vm664
      %vm689 = vmand %vm638, %vm665
      %vm690 = vmand %vm639, %vm666
      %vm691 = vmand %vm640, %vm667
      %vm692 = vmand %vm641, %vm668
      %vm693 = vmand %vm642, %vm669
      %vm694 = vmand %vm643, %vm670
      %vm695 = vmand %vm644, %vm671
      %vm696 = vmand %vm645, %vm672
      %vm697 = vmand %vm646, %vm673
      %vm698 = vmand %vm647, %vm674
      %vm699 = vmand %vm648, %vm675
      %vm700 = vmand %vm649, %vm676
      %vm701 = vmand %vm650, %vm677
      %vm702 = vmand %vm651, %vm678
      %vm703 = vmand %vm652, %vm679
      %vm704 = vmand %vm653, %vm680
      %vm705 = vmand %vm654, %vm681
      %vm706 = vmand %vm655, %vm682
      %vm707 = vmand %vm656, %vm683
      %vm708 = vmand %vm657, %vm684
      %v709 = vld [vmem:[%s5] sm:$0xff]
      %v710 = vld [vmem:[%s5 + $0x8] sm:$0xff]
      %v711 = vld [vmem:[%s5 + $0x10] sm:$0xff]
      %v712 = vld [vmem:[%s5 + $0x18] sm:$0xff]
      %v713 = vld [vmem:[%s5 + $0x20] sm:$0xff]
      %v714 = vld [vmem:[%s5 + $0x28] sm:$0xff]
      %v715 = vld [vmem:[%s5 + $0x30] sm:$0xff]
      %v716 = vld [vmem:[%s5 + $0x38] sm:$0xff]
      %v717 = vld [vmem:[%s5 + $0x40] sm:$0xff]
      %v718 = vld [vmem:[%s5 + $0x48] sm:$0xff]
      %v719 = vld [vmem:[%s5 + $0x50] sm:$0xff]
      %v720 = vld [vmem:[%s5 + $0x58] sm:$0xff]
      %v721 = vld [vmem:[%s5 + $0x60] sm:$0xff]
      %v722 = vld [vmem:[%s5 + $0x68] sm:$0xff]
      %v723 = vld [vmem:[%s5 + $0x70] sm:$0xff]
      %v724 = vld [vmem:[%s5 + $0x78] sm:$0xff]
      %v725 = vld [vmem:[%s5 + $0x80] sm:$0xff]
      %v726 = vld [vmem:[%s5 + $0x88] sm:$0xff]
      %v727 = vld [vmem:[%s5 + $0x90] sm:$0xff]
      %v728 = vld [vmem:[%s5 + $0x98] sm:$0xff]
      %v729 = vld [vmem:[%s5 + $0xa0] sm:$0xff]
      %v730 = vld [vmem:[%s5 + $0xa8] sm:$0xff]
      %v731 = vld [vmem:[%s5 + $0xb0] sm:$0xff]
      %v732 = vld [vmem:[%s5 + $0xb8] sm:$0xff]
      %vm733 = vcmp.gt.s32.totalorder %v709, 0
      %vm734 = vcmp.gt.s32.totalorder %v710, 0
      %vm735 = vcmp.gt.s32.totalorder %v711, 0
      %vm736 = vcmp.gt.s32.totalorder %v712, 0
      %vm737 = vcmp.gt.s32.totalorder %v713, 0
      %vm738 = vcmp.gt.s32.totalorder %v714, 0
      %vm739 = vcmp.gt.s32.totalorder %v715, 0
      %vm740 = vcmp.gt.s32.totalorder %v716, 0
      %vm741 = vcmp.gt.s32.totalorder %v717, 0
      %vm742 = vcmp.gt.s32.totalorder %v718, 0
      %vm743 = vcmp.gt.s32.totalorder %v719, 0
      %vm744 = vcmp.gt.s32.totalorder %v720, 0
      %vm745 = vcmp.gt.s32.totalorder %v721, 0
      %vm746 = vcmp.gt.s32.totalorder %v722, 0
      %vm747 = vcmp.gt.s32.totalorder %v723, 0
      %vm748 = vcmp.gt.s32.totalorder %v724, 0
      %vm749 = vcmp.gt.s32.totalorder %v725, 0
      %vm750 = vcmp.gt.s32.totalorder %v726, 0
      %vm751 = vcmp.gt.s32.totalorder %v727, 0
      %vm752 = vcmp.gt.s32.totalorder %v728, 0
      %vm753 = vcmp.gt.s32.totalorder %v729, 0
      %vm754 = vcmp.gt.s32.totalorder %v730, 0
      %vm755 = vcmp.gt.s32.totalorder %v731, 0
      %vm756 = vcmp.gt.s32.totalorder %v732, 0
      %vm757 = vmand %vm685, %vm733
      %vm758 = vmand %vm686, %vm734
      %vm759 = vmand %vm687, %vm735
      %vm760 = vmand %vm688, %vm736
      %vm761 = vmand %vm689, %vm737
      %vm762 = vmand %vm690, %vm738
      %vm763 = vmand %vm691, %vm739
      %vm764 = vmand %vm692, %vm740
      %vm765 = vmand %vm693, %vm741
      %vm766 = vmand %vm694, %vm742
      %vm767 = vmand %vm695, %vm743
      %vm768 = vmand %vm696, %vm744
      %vm769 = vmand %vm697, %vm745
      %vm770 = vmand %vm698, %vm746
      %vm771 = vmand %vm699, %vm747
      %vm772 = vmand %vm700, %vm748
      %vm773 = vmand %vm701, %vm749
      %vm774 = vmand %vm702, %vm750
      %vm775 = vmand %vm703, %vm751
      %vm776 = vmand %vm704, %vm752
      %vm777 = vmand %vm705, %vm753
      %vm778 = vmand %vm706, %vm754
      %vm779 = vmand %vm707, %vm755
      %vm780 = vmand %vm708, %vm756
      %v781 = vsel %vm757, 1, 0
      %v782 = vsel %vm758, 1, 0
      %v783 = vsel %vm759, 1, 0
      %v784 = vsel %vm760, 1, 0
      %v785 = vsel %vm761, 1, 0
      %v786 = vsel %vm762, 1, 0
      %v787 = vsel %vm763, 1, 0
      %v788 = vsel %vm764, 1, 0
      %v789 = vsel %vm765, 1, 0
      %v790 = vsel %vm766, 1, 0
      %v791 = vsel %vm767, 1, 0
      %v792 = vsel %vm768, 1, 0
      %v793 = vsel %vm769, 1, 0
      %v794 = vsel %vm770, 1, 0
      %v795 = vsel %vm771, 1, 0
      %v796 = vsel %vm772, 1, 0
      %v797 = vsel %vm773, 1, 0
      %v798 = vsel %vm774, 1, 0
      %v799 = vsel %vm775, 1, 0
      %v800 = vsel %vm776, 1, 0
      %v801 = vsel %vm777, 1, 0
      %v802 = vsel %vm778, 1, 0
      %v803 = vsel %vm779, 1, 0
      %v804 = vsel %vm780, 1, 0
      %805 = vset.pattern.permute.xlu0 0
      %806 = vperm.xlu0 %805, %v781
      %v807 = vpop.permute.xlu0 %806
      %808 = vset.pattern.permute.xlu0 0
      %809 = vperm.xlu0 %808, %v782
      %v810 = vpop.permute.xlu0 %809
      %811 = vset.pattern.permute.xlu0 0
      %812 = vperm.xlu0 %811, %v783
      %v813 = vpop.permute.xlu0 %812
      %814 = vset.pattern.permute.xlu0 0
      %815 = vperm.xlu0 %814, %v784
      %v816 = vpop.permute.xlu0 %815
      %817 = vset.pattern.permute.xlu0 0
      %818 = vperm.xlu0 %817, %v785
      %v819 = vpop.permute.xlu0 %818
      %820 = vset.pattern.permute.xlu0 0
      %821 = vperm.xlu0 %820, %v786
      %v822 = vpop.permute.xlu0 %821
      %823 = vset.pattern.permute.xlu0 0
      %824 = vperm.xlu0 %823, %v787
      %v825 = vpop.permute.xlu0 %824
      %826 = vset.pattern.permute.xlu0 0
      %827 = vperm.xlu0 %826, %v788
      %v828 = vpop.permute.xlu0 %827
      %829 = vset.pattern.permute.xlu0 0
      %830 = vperm.xlu0 %829, %v789
      %v831 = vpop.permute.xlu0 %830
      %832 = vset.pattern.permute.xlu0 0
      %833 = vperm.xlu0 %832, %v790
      %v834 = vpop.permute.xlu0 %833
      %835 = vset.pattern.permute.xlu0 0
      %836 = vperm.xlu0 %835, %v791
      %v837 = vpop.permute.xlu0 %836
      %838 = vset.pattern.permute.xlu0 0
      %839 = vperm.xlu0 %838, %v792
      %v840 = vpop.permute.xlu0 %839
      %841 = vset.pattern.permute.xlu0 0
      %842 = vperm.xlu0 %841, %v793
      %v843 = vpop.permute.xlu0 %842
      %844 = vset.pattern.permute.xlu0 0
      %845 = vperm.xlu0 %844, %v794
      %v846 = vpop.permute.xlu0 %845
      %847 = vset.pattern.permute.xlu0 0
      %848 = vperm.xlu0 %847, %v795
      %v849 = vpop.permute.xlu0 %848
      %850 = vset.pattern.permute.xlu0 0
      %851 = vperm.xlu0 %850, %v796
      %v852 = vpop.permute.xlu0 %851
      %853 = vset.pattern.permute.xlu0 0
      %854 = vperm.xlu0 %853, %v797
      %v855 = vpop.permute.xlu0 %854
      %856 = vset.pattern.permute.xlu0 0
      %857 = vperm.xlu0 %856, %v798
      %v858 = vpop.permute.xlu0 %857
      %859 = vset.pattern.permute.xlu0 0
      %860 = vperm.xlu0 %859, %v799
      %v861 = vpop.permute.xlu0 %860
      %862 = vset.pattern.permute.xlu0 0
      %863 = vperm.xlu0 %862, %v800
      %v864 = vpop.permute.xlu0 %863
      %865 = vset.pattern.permute.xlu0 0
      %866 = vperm.xlu0 %865, %v801
      %v867 = vpop.permute.xlu0 %866
      %868 = vset.pattern.permute.xlu0 0
      %869 = vperm.xlu0 %868, %v802
      %v870 = vpop.permute.xlu0 %869
      %871 = vset.pattern.permute.xlu0 0
      %872 = vperm.xlu0 %871, %v803
      %v873 = vpop.permute.xlu0 %872
      %874 = vset.pattern.permute.xlu0 0
      %875 = vperm.xlu0 %874, %v804
      %v876 = vpop.permute.xlu0 %875
      %vm877 = vcmp.eq.s32.totalorder %v807, 1
      %vm878 = vcmp.eq.s32.totalorder %v810, 1
      %vm879 = vcmp.eq.s32.totalorder %v813, 1
      %vm880 = vcmp.eq.s32.totalorder %v816, 1
      %vm881 = vcmp.eq.s32.totalorder %v819, 1
      %vm882 = vcmp.eq.s32.totalorder %v822, 1
      %vm883 = vcmp.eq.s32.totalorder %v825, 1
      %vm884 = vcmp.eq.s32.totalorder %v828, 1
      %vm885 = vcmp.eq.s32.totalorder %v831, 1
      %vm886 = vcmp.eq.s32.totalorder %v834, 1
      %vm887 = vcmp.eq.s32.totalorder %v837, 1
      %vm888 = vcmp.eq.s32.totalorder %v840, 1
      %vm889 = vcmp.eq.s32.totalorder %v843, 1
      %vm890 = vcmp.eq.s32.totalorder %v846, 1
      %vm891 = vcmp.eq.s32.totalorder %v849, 1
      %vm892 = vcmp.eq.s32.totalorder %v852, 1
      %vm893 = vcmp.eq.s32.totalorder %v855, 1
      %vm894 = vcmp.eq.s32.totalorder %v858, 1
      %vm895 = vcmp.eq.s32.totalorder %v861, 1
      %vm896 = vcmp.eq.s32.totalorder %v864, 1
      %vm897 = vcmp.eq.s32.totalorder %v867, 1
      %vm898 = vcmp.eq.s32.totalorder %v870, 1
      %vm899 = vcmp.eq.s32.totalorder %v873, 1
      %vm900 = vcmp.eq.s32.totalorder %v876, 1
      %v901 = vsel %vm877, %v581, 0.0
      %v902 = vsel %vm878, %v582, 0.0
      %v903 = vsel %vm879, %v583, 0.0
      %v904 = vsel %vm880, %v584, 0.0
      %v905 = vsel %vm881, %v585, 0.0
      %v906 = vsel %vm882, %v586, 0.0
      %v907 = vsel %vm883, %v587, 0.0
      %v908 = vsel %vm884, %v588, 0.0
      %v909 = vsel %vm885, %v589, 0.0
      %v910 = vsel %vm886, %v590, 0.0
      %v911 = vsel %vm887, %v591, 0.0
      %v912 = vsel %vm888, %v592, 0.0
      %v913 = vsel %vm889, %v593, 0.0
      %v914 = vsel %vm890, %v594, 0.0
      %v915 = vsel %vm891, %v595, 0.0
      %v916 = vsel %vm892, %v596, 0.0
      %v917 = vsel %vm893, %v597, 0.0
      %v918 = vsel %vm894, %v598, 0.0
      %v919 = vsel %vm895, %v599, 0.0
      %v920 = vsel %vm896, %v600, 0.0
      %v921 = vsel %vm897, %v601, 0.0
      %v922 = vsel %vm898, %v602, 0.0
      %v923 = vsel %vm899, %v603, 0.0
      %v924 = vsel %vm900, %v604, 0.0
      %v925 = vpack.c.bf16 %v901, %v901
      %v926 = vpack.c.bf16 %v902, %v902
      %v927 = vpack.c.bf16 %v903, %v903
      %v928 = vpack.c.bf16 %v904, %v904
      %v929 = vpack.c.bf16 %v905, %v905
      %v930 = vpack.c.bf16 %v906, %v906
      %v931 = vpack.c.bf16 %v907, %v907
      %v932 = vpack.c.bf16 %v908, %v908
      %v933 = vpack.c.bf16 %v909, %v909
      %v934 = vpack.c.bf16 %v910, %v910
      %v935 = vpack.c.bf16 %v911, %v911
      %v936 = vpack.c.bf16 %v912, %v912
      %v937 = vpack.c.bf16 %v913, %v913
      %v938 = vpack.c.bf16 %v914, %v914
      %v939 = vpack.c.bf16 %v915, %v915
      %v940 = vpack.c.bf16 %v916, %v916
      %v941 = vpack.c.bf16 %v917, %v917
      %v942 = vpack.c.bf16 %v918, %v918
      %v943 = vpack.c.bf16 %v919, %v919
      %v944 = vpack.c.bf16 %v920, %v920
      %v945 = vpack.c.bf16 %v921, %v921
      %v946 = vpack.c.bf16 %v922, %v922
      %v947 = vpack.c.bf16 %v923, %v923
      %v948 = vpack.c.bf16 %v924, %v924
      %v949 = vld [vmem:[%s2] sm:$0xf]
      %v950 = vld [vmem:[%s2 + $0x4] sm:$0xf]
      %v951 = vld [vmem:[%s2 + $0x8] sm:$0xf]
      %v952 = vld [vmem:[%s2 + $0xc] sm:$0xf]
      %v953 = vld [vmem:[%s2 + $0x10] sm:$0xf]
      %v954 = vld [vmem:[%s2 + $0x14] sm:$0xf]
      %v955 = vld [vmem:[%s2 + $0x18] sm:$0xf]
      %v956 = vld [vmem:[%s2 + $0x1c] sm:$0xf]
      %v957 = vld [vmem:[%s2 + $0x20] sm:$0xf]
      %v958 = vld [vmem:[%s2 + $0x24] sm:$0xf]
      %v959 = vld [vmem:[%s2 + $0x28] sm:$0xf]
      %v960 = vld [vmem:[%s2 + $0x2c] sm:$0xf]
      %v961 = vld [vmem:[%s2 + $0x30] sm:$0xf]
      %v962 = vld [vmem:[%s2 + $0x34] sm:$0xf]
      %v963 = vld [vmem:[%s2 + $0x38] sm:$0xf]
      %v964 = vld [vmem:[%s2 + $0x3c] sm:$0xf]
      %s965 = scalar_lea.vmem %s2, 64
      %v966 = vld [vmem:[%s965] sm:$0xf]
      %v967 = vld [vmem:[%s965 + $0x4] sm:$0xf]
      %v968 = vld [vmem:[%s965 + $0x8] sm:$0xf]
      %v969 = vld [vmem:[%s965 + $0xc] sm:$0xf]
      %v970 = vld [vmem:[%s965 + $0x10] sm:$0xf]
      %v971 = vld [vmem:[%s965 + $0x14] sm:$0xf]
      %v972 = vld [vmem:[%s965 + $0x18] sm:$0xf]
      %v973 = vld [vmem:[%s965 + $0x1c] sm:$0xf]
      %v974 = vld [vmem:[%s965 + $0x20] sm:$0xf]
      %v975 = vld [vmem:[%s965 + $0x24] sm:$0xf]
      %v976 = vld [vmem:[%s965 + $0x28] sm:$0xf]
      %v977 = vld [vmem:[%s965 + $0x2c] sm:$0xf]
      %v978 = vld [vmem:[%s965 + $0x30] sm:$0xf]
      %v979 = vld [vmem:[%s965 + $0x34] sm:$0xf]
      %v980 = vld [vmem:[%s965 + $0x38] sm:$0xf]
      %v981 = vld [vmem:[%s965 + $0x3c] sm:$0xf]
      %v1002 = vunpack.c.l.b16 %v925
      %v1003 = vunpack.c.l.b16 %v926
      %v1004 = vunpack.c.l.b16 %v927
      %v1005 = vunpack.c.l.b16 %v928
      %v1006 = vunpack.c.l.b16 %v929
      %v1007 = vunpack.c.l.b16 %v930
      %v1008 = vunpack.c.l.b16 %v931
      %v1009 = vunpack.c.l.b16 %v932
      %v1010 = vunpack.c.l.b16 %v933
      %v1011 = vunpack.c.l.b16 %v934
      %v1012 = vunpack.c.l.b16 %v935
      %v1013 = vunpack.c.l.b16 %v936
      %v1014 = vunpack.c.l.b16 %v937
      %v1015 = vunpack.c.l.b16 %v938
      %v1016 = vunpack.c.l.b16 %v939
      %v1017 = vunpack.c.l.b16 %v940
      %v1018 = vunpack.c.l.b16 %v941
      %v1019 = vunpack.c.l.b16 %v942
      %v1020 = vunpack.c.l.b16 %v943
      %v1021 = vunpack.c.l.b16 %v944
      %v1022 = vpack.c.b16 %v1003, %v1002
      %v1023 = vpack.c.b16 %v1005, %v1004
      %v1024 = vpack.c.b16 %v1007, %v1006
      %v1025 = vpack.c.b16 %v1009, %v1008
      %v1026 = vpack.c.b16 %v1011, %v1010
      %v1027 = vpack.c.b16 %v1013, %v1012
      %v1028 = vpack.c.b16 %v1015, %v1014
      %v1029 = vpack.c.b16 %v1017, %v1016
      %v1030 = vpack.c.b16 %v1019, %v1018
      %v1031 = vpack.c.b16 %v1021, %v1020
      %vm1032 = vsmask.f32 7424
      %v1034 = vshrl.u32 %v1022, 16
      %v1036 = vshll.u32 %v1022, 16
      %v1038 = vrot.slane %v1036, 1
      %v1039 = vor.u32 %v1034, %v1038
      %v1041 = vshll.u32 %v1023, 16
      %v1043 = vrot.slane %v1041, 1
      %v1044 = vsel %vm1032, %v1039, %v1043
      %v1045 = vshrl.u32 %v1023, 16
      %v1047 = vor.u32 %v1045, %v1043
      %v1049 = vshll.u32 %v1024, 16
      %v1051 = vrot.slane %v1049, 1
      %v1052 = vsel %vm1032, %v1047, %v1051
      %v1053 = vshrl.u32 %v1024, 16
      %v1055 = vor.u32 %v1053, %v1051
      %v1057 = vshll.u32 %v1025, 16
      %v1059 = vrot.slane %v1057, 1
      %v1060 = vsel %vm1032, %v1055, %v1059
      %v1061 = vshrl.u32 %v1025, 16
      %v1063 = vor.u32 %v1061, %v1059
      %v1065 = vshll.u32 %v1026, 16
      %v1067 = vrot.slane %v1065, 1
      %v1068 = vsel %vm1032, %v1063, %v1067
      %v1069 = vshrl.u32 %v1026, 16
      %v1071 = vor.u32 %v1069, %v1067
      %v1073 = vshll.u32 %v1027, 16
      %v1075 = vrot.slane %v1073, 1
      %v1076 = vsel %vm1032, %v1071, %v1075
      %v1077 = vshrl.u32 %v1027, 16
      %v1079 = vor.u32 %v1077, %v1075
      %v1081 = vshll.u32 %v1028, 16
      %v1083 = vrot.slane %v1081, 1
      %v1084 = vsel %vm1032, %v1079, %v1083
      %v1085 = vshrl.u32 %v1028, 16
      %v1087 = vor.u32 %v1085, %v1083
      %v1089 = vshll.u32 %v1029, 16
      %v1091 = vrot.slane %v1089, 1
      %v1092 = vsel %vm1032, %v1087, %v1091
      %v1093 = vshrl.u32 %v1029, 16
      %v1095 = vor.u32 %v1093, %v1091
      %v1097 = vshll.u32 %v1030, 16
      %v1099 = vrot.slane %v1097, 1
      %v1100 = vsel %vm1032, %v1095, %v1099
      %v1101 = vshrl.u32 %v1030, 16
      %v1103 = vor.u32 %v1101, %v1099
      %v1105 = vshll.u32 %v1031, 16
      %v1107 = vrot.slane %v1105, 1
      %v1108 = vsel %vm1032, %v1103, %v1107
      %v1109 = vshrl.u32 %v1031, 16
      %v1111 = vor.u32 %v1109, %v1107
      %v1138 = vunpack.c.l.b16 %v966
      %v1139 = vunpack.c.l.b16 %v967
      %v1140 = vunpack.c.l.b16 %v968
      %v1141 = vunpack.c.l.b16 %v969
      %v1142 = vunpack.c.l.b16 %v970
      %v1143 = vunpack.c.l.b16 %v971
      %v1144 = vunpack.c.l.b16 %v972
      %v1145 = vunpack.c.l.b16 %v973
      %v1146 = vunpack.c.l.b16 %v974
      %v1147 = vunpack.c.l.b16 %v975
      %v1148 = vunpack.c.l.b16 %v976
      %v1149 = vunpack.c.l.b16 %v977
      %v1150 = vunpack.c.l.b16 %v978
      %v1151 = vunpack.c.l.b16 %v979
      %v1152 = vunpack.c.l.b16 %v980
      %v1153 = vunpack.c.l.b16 %v981
      %v1154 = vpack.c.b16 %v1139, %v1138
      %v1155 = vpack.c.b16 %v1141, %v1140
      %v1156 = vpack.c.b16 %v1143, %v1142
      %v1157 = vpack.c.b16 %v1145, %v1144
      %v1158 = vpack.c.b16 %v1147, %v1146
      %v1159 = vpack.c.b16 %v1149, %v1148
      %v1160 = vpack.c.b16 %v1151, %v1150
      %v1161 = vpack.c.b16 %v1153, %v1152
      %1170 = vmatpush.bf16.msra.mxu0 %v1161
      %1171 = vmatpush.bf16.msra.mxu0 %v1160
      %1172 = vmatpush.bf16.msra.mxu0 %v1159
      %1173 = vmatpush.bf16.msra.mxu0 %v1158
      %1174 = vmatpush.bf16.msra.mxu0 %v1157
      %1175 = vmatpush.bf16.msra.mxu0 %v1156
      %1176 = vmatpush.bf16.msra.mxu0 %v1155
      %1177 = vmatpush.bf16.msra.mxu0 %v1154
      %1178 = vmatmul.bf16.gmra.mxu0 %v1044
      %v1179 = vpop.f32.mrf.mxu0
      %v1180 = vadd.f32 0.0, %v1179
      %v1181 = vpop.f32.mrf.mxu0
      %v1182 = vadd.f32 0.0, %v1181
      %1183 = vmatmul.bf16.gmra.mxu0 %v1052
      %v1184 = vpop.f32.mrf.mxu0
      %v1185 = vadd.f32 0.0, %v1184
      %v1186 = vpop.f32.mrf.mxu0
      %v1187 = vadd.f32 0.0, %v1186
      %1188 = vmatmul.bf16.gmra.mxu0 %v1060
      %v1189 = vpop.f32.mrf.mxu0
      %v1190 = vadd.f32 0.0, %v1189
      %v1191 = vpop.f32.mrf.mxu0
      %v1192 = vadd.f32 0.0, %v1191
      %1193 = vmatmul.bf16.gmra.mxu0 %v1068
      %v1194 = vpop.f32.mrf.mxu0
      %v1195 = vadd.f32 0.0, %v1194
      %v1196 = vpop.f32.mrf.mxu0
      %v1197 = vadd.f32 0.0, %v1196
      %1198 = vmatmul.bf16.gmra.mxu0 %v1076
      %v1199 = vpop.f32.mrf.mxu0
      %v1200 = vadd.f32 0.0, %v1199
      %v1201 = vpop.f32.mrf.mxu0
      %v1202 = vadd.f32 0.0, %v1201
      %1203 = vmatmul.bf16.gmra.mxu0 %v1084
      %v1204 = vpop.f32.mrf.mxu0
      %v1205 = vadd.f32 0.0, %v1204
      %v1206 = vpop.f32.mrf.mxu0
      %v1207 = vadd.f32 0.0, %v1206
      %1208 = vmatmul.bf16.gmra.mxu0 %v1092
      %v1209 = vpop.f32.mrf.mxu0
      %v1210 = vadd.f32 0.0, %v1209
      %v1211 = vpop.f32.mrf.mxu0
      %v1212 = vadd.f32 0.0, %v1211
      %1213 = vmatmul.bf16.gmra.mxu0 %v1100
      %v1214 = vpop.f32.mrf.mxu0
      %v1215 = vadd.f32 0.0, %v1214
      %v1216 = vpop.f32.mrf.mxu0
      %v1217 = vadd.f32 0.0, %v1216
      %1218 = vmatmul.bf16.gmra.mxu0 %v1108
      %v1219 = vpop.f32.mrf.mxu0
      %v1220 = vadd.f32 0.0, %v1219
      %v1221 = vpop.f32.mrf.mxu0
      %v1222 = vadd.f32 0.0, %v1221
      %1223 = vmatmul.bf16.gmra.mxu0 %v1111
      %v1224 = vpop.f32.mrf.mxu0
      %v1225 = vadd.f32 0.0, %v1224
      %v1226 = vpop.f32.mrf.mxu0
      %1227 = vdwg.mxu0
      %v1228 = vpack.c.b16 %v1020, %v1020
      %v1255 = vunpack.c.l.b16 %v949
      %v1256 = vunpack.c.l.b16 %v950
      %v1257 = vunpack.c.l.b16 %v951
      %v1258 = vunpack.c.l.b16 %v952
      %v1259 = vunpack.c.l.b16 %v953
      %v1260 = vunpack.c.l.b16 %v954
      %v1261 = vunpack.c.l.b16 %v955
      %v1262 = vunpack.c.l.b16 %v956
      %v1263 = vunpack.c.l.b16 %v957
      %v1264 = vunpack.c.l.b16 %v958
      %v1265 = vunpack.c.l.b16 %v959
      %v1266 = vunpack.c.l.b16 %v960
      %v1267 = vunpack.c.l.b16 %v961
      %v1268 = vunpack.c.l.b16 %v962
      %v1269 = vunpack.c.l.b16 %v963
      %v1270 = vunpack.c.l.b16 %v964
      %v1271 = vpack.c.b16 %v1256, %v1255
      %v1272 = vpack.c.b16 %v1258, %v1257
      %v1273 = vpack.c.b16 %v1260, %v1259
      %v1274 = vpack.c.b16 %v1262, %v1261
      %v1275 = vpack.c.b16 %v1264, %v1263
      %v1276 = vpack.c.b16 %v1266, %v1265
      %v1277 = vpack.c.b16 %v1268, %v1267
      %v1278 = vpack.c.b16 %v1270, %v1269
      %1287 = vmatpush.bf16.msra.mxu0 %v1278
      %1288 = vmatpush.bf16.msra.mxu0 %v1277
      %1289 = vmatpush.bf16.msra.mxu0 %v1276
      %1290 = vmatpush.bf16.msra.mxu0 %v1275
      %1291 = vmatpush.bf16.msra.mxu0 %v1274
      %1292 = vmatpush.bf16.msra.mxu0 %v1273
      %1293 = vmatpush.bf16.msra.mxu0 %v1272
      %1294 = vmatpush.bf16.msra.mxu0 %v1271
      %1295 = vmatmul.bf16.gmra.mxu0 %v1022
      %v1296 = vpop.f32.mrf.mxu0
      %v1297 = vadd.f32 %v1180, %v1296
      %v1298 = vpop.f32.mrf.mxu0
      %v1299 = vadd.f32 %v1182, %v1298
      %1300 = vmatmul.bf16.gmra.mxu0 %v1023
      %v1301 = vpop.f32.mrf.mxu0
      %v1302 = vadd.f32 %v1185, %v1301
      %v1303 = vpop.f32.mrf.mxu0
      %v1304 = vadd.f32 %v1187, %v1303
      %1305 = vmatmul.bf16.gmra.mxu0 %v1024
      %v1306 = vpop.f32.mrf.mxu0
      %v1307 = vadd.f32 %v1190, %v1306
      %v1308 = vpop.f32.mrf.mxu0
      %v1309 = vadd.f32 %v1192, %v1308
      %1310 = vmatmul.bf16.gmra.mxu0 %v1025
      %v1311 = vpop.f32.mrf.mxu0
      %v1312 = vadd.f32 %v1195, %v1311
      %v1313 = vpop.f32.mrf.mxu0
      %v1314 = vadd.f32 %v1197, %v1313
      %1315 = vmatmul.bf16.gmra.mxu0 %v1026
      %v1316 = vpop.f32.mrf.mxu0
      %v1317 = vadd.f32 %v1200, %v1316
      %v1318 = vpop.f32.mrf.mxu0
      %v1319 = vadd.f32 %v1202, %v1318
      %1320 = vmatmul.bf16.gmra.mxu0 %v1027
      %v1321 = vpop.f32.mrf.mxu0
      %v1322 = vadd.f32 %v1205, %v1321
      %v1323 = vpop.f32.mrf.mxu0
      %v1324 = vadd.f32 %v1207, %v1323
      %1325 = vmatmul.bf16.gmra.mxu0 %v1028
      %v1326 = vpop.f32.mrf.mxu0
      %v1327 = vadd.f32 %v1210, %v1326
      %v1328 = vpop.f32.mrf.mxu0
      %v1329 = vadd.f32 %v1212, %v1328
      %1330 = vmatmul.bf16.gmra.mxu0 %v1029
      %v1331 = vpop.f32.mrf.mxu0
      %v1332 = vadd.f32 %v1215, %v1331
      %v1333 = vpop.f32.mrf.mxu0
      %v1334 = vadd.f32 %v1217, %v1333
      %1335 = vmatmul.bf16.gmra.mxu0 %v1030
      %v1336 = vpop.f32.mrf.mxu0
      %v1337 = vadd.f32 %v1220, %v1336
      %v1338 = vpop.f32.mrf.mxu0
      %v1339 = vadd.f32 %v1222, %v1338
      %1340 = vmatmul.bf16.gmra.mxu0 %v1228
      %v1341 = vpop.f32.mrf.mxu0
      %v1342 = vadd.f32 %v1225, %v1341
      %v1343 = vpop.f32.mrf.mxu0
      %1344 = vdwg.mxu0
      %s1345 = scalar_lea.vmem %s2, 128
      %v1346 = vld [vmem:[%s1345] sm:$0xf]
      %v1347 = vld [vmem:[%s1345 + $0x4] sm:$0xf]
      %v1348 = vld [vmem:[%s1345 + $0x8] sm:$0xf]
      %v1349 = vld [vmem:[%s1345 + $0xc] sm:$0xf]
      %v1350 = vld [vmem:[%s1345 + $0x10] sm:$0xf]
      %v1351 = vld [vmem:[%s1345 + $0x14] sm:$0xf]
      %v1352 = vld [vmem:[%s1345 + $0x18] sm:$0xf]
      %v1353 = vld [vmem:[%s1345 + $0x1c] sm:$0xf]
      %v1354 = vld [vmem:[%s1345 + $0x20] sm:$0xf]
      %v1355 = vld [vmem:[%s1345 + $0x24] sm:$0xf]
      %v1356 = vld [vmem:[%s1345 + $0x28] sm:$0xf]
      %v1357 = vld [vmem:[%s1345 + $0x2c] sm:$0xf]
      %v1358 = vld [vmem:[%s1345 + $0x30] sm:$0xf]
      %v1359 = vld [vmem:[%s1345 + $0x34] sm:$0xf]
      %v1360 = vld [vmem:[%s1345 + $0x38] sm:$0xf]
      %v1361 = vld [vmem:[%s1345 + $0x3c] sm:$0xf]
      %vm1362 = vcmask 1046528
      %v1363 = vrot.slane %v1022, 1
      %v1364 = vrot.slane %v1023, 1
      %v1365 = vsel %vm1362, %v1363, %v1364
      %v1366 = vrot.slane %v1024, 1
      %v1367 = vsel %vm1362, %v1364, %v1366
      %v1368 = vrot.slane %v1025, 1
      %v1369 = vsel %vm1362, %v1366, %v1368
      %v1370 = vrot.slane %v1026, 1
      %v1371 = vsel %vm1362, %v1368, %v1370
      %v1372 = vrot.slane %v1027, 1
      %v1373 = vsel %vm1362, %v1370, %v1372
      %v1374 = vrot.slane %v1028, 1
      %v1375 = vsel %vm1362, %v1372, %v1374
      %v1376 = vrot.slane %v1029, 1
      %v1377 = vsel %vm1362, %v1374, %v1376
      %v1378 = vrot.slane %v1030, 1
      %v1379 = vsel %vm1362, %v1376, %v1378
      %v1380 = vrot.slane %v1031, 1
      %v1381 = vsel %vm1362, %v1378, %v1380
      %v1408 = vunpack.c.l.b16 %v1346
      %v1409 = vunpack.c.l.b16 %v1347
      %v1410 = vunpack.c.l.b16 %v1348
      %v1411 = vunpack.c.l.b16 %v1349
      %v1412 = vunpack.c.l.b16 %v1350
      %v1413 = vunpack.c.l.b16 %v1351
      %v1414 = vunpack.c.l.b16 %v1352
      %v1415 = vunpack.c.l.b16 %v1353
      %v1416 = vunpack.c.l.b16 %v1354
      %v1417 = vunpack.c.l.b16 %v1355
      %v1418 = vunpack.c.l.b16 %v1356
      %v1419 = vunpack.c.l.b16 %v1357
      %v1420 = vunpack.c.l.b16 %v1358
      %v1421 = vunpack.c.l.b16 %v1359
      %v1422 = vunpack.c.l.b16 %v1360
      %v1423 = vunpack.c.l.b16 %v1361
      %v1424 = vpack.c.b16 %v1409, %v1408
      %v1425 = vpack.c.b16 %v1411, %v1410
      %v1426 = vpack.c.b16 %v1413, %v1412
      %v1427 = vpack.c.b16 %v1415, %v1414
      %v1428 = vpack.c.b16 %v1417, %v1416
      %v1429 = vpack.c.b16 %v1419, %v1418
      %v1430 = vpack.c.b16 %v1421, %v1420
      %v1431 = vpack.c.b16 %v1423, %v1422
      %1440 = vmatpush.bf16.msra.mxu0 %v1431
      %1441 = vmatpush.bf16.msra.mxu0 %v1430
      %1442 = vmatpush.bf16.msra.mxu0 %v1429
      %1443 = vmatpush.bf16.msra.mxu0 %v1428
      %1444 = vmatpush.bf16.msra.mxu0 %v1427
      %1445 = vmatpush.bf16.msra.mxu0 %v1426
      %1446 = vmatpush.bf16.msra.mxu0 %v1425
      %1447 = vmatpush.bf16.msra.mxu0 %v1424
      %1448 = vmatmul.bf16.gmra.mxu0 %v1365
      %v1449 = vpop.f32.mrf.mxu0
      %v1450 = vadd.f32 0.0, %v1449
      %v1451 = vpop.f32.mrf.mxu0
      %v1452 = vadd.f32 0.0, %v1451
      %1453 = vmatmul.bf16.gmra.mxu0 %v1367
      %v1454 = vpop.f32.mrf.mxu0
      %v1455 = vadd.f32 0.0, %v1454
      %v1456 = vpop.f32.mrf.mxu0
      %v1457 = vadd.f32 0.0, %v1456
      %1458 = vmatmul.bf16.gmra.mxu0 %v1369
      %v1459 = vpop.f32.mrf.mxu0
      %v1460 = vadd.f32 0.0, %v1459
      %v1461 = vpop.f32.mrf.mxu0
      %v1462 = vadd.f32 0.0, %v1461
      %1463 = vmatmul.bf16.gmra.mxu0 %v1371
      %v1464 = vpop.f32.mrf.mxu0
      %v1465 = vadd.f32 0.0, %v1464
      %v1466 = vpop.f32.mrf.mxu0
      %v1467 = vadd.f32 0.0, %v1466
      %1468 = vmatmul.bf16.gmra.mxu0 %v1373
      %v1469 = vpop.f32.mrf.mxu0
      %v1470 = vadd.f32 0.0, %v1469
      %v1471 = vpop.f32.mrf.mxu0
      %v1472 = vadd.f32 0.0, %v1471
      %1473 = vmatmul.bf16.gmra.mxu0 %v1375
      %v1474 = vpop.f32.mrf.mxu0
      %v1475 = vadd.f32 0.0, %v1474
      %v1476 = vpop.f32.mrf.mxu0
      %v1477 = vadd.f32 0.0, %v1476
      %1478 = vmatmul.bf16.gmra.mxu0 %v1377
      %v1479 = vpop.f32.mrf.mxu0
      %v1480 = vadd.f32 0.0, %v1479
      %v1481 = vpop.f32.mrf.mxu0
      %v1482 = vadd.f32 0.0, %v1481
      %1483 = vmatmul.bf16.gmra.mxu0 %v1379
      %v1484 = vpop.f32.mrf.mxu0
      %v1485 = vadd.f32 0.0, %v1484
      %v1486 = vpop.f32.mrf.mxu0
      %v1487 = vadd.f32 0.0, %v1486
      %1488 = vmatmul.bf16.gmra.mxu0 %v1381
      %v1489 = vpop.f32.mrf.mxu0
      %v1490 = vadd.f32 0.0, %v1489
      %v1491 = vpop.f32.mrf.mxu0
      %v1492 = vadd.f32 0.0, %v1491
      %1493 = vmatmul.bf16.gmra.mxu0 %v1380
      %v1494 = vpop.f32.mrf.mxu0
      %v1495 = vadd.f32 0.0, %v1494
      %v1496 = vpop.f32.mrf.mxu0
      %1497 = vdwg.mxu0
      %v1498 = vadd.f32 %v1297, %v1450
      %v1499 = vadd.f32 %v1299, %v1452
      %v1500 = vadd.f32 %v1302, %v1455
      %v1501 = vadd.f32 %v1304, %v1457
      %v1502 = vadd.f32 %v1307, %v1460
      %v1503 = vadd.f32 %v1309, %v1462
      %v1504 = vadd.f32 %v1312, %v1465
      %v1505 = vadd.f32 %v1314, %v1467
      %v1506 = vadd.f32 %v1317, %v1470
      %v1507 = vadd.f32 %v1319, %v1472
      %v1508 = vadd.f32 %v1322, %v1475
      %v1509 = vadd.f32 %v1324, %v1477
      %v1510 = vadd.f32 %v1327, %v1480
      %v1511 = vadd.f32 %v1329, %v1482
      %v1512 = vadd.f32 %v1332, %v1485
      %v1513 = vadd.f32 %v1334, %v1487
      %v1514 = vadd.f32 %v1337, %v1490
      %v1515 = vadd.f32 %v1339, %v1492
      %v1516 = vadd.f32 %v1342, %v1495
      %s1517 = scalar_lea.vmem %s2, 192
      %v1518 = vld [vmem:[%s1517] sm:$0xf]
      %v1519 = vld [vmem:[%s1517 + $0x4] sm:$0xf]
      %v1520 = vld [vmem:[%s1517 + $0x8] sm:$0xf]
      %v1521 = vld [vmem:[%s1517 + $0xc] sm:$0xf]
      %v1522 = vld [vmem:[%s1517 + $0x10] sm:$0xf]
      %v1523 = vld [vmem:[%s1517 + $0x14] sm:$0xf]
      %v1524 = vld [vmem:[%s1517 + $0x18] sm:$0xf]
      %v1525 = vld [vmem:[%s1517 + $0x1c] sm:$0xf]
      %v1526 = vld [vmem:[%s1517 + $0x20] sm:$0xf]
      %v1527 = vld [vmem:[%s1517 + $0x24] sm:$0xf]
      %v1528 = vld [vmem:[%s1517 + $0x28] sm:$0xf]
      %v1529 = vld [vmem:[%s1517 + $0x2c] sm:$0xf]
      %v1530 = vld [vmem:[%s1517 + $0x30] sm:$0xf]
      %v1531 = vld [vmem:[%s1517 + $0x34] sm:$0xf]
      %v1532 = vld [vmem:[%s1517 + $0x38] sm:$0xf]
      %v1533 = vld [vmem:[%s1517 + $0x3c] sm:$0xf]
      %v1536 = vunpack.c.l.b16 %v945
      %v1537 = vunpack.c.l.b16 %v946
      %v1538 = vpack.c.b16 %v1537, %v1536
      %vm1539 = vsmask.f32 6400
      %v1540 = vrot.slane %v1045, 1
      %v1541 = vrot.slane %v1041, 2
      %v1542 = vor.u32 %v1540, %v1541
      %v1543 = vrot.slane %v1053, 1
      %v1544 = vrot.slane %v1049, 2
      %v1545 = vor.u32 %v1543, %v1544
      %v1546 = vsel %vm1539, %v1542, %v1545
      %v1547 = vrot.slane %v1061, 1
      %v1548 = vrot.slane %v1057, 2
      %v1549 = vor.u32 %v1547, %v1548
      %v1550 = vsel %vm1539, %v1545, %v1549
      %v1551 = vrot.slane %v1069, 1
      %v1552 = vrot.slane %v1065, 2
      %v1553 = vor.u32 %v1551, %v1552
      %v1554 = vsel %vm1539, %v1549, %v1553
      %v1555 = vrot.slane %v1077, 1
      %v1556 = vrot.slane %v1073, 2
      %v1557 = vor.u32 %v1555, %v1556
      %v1558 = vsel %vm1539, %v1553, %v1557
      %v1559 = vrot.slane %v1085, 1
      %v1560 = vrot.slane %v1081, 2
      %v1561 = vor.u32 %v1559, %v1560
      %v1562 = vsel %vm1539, %v1557, %v1561
      %v1563 = vrot.slane %v1093, 1
      %v1564 = vrot.slane %v1089, 2
      %v1565 = vor.u32 %v1563, %v1564
      %v1566 = vsel %vm1539, %v1561, %v1565
      %v1567 = vrot.slane %v1101, 1
      %v1568 = vrot.slane %v1097, 2
      %v1569 = vor.u32 %v1567, %v1568
      %v1570 = vsel %vm1539, %v1565, %v1569
      %v1571 = vrot.slane %v1109, 1
      %v1572 = vrot.slane %v1105, 2
      %v1573 = vor.u32 %v1571, %v1572
      %v1574 = vsel %vm1539, %v1569, %v1573
      %v1576 = vshrl.u32 %v1538, 16
      %v1578 = vrot.slane %v1576, 1
      %v1579 = vshll.u32 %v1538, 16
      %v1581 = vrot.slane %v1579, 2
      %v1582 = vor.u32 %v1578, %v1581
      %v1583 = vsel %vm1539, %v1573, %v1582
      %v1610 = vunpack.c.l.b16 %v1518
      %v1611 = vunpack.c.l.b16 %v1519
      %v1612 = vunpack.c.l.b16 %v1520
      %v1613 = vunpack.c.l.b16 %v1521
      %v1614 = vunpack.c.l.b16 %v1522
      %v1615 = vunpack.c.l.b16 %v1523
      %v1616 = vunpack.c.l.b16 %v1524
      %v1617 = vunpack.c.l.b16 %v1525
      %v1618 = vunpack.c.l.b16 %v1526
      %v1619 = vunpack.c.l.b16 %v1527
      %v1620 = vunpack.c.l.b16 %v1528
      %v1621 = vunpack.c.l.b16 %v1529
      %v1622 = vunpack.c.l.b16 %v1530
      %v1623 = vunpack.c.l.b16 %v1531
      %v1624 = vunpack.c.l.b16 %v1532
      %v1625 = vunpack.c.l.b16 %v1533
      %v1626 = vpack.c.b16 %v1611, %v1610
      %v1627 = vpack.c.b16 %v1613, %v1612
      %v1628 = vpack.c.b16 %v1615, %v1614
      %v1629 = vpack.c.b16 %v1617, %v1616
      %v1630 = vpack.c.b16 %v1619, %v1618
      %v1631 = vpack.c.b16 %v1621, %v1620
      %v1632 = vpack.c.b16 %v1623, %v1622
      %v1633 = vpack.c.b16 %v1625, %v1624
      %1642 = vmatpush.bf16.msra.mxu0 %v1633
      %1643 = vmatpush.bf16.msra.mxu0 %v1632
      %1644 = vmatpush.bf16.msra.mxu0 %v1631
      %1645 = vmatpush.bf16.msra.mxu0 %v1630
      %1646 = vmatpush.bf16.msra.mxu0 %v1629
      %1647 = vmatpush.bf16.msra.mxu0 %v1628
      %1648 = vmatpush.bf16.msra.mxu0 %v1627
      %1649 = vmatpush.bf16.msra.mxu0 %v1626
      %1650 = vmatmul.bf16.gmra.mxu0 %v1546
      %v1651 = vpop.f32.mrf.mxu0
      %v1652 = vadd.f32 0.0, %v1651
      %v1653 = vpop.f32.mrf.mxu0
      %v1654 = vadd.f32 0.0, %v1653
      %1655 = vmatmul.bf16.gmra.mxu0 %v1550
      %v1656 = vpop.f32.mrf.mxu0
      %v1657 = vadd.f32 0.0, %v1656
      %v1658 = vpop.f32.mrf.mxu0
      %v1659 = vadd.f32 0.0, %v1658
      %1660 = vmatmul.bf16.gmra.mxu0 %v1554
      %v1661 = vpop.f32.mrf.mxu0
      %v1662 = vadd.f32 0.0, %v1661
      %v1663 = vpop.f32.mrf.mxu0
      %v1664 = vadd.f32 0.0, %v1663
      %1665 = vmatmul.bf16.gmra.mxu0 %v1558
      %v1666 = vpop.f32.mrf.mxu0
      %v1667 = vadd.f32 0.0, %v1666
      %v1668 = vpop.f32.mrf.mxu0
      %v1669 = vadd.f32 0.0, %v1668
      %1670 = vmatmul.bf16.gmra.mxu0 %v1562
      %v1671 = vpop.f32.mrf.mxu0
      %v1672 = vadd.f32 0.0, %v1671
      %v1673 = vpop.f32.mrf.mxu0
      %v1674 = vadd.f32 0.0, %v1673
      %1675 = vmatmul.bf16.gmra.mxu0 %v1566
      %v1676 = vpop.f32.mrf.mxu0
      %v1677 = vadd.f32 0.0, %v1676
      %v1678 = vpop.f32.mrf.mxu0
      %v1679 = vadd.f32 0.0, %v1678
      %1680 = vmatmul.bf16.gmra.mxu0 %v1570
      %v1681 = vpop.f32.mrf.mxu0
      %v1682 = vadd.f32 0.0, %v1681
      %v1683 = vpop.f32.mrf.mxu0
      %v1684 = vadd.f32 0.0, %v1683
      %1685 = vmatmul.bf16.gmra.mxu0 %v1574
      %v1686 = vpop.f32.mrf.mxu0
      %v1687 = vadd.f32 0.0, %v1686
      %v1688 = vpop.f32.mrf.mxu0
      %v1689 = vadd.f32 0.0, %v1688
      %1690 = vmatmul.bf16.gmra.mxu0 %v1583
      %v1691 = vpop.f32.mrf.mxu0
      %v1692 = vadd.f32 0.0, %v1691
      %v1693 = vpop.f32.mrf.mxu0
      %v1694 = vadd.f32 0.0, %v1693
      %1695 = vmatmul.bf16.gmra.mxu0 %v1582
      %v1696 = vpop.f32.mrf.mxu0
      %v1697 = vadd.f32 0.0, %v1696
      %v1698 = vpop.f32.mrf.mxu0
      %1699 = vdwg.mxu0
      %v1700 = vadd.f32 %v1498, %v1652
      %v1701 = vadd.f32 %v1499, %v1654
      %v1702 = vadd.f32 %v1500, %v1657
      %v1703 = vadd.f32 %v1501, %v1659
      %v1704 = vadd.f32 %v1502, %v1662
      %v1705 = vadd.f32 %v1503, %v1664
      %v1706 = vadd.f32 %v1504, %v1667
      %v1707 = vadd.f32 %v1505, %v1669
      %v1708 = vadd.f32 %v1506, %v1672
      %v1709 = vadd.f32 %v1507, %v1674
      %v1710 = vadd.f32 %v1508, %v1677
      %v1711 = vadd.f32 %v1509, %v1679
      %v1712 = vadd.f32 %v1510, %v1682
      %v1713 = vadd.f32 %v1511, %v1684
      %v1714 = vadd.f32 %v1512, %v1687
      %v1715 = vadd.f32 %v1513, %v1689
      %v1716 = vadd.f32 %v1514, %v1692
      %v1717 = vadd.f32 %v1515, %v1694
      %v1718 = vadd.f32 %v1516, %v1697
      %s1719 = scalar_lea.vmem %s2, 256
      %v1720 = vld [vmem:[%s1719] sm:$0xf]
      %v1721 = vld [vmem:[%s1719 + $0x4] sm:$0xf]
      %v1722 = vld [vmem:[%s1719 + $0x8] sm:$0xf]
      %v1723 = vld [vmem:[%s1719 + $0xc] sm:$0xf]
      %v1724 = vld [vmem:[%s1719 + $0x10] sm:$0xf]
      %v1725 = vld [vmem:[%s1719 + $0x14] sm:$0xf]
      %v1726 = vld [vmem:[%s1719 + $0x18] sm:$0xf]
      %v1727 = vld [vmem:[%s1719 + $0x1c] sm:$0xf]
      %v1728 = vld [vmem:[%s1719 + $0x20] sm:$0xf]
      %v1729 = vld [vmem:[%s1719 + $0x24] sm:$0xf]
      %v1730 = vld [vmem:[%s1719 + $0x28] sm:$0xf]
      %v1731 = vld [vmem:[%s1719 + $0x2c] sm:$0xf]
      %v1732 = vld [vmem:[%s1719 + $0x30] sm:$0xf]
      %v1733 = vld [vmem:[%s1719 + $0x34] sm:$0xf]
      %v1734 = vld [vmem:[%s1719 + $0x38] sm:$0xf]
      %v1735 = vld [vmem:[%s1719 + $0x3c] sm:$0xf]
      %vm1736 = vcmask 1045504
      %v1737 = vrot.slane %v1023, 2
      %v1738 = vrot.slane %v1024, 2
      %v1739 = vsel %vm1736, %v1737, %v1738
      %v1740 = vrot.slane %v1025, 2
      %v1741 = vsel %vm1736, %v1738, %v1740
      %v1742 = vrot.slane %v1026, 2
      %v1743 = vsel %vm1736, %v1740, %v1742
      %v1744 = vrot.slane %v1027, 2
      %v1745 = vsel %vm1736, %v1742, %v1744
      %v1746 = vrot.slane %v1028, 2
      %v1747 = vsel %vm1736, %v1744, %v1746
      %v1748 = vrot.slane %v1029, 2
      %v1749 = vsel %vm1736, %v1746, %v1748
      %v1750 = vrot.slane %v1030, 2
      %v1751 = vsel %vm1736, %v1748, %v1750
      %v1752 = vrot.slane %v1031, 2
      %v1753 = vsel %vm1736, %v1750, %v1752
      %v1754 = vrot.slane %v1538, 2
      %v1755 = vsel %vm1736, %v1752, %v1754
      %v1782 = vunpack.c.l.b16 %v1720
      %v1783 = vunpack.c.l.b16 %v1721
      %v1784 = vunpack.c.l.b16 %v1722
      %v1785 = vunpack.c.l.b16 %v1723
      %v1786 = vunpack.c.l.b16 %v1724
      %v1787 = vunpack.c.l.b16 %v1725
      %v1788 = vunpack.c.l.b16 %v1726
      %v1789 = vunpack.c.l.b16 %v1727
      %v1790 = vunpack.c.l.b16 %v1728
      %v1791 = vunpack.c.l.b16 %v1729
      %v1792 = vunpack.c.l.b16 %v1730
      %v1793 = vunpack.c.l.b16 %v1731
      %v1794 = vunpack.c.l.b16 %v1732
      %v1795 = vunpack.c.l.b16 %v1733
      %v1796 = vunpack.c.l.b16 %v1734
      %v1797 = vunpack.c.l.b16 %v1735
      %v1798 = vpack.c.b16 %v1783, %v1782
      %v1799 = vpack.c.b16 %v1785, %v1784
      %v1800 = vpack.c.b16 %v1787, %v1786
      %v1801 = vpack.c.b16 %v1789, %v1788
      %v1802 = vpack.c.b16 %v1791, %v1790
      %v1803 = vpack.c.b16 %v1793, %v1792
      %v1804 = vpack.c.b16 %v1795, %v1794
      %v1805 = vpack.c.b16 %v1797, %v1796
      %1814 = vmatpush.bf16.msra.mxu0 %v1805
      %1815 = vmatpush.bf16.msra.mxu0 %v1804
      %1816 = vmatpush.bf16.msra.mxu0 %v1803
      %1817 = vmatpush.bf16.msra.mxu0 %v1802
      %1818 = vmatpush.bf16.msra.mxu0 %v1801
      %1819 = vmatpush.bf16.msra.mxu0 %v1800
      %1820 = vmatpush.bf16.msra.mxu0 %v1799
      %1821 = vmatpush.bf16.msra.mxu0 %v1798
      %1822 = vmatmul.bf16.gmra.mxu0 %v1739
      %v1823 = vpop.f32.mrf.mxu0
      %v1824 = vadd.f32 0.0, %v1823
      %v1825 = vpop.f32.mrf.mxu0
      %v1826 = vadd.f32 0.0, %v1825
      %1827 = vmatmul.bf16.gmra.mxu0 %v1741
      %v1828 = vpop.f32.mrf.mxu0
      %v1829 = vadd.f32 0.0, %v1828
      %v1830 = vpop.f32.mrf.mxu0
      %v1831 = vadd.f32 0.0, %v1830
      %1832 = vmatmul.bf16.gmra.mxu0 %v1743
      %v1833 = vpop.f32.mrf.mxu0
      %v1834 = vadd.f32 0.0, %v1833
      %v1835 = vpop.f32.mrf.mxu0
      %v1836 = vadd.f32 0.0, %v1835
      %1837 = vmatmul.bf16.gmra.mxu0 %v1745
      %v1838 = vpop.f32.mrf.mxu0
      %v1839 = vadd.f32 0.0, %v1838
      %v1840 = vpop.f32.mrf.mxu0
      %v1841 = vadd.f32 0.0, %v1840
      %1842 = vmatmul.bf16.gmra.mxu0 %v1747
      %v1843 = vpop.f32.mrf.mxu0
      %v1844 = vadd.f32 0.0, %v1843
      %v1845 = vpop.f32.mrf.mxu0
      %v1846 = vadd.f32 0.0, %v1845
      %1847 = vmatmul.bf16.gmra.mxu0 %v1749
      %v1848 = vpop.f32.mrf.mxu0
      %v1849 = vadd.f32 0.0, %v1848
      %v1850 = vpop.f32.mrf.mxu0
      %v1851 = vadd.f32 0.0, %v1850
      %1852 = vmatmul.bf16.gmra.mxu0 %v1751
      %v1853 = vpop.f32.mrf.mxu0
      %v1854 = vadd.f32 0.0, %v1853
      %v1855 = vpop.f32.mrf.mxu0
      %v1856 = vadd.f32 0.0, %v1855
      %1857 = vmatmul.bf16.gmra.mxu0 %v1753
      %v1858 = vpop.f32.mrf.mxu0
      %v1859 = vadd.f32 0.0, %v1858
      %v1860 = vpop.f32.mrf.mxu0
      %v1861 = vadd.f32 0.0, %v1860
      %1862 = vmatmul.bf16.gmra.mxu0 %v1755
      %v1863 = vpop.f32.mrf.mxu0
      %v1864 = vadd.f32 0.0, %v1863
      %v1865 = vpop.f32.mrf.mxu0
      %v1866 = vadd.f32 0.0, %v1865
      %1867 = vmatmul.bf16.gmra.mxu0 %v1754
      %v1868 = vpop.f32.mrf.mxu0
      %v1869 = vadd.f32 0.0, %v1868
      %v1870 = vpop.f32.mrf.mxu0
      %1871 = vdwg.mxu0
      %v1872 = vadd.f32 %v1700, %v1824
      %v1873 = vadd.f32 %v1701, %v1826
      %v1874 = vadd.f32 %v1702, %v1829
      %v1875 = vadd.f32 %v1703, %v1831
      %v1876 = vadd.f32 %v1704, %v1834
      %v1877 = vadd.f32 %v1705, %v1836
      %v1878 = vadd.f32 %v1706, %v1839
      %v1879 = vadd.f32 %v1707, %v1841
      %v1880 = vadd.f32 %v1708, %v1844
      %v1881 = vadd.f32 %v1709, %v1846
      %v1882 = vadd.f32 %v1710, %v1849
      %v1883 = vadd.f32 %v1711, %v1851
      %v1884 = vadd.f32 %v1712, %v1854
      %v1885 = vadd.f32 %v1713, %v1856
      %v1886 = vadd.f32 %v1714, %v1859
      %v1887 = vadd.f32 %v1715, %v1861
      %v1888 = vadd.f32 %v1716, %v1864
      %v1889 = vadd.f32 %v1717, %v1866
      %v1890 = vadd.f32 %v1718, %v1869
      %s1891 = scalar_lea.vmem %s2, 320
      %v1892 = vld [vmem:[%s1891] sm:$0xf]
      %v1893 = vld [vmem:[%s1891 + $0x4] sm:$0xf]
      %v1894 = vld [vmem:[%s1891 + $0x8] sm:$0xf]
      %v1895 = vld [vmem:[%s1891 + $0xc] sm:$0xf]
      %v1896 = vld [vmem:[%s1891 + $0x10] sm:$0xf]
      %v1897 = vld [vmem:[%s1891 + $0x14] sm:$0xf]
      %v1898 = vld [vmem:[%s1891 + $0x18] sm:$0xf]
      %v1899 = vld [vmem:[%s1891 + $0x1c] sm:$0xf]
      %v1900 = vld [vmem:[%s1891 + $0x20] sm:$0xf]
      %v1901 = vld [vmem:[%s1891 + $0x24] sm:$0xf]
      %v1902 = vld [vmem:[%s1891 + $0x28] sm:$0xf]
      %v1903 = vld [vmem:[%s1891 + $0x2c] sm:$0xf]
      %v1904 = vld [vmem:[%s1891 + $0x30] sm:$0xf]
      %v1905 = vld [vmem:[%s1891 + $0x34] sm:$0xf]
      %v1906 = vld [vmem:[%s1891 + $0x38] sm:$0xf]
      %v1907 = vld [vmem:[%s1891 + $0x3c] sm:$0xf]
      %vm1908 = vsmask.f32 5376
      %v1909 = vrot.slane %v1045, 2
      %v1910 = vrot.slane %v1041, 3
      %v1911 = vor.u32 %v1909, %v1910
      %v1912 = vrot.slane %v1053, 2
      %v1913 = vrot.slane %v1049, 3
      %v1914 = vor.u32 %v1912, %v1913
      %v1915 = vsel %vm1908, %v1911, %v1914
      %v1916 = vrot.slane %v1061, 2
      %v1917 = vrot.slane %v1057, 3
      %v1918 = vor.u32 %v1916, %v1917
      %v1919 = vsel %vm1908, %v1914, %v1918
      %v1920 = vrot.slane %v1069, 2
      %v1921 = vrot.slane %v1065, 3
      %v1922 = vor.u32 %v1920, %v1921
      %v1923 = vsel %vm1908, %v1918, %v1922
      %v1924 = vrot.slane %v1077, 2
      %v1925 = vrot.slane %v1073, 3
      %v1926 = vor.u32 %v1924, %v1925
      %v1927 = vsel %vm1908, %v1922, %v1926
      %v1928 = vrot.slane %v1085, 2
      %v1929 = vrot.slane %v1081, 3
      %v1930 = vor.u32 %v1928, %v1929
      %v1931 = vsel %vm1908, %v1926, %v1930
      %v1932 = vrot.slane %v1093, 2
      %v1933 = vrot.slane %v1089, 3
      %v1934 = vor.u32 %v1932, %v1933
      %v1935 = vsel %vm1908, %v1930, %v1934
      %v1936 = vrot.slane %v1101, 2
      %v1937 = vrot.slane %v1097, 3
      %v1938 = vor.u32 %v1936, %v1937
      %v1939 = vsel %vm1908, %v1934, %v1938
      %v1940 = vrot.slane %v1109, 2
      %v1941 = vrot.slane %v1105, 3
      %v1942 = vor.u32 %v1940, %v1941
      %v1943 = vsel %vm1908, %v1938, %v1942
      %v1944 = vrot.slane %v1576, 2
      %v1945 = vrot.slane %v1579, 3
      %v1946 = vor.u32 %v1944, %v1945
      %v1947 = vsel %vm1908, %v1942, %v1946
      %v1974 = vunpack.c.l.b16 %v1892
      %v1975 = vunpack.c.l.b16 %v1893
      %v1976 = vunpack.c.l.b16 %v1894
      %v1977 = vunpack.c.l.b16 %v1895
      %v1978 = vunpack.c.l.b16 %v1896
      %v1979 = vunpack.c.l.b16 %v1897
      %v1980 = vunpack.c.l.b16 %v1898
      %v1981 = vunpack.c.l.b16 %v1899
      %v1982 = vunpack.c.l.b16 %v1900
      %v1983 = vunpack.c.l.b16 %v1901
      %v1984 = vunpack.c.l.b16 %v1902
      %v1985 = vunpack.c.l.b16 %v1903
      %v1986 = vunpack.c.l.b16 %v1904
      %v1987 = vunpack.c.l.b16 %v1905
      %v1988 = vunpack.c.l.b16 %v1906
      %v1989 = vunpack.c.l.b16 %v1907
      %v1990 = vpack.c.b16 %v1975, %v1974
      %v1991 = vpack.c.b16 %v1977, %v1976
      %v1992 = vpack.c.b16 %v1979, %v1978
      %v1993 = vpack.c.b16 %v1981, %v1980
      %v1994 = vpack.c.b16 %v1983, %v1982
      %v1995 = vpack.c.b16 %v1985, %v1984
      %v1996 = vpack.c.b16 %v1987, %v1986
      %v1997 = vpack.c.b16 %v1989, %v1988
      %2006 = vmatpush.bf16.msra.mxu0 %v1997
      %2007 = vmatpush.bf16.msra.mxu0 %v1996
      %2008 = vmatpush.bf16.msra.mxu0 %v1995
      %2009 = vmatpush.bf16.msra.mxu0 %v1994
      %2010 = vmatpush.bf16.msra.mxu0 %v1993
      %2011 = vmatpush.bf16.msra.mxu0 %v1992
      %2012 = vmatpush.bf16.msra.mxu0 %v1991
      %2013 = vmatpush.bf16.msra.mxu0 %v1990
      %2014 = vmatmul.bf16.gmra.mxu0 %v1915
      %v2015 = vpop.f32.mrf.mxu0
      %v2016 = vadd.f32 0.0, %v2015
      %v2017 = vpop.f32.mrf.mxu0
      %v2018 = vadd.f32 0.0, %v2017
      %2019 = vmatmul.bf16.gmra.mxu0 %v1919
      %v2020 = vpop.f32.mrf.mxu0
      %v2021 = vadd.f32 0.0, %v2020
      %v2022 = vpop.f32.mrf.mxu0
      %v2023 = vadd.f32 0.0, %v2022
      %2024 = vmatmul.bf16.gmra.mxu0 %v1923
      %v2025 = vpop.f32.mrf.mxu0
      %v2026 = vadd.f32 0.0, %v2025
      %v2027 = vpop.f32.mrf.mxu0
      %v2028 = vadd.f32 0.0, %v2027
      %2029 = vmatmul.bf16.gmra.mxu0 %v1927
      %v2030 = vpop.f32.mrf.mxu0
      %v2031 = vadd.f32 0.0, %v2030
      %v2032 = vpop.f32.mrf.mxu0
      %v2033 = vadd.f32 0.0, %v2032
      %2034 = vmatmul.bf16.gmra.mxu0 %v1931
      %v2035 = vpop.f32.mrf.mxu0
      %v2036 = vadd.f32 0.0, %v2035
      %v2037 = vpop.f32.mrf.mxu0
      %v2038 = vadd.f32 0.0, %v2037
      %2039 = vmatmul.bf16.gmra.mxu0 %v1935
      %v2040 = vpop.f32.mrf.mxu0
      %v2041 = vadd.f32 0.0, %v2040
      %v2042 = vpop.f32.mrf.mxu0
      %v2043 = vadd.f32 0.0, %v2042
      %2044 = vmatmul.bf16.gmra.mxu0 %v1939
      %v2045 = vpop.f32.mrf.mxu0
      %v2046 = vadd.f32 0.0, %v2045
      %v2047 = vpop.f32.mrf.mxu0
      %v2048 = vadd.f32 0.0, %v2047
      %2049 = vmatmul.bf16.gmra.mxu0 %v1943
      %v2050 = vpop.f32.mrf.mxu0
      %v2051 = vadd.f32 0.0, %v2050
      %v2052 = vpop.f32.mrf.mxu0
      %v2053 = vadd.f32 0.0, %v2052
      %2054 = vmatmul.bf16.gmra.mxu0 %v1947
      %v2055 = vpop.f32.mrf.mxu0
      %v2056 = vadd.f32 0.0, %v2055
      %v2057 = vpop.f32.mrf.mxu0
      %v2058 = vadd.f32 0.0, %v2057
      %2059 = vmatmul.bf16.gmra.mxu0 %v1946
      %v2060 = vpop.f32.mrf.mxu0
      %v2061 = vadd.f32 0.0, %v2060
      %v2062 = vpop.f32.mrf.mxu0
      %2063 = vdwg.mxu0
      %v2064 = vadd.f32 %v1872, %v2016
      %v2065 = vadd.f32 %v1873, %v2018
      %v2066 = vadd.f32 %v1874, %v2021
      %v2067 = vadd.f32 %v1875, %v2023
      %v2068 = vadd.f32 %v1876, %v2026
      %v2069 = vadd.f32 %v1877, %v2028
      %v2070 = vadd.f32 %v1878, %v2031
      %v2071 = vadd.f32 %v1879, %v2033
      %v2072 = vadd.f32 %v1880, %v2036
      %v2073 = vadd.f32 %v1881, %v2038
      %v2074 = vadd.f32 %v1882, %v2041
      %v2075 = vadd.f32 %v1883, %v2043
      %v2076 = vadd.f32 %v1884, %v2046
      %v2077 = vadd.f32 %v1885, %v2048
      %v2078 = vadd.f32 %v1886, %v2051
      %v2079 = vadd.f32 %v1887, %v2053
      %v2080 = vadd.f32 %v1888, %v2056
      %v2081 = vadd.f32 %v1889, %v2058
      %v2082 = vadd.f32 %v1890, %v2061
      %s2083 = scalar_lea.vmem %s2, 384
      %v2084 = vld [vmem:[%s2083] sm:$0xf]
      %v2085 = vld [vmem:[%s2083 + $0x4] sm:$0xf]
      %v2086 = vld [vmem:[%s2083 + $0x8] sm:$0xf]
      %v2087 = vld [vmem:[%s2083 + $0xc] sm:$0xf]
      %v2088 = vld [vmem:[%s2083 + $0x10] sm:$0xf]
      %v2089 = vld [vmem:[%s2083 + $0x14] sm:$0xf]
      %v2090 = vld [vmem:[%s2083 + $0x18] sm:$0xf]
      %v2091 = vld [vmem:[%s2083 + $0x1c] sm:$0xf]
      %v2092 = vld [vmem:[%s2083 + $0x20] sm:$0xf]
      %v2093 = vld [vmem:[%s2083 + $0x24] sm:$0xf]
      %v2094 = vld [vmem:[%s2083 + $0x28] sm:$0xf]
      %v2095 = vld [vmem:[%s2083 + $0x2c] sm:$0xf]
      %v2096 = vld [vmem:[%s2083 + $0x30] sm:$0xf]
      %v2097 = vld [vmem:[%s2083 + $0x34] sm:$0xf]
      %v2098 = vld [vmem:[%s2083 + $0x38] sm:$0xf]
      %v2099 = vld [vmem:[%s2083 + $0x3c] sm:$0xf]
      %v2102 = vunpack.c.l.b16 %v947
      %v2103 = vunpack.c.l.b16 %v948
      %v2104 = vpack.c.b16 %v2103, %v2102
      %vm2105 = vcmask 1044480
      %v2106 = vrot.slane %v1024, 3
      %v2107 = vrot.slane %v1025, 3
      %v2108 = vsel %vm2105, %v2106, %v2107
      %v2109 = vrot.slane %v1026, 3
      %v2110 = vsel %vm2105, %v2107, %v2109
      %v2111 = vrot.slane %v1027, 3
      %v2112 = vsel %vm2105, %v2109, %v2111
      %v2113 = vrot.slane %v1028, 3
      %v2114 = vsel %vm2105, %v2111, %v2113
      %v2115 = vrot.slane %v1029, 3
      %v2116 = vsel %vm2105, %v2113, %v2115
      %v2117 = vrot.slane %v1030, 3
      %v2118 = vsel %vm2105, %v2115, %v2117
      %v2119 = vrot.slane %v1031, 3
      %v2120 = vsel %vm2105, %v2117, %v2119
      %v2121 = vrot.slane %v1538, 3
      %v2122 = vsel %vm2105, %v2119, %v2121
      %v2123 = vrot.slane %v2104, 3
      %v2124 = vsel %vm2105, %v2121, %v2123
      %v2151 = vunpack.c.l.b16 %v2084
      %v2152 = vunpack.c.l.b16 %v2085
      %v2153 = vunpack.c.l.b16 %v2086
      %v2154 = vunpack.c.l.b16 %v2087
      %v2155 = vunpack.c.l.b16 %v2088
      %v2156 = vunpack.c.l.b16 %v2089
      %v2157 = vunpack.c.l.b16 %v2090
      %v2158 = vunpack.c.l.b16 %v2091
      %v2159 = vunpack.c.l.b16 %v2092
      %v2160 = vunpack.c.l.b16 %v2093
      %v2161 = vunpack.c.l.b16 %v2094
      %v2162 = vunpack.c.l.b16 %v2095
      %v2163 = vunpack.c.l.b16 %v2096
      %v2164 = vunpack.c.l.b16 %v2097
      %v2165 = vunpack.c.l.b16 %v2098
      %v2166 = vunpack.c.l.b16 %v2099
      %v2167 = vpack.c.b16 %v2152, %v2151
      %v2168 = vpack.c.b16 %v2154, %v2153
      %v2169 = vpack.c.b16 %v2156, %v2155
      %v2170 = vpack.c.b16 %v2158, %v2157
      %v2171 = vpack.c.b16 %v2160, %v2159
      %v2172 = vpack.c.b16 %v2162, %v2161
      %v2173 = vpack.c.b16 %v2164, %v2163
      %v2174 = vpack.c.b16 %v2166, %v2165
      %2183 = vmatpush.bf16.msra.mxu0 %v2174
      %2184 = vmatpush.bf16.msra.mxu0 %v2173
      %2185 = vmatpush.bf16.msra.mxu0 %v2172
      %2186 = vmatpush.bf16.msra.mxu0 %v2171
      %2187 = vmatpush.bf16.msra.mxu0 %v2170
      %2188 = vmatpush.bf16.msra.mxu0 %v2169
      %2189 = vmatpush.bf16.msra.mxu0 %v2168
      %2190 = vmatpush.bf16.msra.mxu0 %v2167
      %2191 = vmatmul.bf16.gmra.mxu0 %v2108
      %v2192 = vpop.f32.mrf.mxu0
      %v2193 = vadd.f32 0.0, %v2192
      %v2194 = vpop.f32.mrf.mxu0
      %v2195 = vadd.f32 0.0, %v2194
      %2196 = vmatmul.bf16.gmra.mxu0 %v2110
      %v2197 = vpop.f32.mrf.mxu0
      %v2198 = vadd.f32 0.0, %v2197
      %v2199 = vpop.f32.mrf.mxu0
      %v2200 = vadd.f32 0.0, %v2199
      %2201 = vmatmul.bf16.gmra.mxu0 %v2112
      %v2202 = vpop.f32.mrf.mxu0
      %v2203 = vadd.f32 0.0, %v2202
      %v2204 = vpop.f32.mrf.mxu0
      %v2205 = vadd.f32 0.0, %v2204
      %2206 = vmatmul.bf16.gmra.mxu0 %v2114
      %v2207 = vpop.f32.mrf.mxu0
      %v2208 = vadd.f32 0.0, %v2207
      %v2209 = vpop.f32.mrf.mxu0
      %v2210 = vadd.f32 0.0, %v2209
      %2211 = vmatmul.bf16.gmra.mxu0 %v2116
      %v2212 = vpop.f32.mrf.mxu0
      %v2213 = vadd.f32 0.0, %v2212
      %v2214 = vpop.f32.mrf.mxu0
      %v2215 = vadd.f32 0.0, %v2214
      %2216 = vmatmul.bf16.gmra.mxu0 %v2118
      %v2217 = vpop.f32.mrf.mxu0
      %v2218 = vadd.f32 0.0, %v2217
      %v2219 = vpop.f32.mrf.mxu0
      %v2220 = vadd.f32 0.0, %v2219
      %2221 = vmatmul.bf16.gmra.mxu0 %v2120
      %v2222 = vpop.f32.mrf.mxu0
      %v2223 = vadd.f32 0.0, %v2222
      %v2224 = vpop.f32.mrf.mxu0
      %v2225 = vadd.f32 0.0, %v2224
      %2226 = vmatmul.bf16.gmra.mxu0 %v2122
      %v2227 = vpop.f32.mrf.mxu0
      %v2228 = vadd.f32 0.0, %v2227
      %v2229 = vpop.f32.mrf.mxu0
      %v2230 = vadd.f32 0.0, %v2229
      %2231 = vmatmul.bf16.gmra.mxu0 %v2124
      %v2232 = vpop.f32.mrf.mxu0
      %v2233 = vadd.f32 0.0, %v2232
      %v2234 = vpop.f32.mrf.mxu0
      %v2235 = vadd.f32 0.0, %v2234
      %2236 = vmatmul.bf16.gmra.mxu0 %v2123
      %v2237 = vpop.f32.mrf.mxu0
      %v2238 = vadd.f32 0.0, %v2237
      %v2239 = vpop.f32.mrf.mxu0
      %2240 = vdwg.mxu0
      %v2241 = vadd.f32 %v2064, %v2193
      %v2242 = vadd.f32 %v2065, %v2195
      %v2243 = vadd.f32 %v2066, %v2198
      %v2244 = vadd.f32 %v2067, %v2200
      %v2245 = vadd.f32 %v2068, %v2203
      %v2246 = vadd.f32 %v2069, %v2205
      %v2247 = vadd.f32 %v2070, %v2208
      %v2248 = vadd.f32 %v2071, %v2210
      %v2249 = vadd.f32 %v2072, %v2213
      %v2250 = vadd.f32 %v2073, %v2215
      %v2251 = vadd.f32 %v2074, %v2218
      %v2252 = vadd.f32 %v2075, %v2220
      %v2253 = vadd.f32 %v2076, %v2223
      %v2254 = vadd.f32 %v2077, %v2225
      %v2255 = vadd.f32 %v2078, %v2228
      %v2256 = vadd.f32 %v2079, %v2230
      %v2257 = vadd.f32 %v2080, %v2233
      %v2258 = vadd.f32 %v2081, %v2235
      %v2259 = vadd.f32 %v2082, %v2238
      %s2260 = scalar_lea.vmem %s2, 448
      %v2261 = vld [vmem:[%s2260] sm:$0xf]
      %v2262 = vld [vmem:[%s2260 + $0x4] sm:$0xf]
      %v2263 = vld [vmem:[%s2260 + $0x8] sm:$0xf]
      %v2264 = vld [vmem:[%s2260 + $0xc] sm:$0xf]
      %v2265 = vld [vmem:[%s2260 + $0x10] sm:$0xf]
      %v2266 = vld [vmem:[%s2260 + $0x14] sm:$0xf]
      %v2267 = vld [vmem:[%s2260 + $0x18] sm:$0xf]
      %v2268 = vld [vmem:[%s2260 + $0x1c] sm:$0xf]
      %v2269 = vld [vmem:[%s2260 + $0x20] sm:$0xf]
      %v2270 = vld [vmem:[%s2260 + $0x24] sm:$0xf]
      %v2271 = vld [vmem:[%s2260 + $0x28] sm:$0xf]
      %v2272 = vld [vmem:[%s2260 + $0x2c] sm:$0xf]
      %v2273 = vld [vmem:[%s2260 + $0x30] sm:$0xf]
      %v2274 = vld [vmem:[%s2260 + $0x34] sm:$0xf]
      %v2275 = vld [vmem:[%s2260 + $0x38] sm:$0xf]
      %v2276 = vld [vmem:[%s2260 + $0x3c] sm:$0xf]
      %vm2277 = vsmask.f32 4352
      %v2278 = vrot.slane %v1053, 3
      %v2279 = vrot.slane %v1049, 4
      %v2280 = vor.u32 %v2278, %v2279
      %v2281 = vrot.slane %v1061, 3
      %v2282 = vrot.slane %v1057, 4
      %v2283 = vor.u32 %v2281, %v2282
      %v2284 = vsel %vm2277, %v2280, %v2283
      %v2285 = vrot.slane %v1069, 3
      %v2286 = vrot.slane %v1065, 4
      %v2287 = vor.u32 %v2285, %v2286
      %v2288 = vsel %vm2277, %v2283, %v2287
      %v2289 = vrot.slane %v1077, 3
      %v2290 = vrot.slane %v1073, 4
      %v2291 = vor.u32 %v2289, %v2290
      %v2292 = vsel %vm2277, %v2287, %v2291
      %v2293 = vrot.slane %v1085, 3
      %v2294 = vrot.slane %v1081, 4
      %v2295 = vor.u32 %v2293, %v2294
      %v2296 = vsel %vm2277, %v2291, %v2295
      %v2297 = vrot.slane %v1093, 3
      %v2298 = vrot.slane %v1089, 4
      %v2299 = vor.u32 %v2297, %v2298
      %v2300 = vsel %vm2277, %v2295, %v2299
      %v2301 = vrot.slane %v1101, 3
      %v2302 = vrot.slane %v1097, 4
      %v2303 = vor.u32 %v2301, %v2302
      %v2304 = vsel %vm2277, %v2299, %v2303
      %v2305 = vrot.slane %v1109, 3
      %v2306 = vrot.slane %v1105, 4
      %v2307 = vor.u32 %v2305, %v2306
      %v2308 = vsel %vm2277, %v2303, %v2307
      %v2309 = vrot.slane %v1576, 3
      %v2310 = vrot.slane %v1579, 4
      %v2311 = vor.u32 %v2309, %v2310
      %v2312 = vsel %vm2277, %v2307, %v2311
      %v2314 = vshrl.u32 %v2104, 16
      %v2316 = vrot.slane %v2314, 3
      %v2317 = vshll.u32 %v2104, 16
      %v2319 = vrot.slane %v2317, 4
      %v2320 = vor.u32 %v2316, %v2319
      %v2321 = vsel %vm2277, %v2311, %v2320
      %v2348 = vunpack.c.l.b16 %v2261
      %v2349 = vunpack.c.l.b16 %v2262
      %v2350 = vunpack.c.l.b16 %v2263
      %v2351 = vunpack.c.l.b16 %v2264
      %v2352 = vunpack.c.l.b16 %v2265
      %v2353 = vunpack.c.l.b16 %v2266
      %v2354 = vunpack.c.l.b16 %v2267
      %v2355 = vunpack.c.l.b16 %v2268
      %v2356 = vunpack.c.l.b16 %v2269
      %v2357 = vunpack.c.l.b16 %v2270
      %v2358 = vunpack.c.l.b16 %v2271
      %v2359 = vunpack.c.l.b16 %v2272
      %v2360 = vunpack.c.l.b16 %v2273
      %v2361 = vunpack.c.l.b16 %v2274
      %v2362 = vunpack.c.l.b16 %v2275
      %v2363 = vunpack.c.l.b16 %v2276
      %v2364 = vpack.c.b16 %v2349, %v2348
      %v2365 = vpack.c.b16 %v2351, %v2350
      %v2366 = vpack.c.b16 %v2353, %v2352
      %v2367 = vpack.c.b16 %v2355, %v2354
      %v2368 = vpack.c.b16 %v2357, %v2356
      %v2369 = vpack.c.b16 %v2359, %v2358
      %v2370 = vpack.c.b16 %v2361, %v2360
      %v2371 = vpack.c.b16 %v2363, %v2362
      %2380 = vmatpush.bf16.msra.mxu0 %v2371
      %2381 = vmatpush.bf16.msra.mxu0 %v2370
      %2382 = vmatpush.bf16.msra.mxu0 %v2369
      %2383 = vmatpush.bf16.msra.mxu0 %v2368
      %2384 = vmatpush.bf16.msra.mxu0 %v2367
      %2385 = vmatpush.bf16.msra.mxu0 %v2366
      %2386 = vmatpush.bf16.msra.mxu0 %v2365
      %2387 = vmatpush.bf16.msra.mxu0 %v2364
      %2388 = vmatmul.bf16.gmra.mxu0 %v2284
      %v2389 = vpop.f32.mrf.mxu0
      %v2390 = vadd.f32 0.0, %v2389
      %v2391 = vpop.f32.mrf.mxu0
      %v2392 = vadd.f32 0.0, %v2391
      %2393 = vmatmul.bf16.gmra.mxu0 %v2288
      %v2394 = vpop.f32.mrf.mxu0
      %v2395 = vadd.f32 0.0, %v2394
      %v2396 = vpop.f32.mrf.mxu0
      %v2397 = vadd.f32 0.0, %v2396
      %2398 = vmatmul.bf16.gmra.mxu0 %v2292
      %v2399 = vpop.f32.mrf.mxu0
      %v2400 = vadd.f32 0.0, %v2399
      %v2401 = vpop.f32.mrf.mxu0
      %v2402 = vadd.f32 0.0, %v2401
      %2403 = vmatmul.bf16.gmra.mxu0 %v2296
      %v2404 = vpop.f32.mrf.mxu0
      %v2405 = vadd.f32 0.0, %v2404
      %v2406 = vpop.f32.mrf.mxu0
      %v2407 = vadd.f32 0.0, %v2406
      %2408 = vmatmul.bf16.gmra.mxu0 %v2300
      %v2409 = vpop.f32.mrf.mxu0
      %v2410 = vadd.f32 0.0, %v2409
      %v2411 = vpop.f32.mrf.mxu0
      %v2412 = vadd.f32 0.0, %v2411
      %2413 = vmatmul.bf16.gmra.mxu0 %v2304
      %v2414 = vpop.f32.mrf.mxu0
      %v2415 = vadd.f32 0.0, %v2414
      %v2416 = vpop.f32.mrf.mxu0
      %v2417 = vadd.f32 0.0, %v2416
      %2418 = vmatmul.bf16.gmra.mxu0 %v2308
      %v2419 = vpop.f32.mrf.mxu0
      %v2420 = vadd.f32 0.0, %v2419
      %v2421 = vpop.f32.mrf.mxu0
      %v2422 = vadd.f32 0.0, %v2421
      %2423 = vmatmul.bf16.gmra.mxu0 %v2312
      %v2424 = vpop.f32.mrf.mxu0
      %v2425 = vadd.f32 0.0, %v2424
      %v2426 = vpop.f32.mrf.mxu0
      %v2427 = vadd.f32 0.0, %v2426
      %2428 = vmatmul.bf16.gmra.mxu0 %v2321
      %v2429 = vpop.f32.mrf.mxu0
      %v2430 = vadd.f32 0.0, %v2429
      %v2431 = vpop.f32.mrf.mxu0
      %v2432 = vadd.f32 0.0, %v2431
      %2433 = vmatmul.bf16.gmra.mxu0 %v2320
      %v2434 = vpop.f32.mrf.mxu0
      %v2435 = vadd.f32 0.0, %v2434
      %v2436 = vpop.f32.mrf.mxu0
      %2437 = vdwg.mxu0
      %v2438 = vadd.f32 %v2241, %v2390
      %v2439 = vadd.f32 %v2242, %v2392
      %v2440 = vadd.f32 %v2243, %v2395
      %v2441 = vadd.f32 %v2244, %v2397
      %v2442 = vadd.f32 %v2245, %v2400
      %v2443 = vadd.f32 %v2246, %v2402
      %v2444 = vadd.f32 %v2247, %v2405
      %v2445 = vadd.f32 %v2248, %v2407
      %v2446 = vadd.f32 %v2249, %v2410
      %v2447 = vadd.f32 %v2250, %v2412
      %v2448 = vadd.f32 %v2251, %v2415
      %v2449 = vadd.f32 %v2252, %v2417
      %v2450 = vadd.f32 %v2253, %v2420
      %v2451 = vadd.f32 %v2254, %v2422
      %v2452 = vadd.f32 %v2255, %v2425
      %v2453 = vadd.f32 %v2256, %v2427
      %v2454 = vadd.f32 %v2257, %v2430
      %v2455 = vadd.f32 %v2258, %v2432
      %v2456 = vadd.f32 %v2259, %v2435
      %s2457 = scalar_lea.vmem %s2, 512
      %v2458 = vld [vmem:[%s2457] sm:$0xf]
      %v2459 = vld [vmem:[%s2457 + $0x4] sm:$0xf]
      %v2460 = vld [vmem:[%s2457 + $0x8] sm:$0xf]
      %v2461 = vld [vmem:[%s2457 + $0xc] sm:$0xf]
      %v2462 = vld [vmem:[%s2457 + $0x10] sm:$0xf]
      %v2463 = vld [vmem:[%s2457 + $0x14] sm:$0xf]
      %v2464 = vld [vmem:[%s2457 + $0x18] sm:$0xf]
      %v2465 = vld [vmem:[%s2457 + $0x1c] sm:$0xf]
      %v2466 = vld [vmem:[%s2457 + $0x20] sm:$0xf]
      %v2467 = vld [vmem:[%s2457 + $0x24] sm:$0xf]
      %v2468 = vld [vmem:[%s2457 + $0x28] sm:$0xf]
      %v2469 = vld [vmem:[%s2457 + $0x2c] sm:$0xf]
      %v2470 = vld [vmem:[%s2457 + $0x30] sm:$0xf]
      %v2471 = vld [vmem:[%s2457 + $0x34] sm:$0xf]
      %v2472 = vld [vmem:[%s2457 + $0x38] sm:$0xf]
      %v2473 = vld [vmem:[%s2457 + $0x3c] sm:$0xf]
      %v2474 = vpack.c.b16 %v1008, %v1007
      %v2475 = vpack.c.b16 %v1010, %v1009
      %v2476 = vpack.c.b16 %v1012, %v1011
      %v2477 = vpack.c.b16 %v1014, %v1013
      %v2478 = vpack.c.b16 %v1016, %v1015
      %v2479 = vpack.c.b16 %v1018, %v1017
      %v2480 = vpack.c.b16 %v1020, %v1019
      %v2481 = vpack.c.b16 %v1536, %v1021
      %v2482 = vpack.c.b16 %v2102, %v1537
      %v2483 = vpack.c.b16 %v2103, %v2103
      %v2510 = vunpack.c.l.b16 %v2458
      %v2511 = vunpack.c.l.b16 %v2459
      %v2512 = vunpack.c.l.b16 %v2460
      %v2513 = vunpack.c.l.b16 %v2461
      %v2514 = vunpack.c.l.b16 %v2462
      %v2515 = vunpack.c.l.b16 %v2463
      %v2516 = vunpack.c.l.b16 %v2464
      %v2517 = vunpack.c.l.b16 %v2465
      %v2518 = vunpack.c.l.b16 %v2466
      %v2519 = vunpack.c.l.b16 %v2467
      %v2520 = vunpack.c.l.b16 %v2468
      %v2521 = vunpack.c.l.b16 %v2469
      %v2522 = vunpack.c.l.b16 %v2470
      %v2523 = vunpack.c.l.b16 %v2471
      %v2524 = vunpack.c.l.b16 %v2472
      %v2525 = vunpack.c.l.b16 %v2473
      %v2526 = vpack.c.b16 %v2511, %v2510
      %v2527 = vpack.c.b16 %v2513, %v2512
      %v2528 = vpack.c.b16 %v2515, %v2514
      %v2529 = vpack.c.b16 %v2517, %v2516
      %v2530 = vpack.c.b16 %v2519, %v2518
      %v2531 = vpack.c.b16 %v2521, %v2520
      %v2532 = vpack.c.b16 %v2523, %v2522
      %v2533 = vpack.c.b16 %v2525, %v2524
      %2542 = vmatpush.bf16.msra.mxu0 %v2533
      %2543 = vmatpush.bf16.msra.mxu0 %v2532
      %2544 = vmatpush.bf16.msra.mxu0 %v2531
      %2545 = vmatpush.bf16.msra.mxu0 %v2530
      %2546 = vmatpush.bf16.msra.mxu0 %v2529
      %2547 = vmatpush.bf16.msra.mxu0 %v2528
      %2548 = vmatpush.bf16.msra.mxu0 %v2527
      %2549 = vmatpush.bf16.msra.mxu0 %v2526
      %2550 = vmatmul.bf16.gmra.mxu0 %v2474
      %v2551 = vpop.f32.mrf.mxu0
      %v2552 = vadd.f32 0.0, %v2551
      %v2553 = vpop.f32.mrf.mxu0
      %v2554 = vadd.f32 0.0, %v2553
      %2555 = vmatmul.bf16.gmra.mxu0 %v2475
      %v2556 = vpop.f32.mrf.mxu0
      %v2557 = vadd.f32 0.0, %v2556
      %v2558 = vpop.f32.mrf.mxu0
      %v2559 = vadd.f32 0.0, %v2558
      %2560 = vmatmul.bf16.gmra.mxu0 %v2476
      %v2561 = vpop.f32.mrf.mxu0
      %v2562 = vadd.f32 0.0, %v2561
      %v2563 = vpop.f32.mrf.mxu0
      %v2564 = vadd.f32 0.0, %v2563
      %2565 = vmatmul.bf16.gmra.mxu0 %v2477
      %v2566 = vpop.f32.mrf.mxu0
      %v2567 = vadd.f32 0.0, %v2566
      %v2568 = vpop.f32.mrf.mxu0
      %v2569 = vadd.f32 0.0, %v2568
      %2570 = vmatmul.bf16.gmra.mxu0 %v2478
      %v2571 = vpop.f32.mrf.mxu0
      %v2572 = vadd.f32 0.0, %v2571
      %v2573 = vpop.f32.mrf.mxu0
      %v2574 = vadd.f32 0.0, %v2573
      %2575 = vmatmul.bf16.gmra.mxu0 %v2479
      %v2576 = vpop.f32.mrf.mxu0
      %v2577 = vadd.f32 0.0, %v2576
      %v2578 = vpop.f32.mrf.mxu0
      %v2579 = vadd.f32 0.0, %v2578
      %2580 = vmatmul.bf16.gmra.mxu0 %v2480
      %v2581 = vpop.f32.mrf.mxu0
      %v2582 = vadd.f32 0.0, %v2581
      %v2583 = vpop.f32.mrf.mxu0
      %v2584 = vadd.f32 0.0, %v2583
      %2585 = vmatmul.bf16.gmra.mxu0 %v2481
      %v2586 = vpop.f32.mrf.mxu0
      %v2587 = vadd.f32 0.0, %v2586
      %v2588 = vpop.f32.mrf.mxu0
      %v2589 = vadd.f32 0.0, %v2588
      %2590 = vmatmul.bf16.gmra.mxu0 %v2482
      %v2591 = vpop.f32.mrf.mxu0
      %v2592 = vadd.f32 0.0, %v2591
      %v2593 = vpop.f32.mrf.mxu0
      %v2594 = vadd.f32 0.0, %v2593
      %2595 = vmatmul.bf16.gmra.mxu0 %v2483
      %v2596 = vpop.f32.mrf.mxu0
      %v2597 = vadd.f32 0.0, %v2596
      %v2598 = vpop.f32.mrf.mxu0
      %2599 = vdwg.mxu0
      %v2600 = vadd.f32 %v2438, %v2552
      %v2601 = vadd.f32 %v2439, %v2554
      %v2602 = vadd.f32 %v2440, %v2557
      %v2603 = vadd.f32 %v2441, %v2559
      %v2604 = vadd.f32 %v2442, %v2562
      %v2605 = vadd.f32 %v2443, %v2564
      %v2606 = vadd.f32 %v2444, %v2567
      %v2607 = vadd.f32 %v2445, %v2569
      %v2608 = vadd.f32 %v2446, %v2572
      %v2609 = vadd.f32 %v2447, %v2574
      %v2610 = vadd.f32 %v2448, %v2577
      %v2611 = vadd.f32 %v2449, %v2579
      %v2612 = vadd.f32 %v2450, %v2582
      %v2613 = vadd.f32 %v2451, %v2584
      %v2614 = vadd.f32 %v2452, %v2587
      %v2615 = vadd.f32 %v2453, %v2589
      %v2616 = vadd.f32 %v2454, %v2592
      %v2617 = vadd.f32 %v2455, %v2594
      %v2618 = vadd.f32 %v2456, %v2597
      %2619 = vst [vmem:[%s390] sm:$0xff] %v2600
      %2620 = vst [vmem:[%s390 + $0x8] sm:$0xff] %v2601
      %2621 = vst [vmem:[%s390 + $0x10] sm:$0xff] %v2602
      %2622 = vst [vmem:[%s390 + $0x18] sm:$0xff] %v2603
      %2623 = vst [vmem:[%s390 + $0x20] sm:$0xff] %v2604
      %2624 = vst [vmem:[%s390 + $0x28] sm:$0xff] %v2605
      %2625 = vst [vmem:[%s390 + $0x30] sm:$0xff] %v2606
      %2626 = vst [vmem:[%s390 + $0x38] sm:$0xff] %v2607
      %2627 = vst [vmem:[%s390 + $0x40] sm:$0xff] %v2608
      %2628 = vst [vmem:[%s390 + $0x48] sm:$0xff] %v2609
      %2629 = vst [vmem:[%s390 + $0x50] sm:$0xff] %v2610
      %2630 = vst [vmem:[%s390 + $0x58] sm:$0xff] %v2611
      %2631 = vst [vmem:[%s390 + $0x60] sm:$0xff] %v2612
      %2632 = vst [vmem:[%s390 + $0x68] sm:$0xff] %v2613
      %2633 = vst [vmem:[%s390 + $0x70] sm:$0xff] %v2614
      %2634 = vst [vmem:[%s390 + $0x78] sm:$0xff] %v2615
      %2635 = vst [vmem:[%s390 + $0x80] sm:$0xff] %v2616
      %2636 = vst [vmem:[%s390 + $0x88] sm:$0xff] %v2617
      %2637 = vst [vmem:[%s390 + $0x90] sm:$0xff] %v2618
      %s2638 = ssub.s32 0, %s630
      %s2639 = smul.u32 %s2638, 19
      %v2640 = vstv %s2639
      %vm2641 = vcmp.ge.s32.totalorder %v606, %v2640
      %vm2642 = vcmp.ge.s32.totalorder %v607, %v2640
      %vm2643 = vcmp.ge.s32.totalorder %v608, %v2640
      %vm2644 = vcmp.ge.s32.totalorder %v609, %v2640
      %vm2645 = vcmp.ge.s32.totalorder %v610, %v2640
      %vm2646 = vcmp.ge.s32.totalorder %v611, %v2640
      %vm2647 = vcmp.ge.s32.totalorder %v612, %v2640
      %vm2648 = vcmp.ge.s32.totalorder %v613, %v2640
      %vm2649 = vcmp.ge.s32.totalorder %v614, %v2640
      %vm2650 = vcmp.ge.s32.totalorder %v615, %v2640
      %vm2651 = vcmp.ge.s32.totalorder %v616, %v2640
      %vm2652 = vcmp.ge.s32.totalorder %v617, %v2640
      %vm2653 = vcmp.ge.s32.totalorder %v618, %v2640
      %vm2654 = vcmp.ge.s32.totalorder %v619, %v2640
      %vm2655 = vcmp.ge.s32.totalorder %v620, %v2640
      %vm2656 = vcmp.ge.s32.totalorder %v621, %v2640
      %vm2657 = vcmp.ge.s32.totalorder %v622, %v2640
      %vm2658 = vcmp.ge.s32.totalorder %v623, %v2640
      %vm2659 = vcmp.ge.s32.totalorder %v624, %v2640
      %s2660 = ssub.s32 16, %s630
      %s2661 = smul.u32 %s2660, 19
      %v2662 = vstv %s2661
      %vm2663 = vcmp.lt.s32.totalorder %v606, %v2662
      %vm2664 = vcmp.lt.s32.totalorder %v607, %v2662
      %vm2665 = vcmp.lt.s32.totalorder %v608, %v2662
      %vm2666 = vcmp.lt.s32.totalorder %v609, %v2662
      %vm2667 = vcmp.lt.s32.totalorder %v610, %v2662
      %vm2668 = vcmp.lt.s32.totalorder %v611, %v2662
      %vm2669 = vcmp.lt.s32.totalorder %v612, %v2662
      %vm2670 = vcmp.lt.s32.totalorder %v613, %v2662
      %vm2671 = vcmp.lt.s32.totalorder %v614, %v2662
      %vm2672 = vcmp.lt.s32.totalorder %v615, %v2662
      %vm2673 = vcmp.lt.s32.totalorder %v616, %v2662
      %vm2674 = vcmp.lt.s32.totalorder %v617, %v2662
      %vm2675 = vcmp.lt.s32.totalorder %v618, %v2662
      %vm2676 = vcmp.lt.s32.totalorder %v619, %v2662
      %vm2677 = vcmp.lt.s32.totalorder %v620, %v2662
      %vm2678 = vcmp.lt.s32.totalorder %v621, %v2662
      %vm2679 = vcmp.lt.s32.totalorder %v622, %v2662
      %vm2680 = vcmp.lt.s32.totalorder %v623, %v2662
      %vm2681 = vcmp.lt.s32.totalorder %v624, %v2662
      %vm2682 = vmand %vm2641, %vm2663
      %vm2683 = vmand %vm2642, %vm2664
      %vm2684 = vmand %vm2643, %vm2665
      %vm2685 = vmand %vm2644, %vm2666
      %vm2686 = vmand %vm2645, %vm2667
      %vm2687 = vmand %vm2646, %vm2668
      %vm2688 = vmand %vm2647, %vm2669
      %vm2689 = vmand %vm2648, %vm2670
      %vm2690 = vmand %vm2649, %vm2671
      %vm2691 = vmand %vm2650, %vm2672
      %vm2692 = vmand %vm2651, %vm2673
      %vm2693 = vmand %vm2652, %vm2674
      %vm2694 = vmand %vm2653, %vm2675
      %vm2695 = vmand %vm2654, %vm2676
      %vm2696 = vmand %vm2655, %vm2677
      %vm2697 = vmand %vm2656, %vm2678
      %vm2698 = vmand %vm2657, %vm2679
      %vm2699 = vmand %vm2658, %vm2680
      %vm2700 = vmand %vm2659, %vm2681
      %v2701 = vld [vmem:[%s6] sm:$0xff]
      %v2702 = vld [vmem:[%s6 + $0x8] sm:$0xff]
      %v2703 = vld [vmem:[%s6 + $0x10] sm:$0xff]
      %v2704 = vld [vmem:[%s6 + $0x18] sm:$0xff]
      %v2705 = vld [vmem:[%s6 + $0x20] sm:$0xff]
      %v2706 = vld [vmem:[%s6 + $0x28] sm:$0xff]
      %v2707 = vld [vmem:[%s6 + $0x30] sm:$0xff]
      %v2708 = vld [vmem:[%s6 + $0x38] sm:$0xff]
      %v2709 = vld [vmem:[%s6 + $0x40] sm:$0xff]
      %v2710 = vld [vmem:[%s6 + $0x48] sm:$0xff]
      %v2711 = vld [vmem:[%s6 + $0x50] sm:$0xff]
      %v2712 = vld [vmem:[%s6 + $0x58] sm:$0xff]
      %v2713 = vld [vmem:[%s6 + $0x60] sm:$0xff]
      %v2714 = vld [vmem:[%s6 + $0x68] sm:$0xff]
      %v2715 = vld [vmem:[%s6 + $0x70] sm:$0xff]
      %v2716 = vld [vmem:[%s6 + $0x78] sm:$0xff]
      %v2717 = vld [vmem:[%s6 + $0x80] sm:$0xff]
      %v2718 = vld [vmem:[%s6 + $0x88] sm:$0xff]
      %v2719 = vld [vmem:[%s6 + $0x90] sm:$0xff]
      %vm2720 = vcmp.gt.s32.totalorder %v2701, 0
      %vm2721 = vcmp.gt.s32.totalorder %v2702, 0
      %vm2722 = vcmp.gt.s32.totalorder %v2703, 0
      %vm2723 = vcmp.gt.s32.totalorder %v2704, 0
      %vm2724 = vcmp.gt.s32.totalorder %v2705, 0
      %vm2725 = vcmp.gt.s32.totalorder %v2706, 0
      %vm2726 = vcmp.gt.s32.totalorder %v2707, 0
      %vm2727 = vcmp.gt.s32.totalorder %v2708, 0
      %vm2728 = vcmp.gt.s32.totalorder %v2709, 0
      %vm2729 = vcmp.gt.s32.totalorder %v2710, 0
      %vm2730 = vcmp.gt.s32.totalorder %v2711, 0
      %vm2731 = vcmp.gt.s32.totalorder %v2712, 0
      %vm2732 = vcmp.gt.s32.totalorder %v2713, 0
      %vm2733 = vcmp.gt.s32.totalorder %v2714, 0
      %vm2734 = vcmp.gt.s32.totalorder %v2715, 0
      %vm2735 = vcmp.gt.s32.totalorder %v2716, 0
      %vm2736 = vcmp.gt.s32.totalorder %v2717, 0
      %vm2737 = vcmp.gt.s32.totalorder %v2718, 0
      %vm2738 = vcmp.gt.s32.totalorder %v2719, 0
      %vm2739 = vmand %vm2682, %vm2720
      %vm2740 = vmand %vm2683, %vm2721
      %vm2741 = vmand %vm2684, %vm2722
      %vm2742 = vmand %vm2685, %vm2723
      %vm2743 = vmand %vm2686, %vm2724
      %vm2744 = vmand %vm2687, %vm2725
      %vm2745 = vmand %vm2688, %vm2726
      %vm2746 = vmand %vm2689, %vm2727
      %vm2747 = vmand %vm2690, %vm2728
      %vm2748 = vmand %vm2691, %vm2729
      %vm2749 = vmand %vm2692, %vm2730
      %vm2750 = vmand %vm2693, %vm2731
      %vm2751 = vmand %vm2694, %vm2732
      %vm2752 = vmand %vm2695, %vm2733
      %vm2753 = vmand %vm2696, %vm2734
      %vm2754 = vmand %vm2697, %vm2735
      %vm2755 = vmand %vm2698, %vm2736
      %vm2756 = vmand %vm2699, %vm2737
      %vm2757 = vmand %vm2700, %vm2738
      %v2758 = vsel %vm2739, 1, 0
      %v2759 = vsel %vm2740, 1, 0
      %v2760 = vsel %vm2741, 1, 0
      %v2761 = vsel %vm2742, 1, 0
      %v2762 = vsel %vm2743, 1, 0
      %v2763 = vsel %vm2744, 1, 0
      %v2764 = vsel %vm2745, 1, 0
      %v2765 = vsel %vm2746, 1, 0
      %v2766 = vsel %vm2747, 1, 0
      %v2767 = vsel %vm2748, 1, 0
      %v2768 = vsel %vm2749, 1, 0
      %v2769 = vsel %vm2750, 1, 0
      %v2770 = vsel %vm2751, 1, 0
      %v2771 = vsel %vm2752, 1, 0
      %v2772 = vsel %vm2753, 1, 0
      %v2773 = vsel %vm2754, 1, 0
      %v2774 = vsel %vm2755, 1, 0
      %v2775 = vsel %vm2756, 1, 0
      %v2776 = vsel %vm2757, 1, 0
      %2777 = vset.pattern.permute.xlu0 0
      %2778 = vperm.xlu0 %2777, %v2758
      %v2779 = vpop.permute.xlu0 %2778
      %2780 = vset.pattern.permute.xlu0 0
      %2781 = vperm.xlu0 %2780, %v2759
      %v2782 = vpop.permute.xlu0 %2781
      %2783 = vset.pattern.permute.xlu0 0
      %2784 = vperm.xlu0 %2783, %v2760
      %v2785 = vpop.permute.xlu0 %2784
      %2786 = vset.pattern.permute.xlu0 0
      %2787 = vperm.xlu0 %2786, %v2761
      %v2788 = vpop.permute.xlu0 %2787
      %2789 = vset.pattern.permute.xlu0 0
      %2790 = vperm.xlu0 %2789, %v2762
      %v2791 = vpop.permute.xlu0 %2790
      %2792 = vset.pattern.permute.xlu0 0
      %2793 = vperm.xlu0 %2792, %v2763
      %v2794 = vpop.permute.xlu0 %2793
      %2795 = vset.pattern.permute.xlu0 0
      %2796 = vperm.xlu0 %2795, %v2764
      %v2797 = vpop.permute.xlu0 %2796
      %2798 = vset.pattern.permute.xlu0 0
      %2799 = vperm.xlu0 %2798, %v2765
      %v2800 = vpop.permute.xlu0 %2799
      %2801 = vset.pattern.permute.xlu0 0
      %2802 = vperm.xlu0 %2801, %v2766
      %v2803 = vpop.permute.xlu0 %2802
      %2804 = vset.pattern.permute.xlu0 0
      %2805 = vperm.xlu0 %2804, %v2767
      %v2806 = vpop.permute.xlu0 %2805
      %2807 = vset.pattern.permute.xlu0 0
      %2808 = vperm.xlu0 %2807, %v2768
      %v2809 = vpop.permute.xlu0 %2808
      %2810 = vset.pattern.permute.xlu0 0
      %2811 = vperm.xlu0 %2810, %v2769
      %v2812 = vpop.permute.xlu0 %2811
      %2813 = vset.pattern.permute.xlu0 0
      %2814 = vperm.xlu0 %2813, %v2770
      %v2815 = vpop.permute.xlu0 %2814
      %2816 = vset.pattern.permute.xlu0 0
      %2817 = vperm.xlu0 %2816, %v2771
      %v2818 = vpop.permute.xlu0 %2817
      %2819 = vset.pattern.permute.xlu0 0
      %2820 = vperm.xlu0 %2819, %v2772
      %v2821 = vpop.permute.xlu0 %2820
      %2822 = vset.pattern.permute.xlu0 0
      %2823 = vperm.xlu0 %2822, %v2773
      %v2824 = vpop.permute.xlu0 %2823
      %2825 = vset.pattern.permute.xlu0 0
      %2826 = vperm.xlu0 %2825, %v2774
      %v2827 = vpop.permute.xlu0 %2826
      %2828 = vset.pattern.permute.xlu0 0
      %2829 = vperm.xlu0 %2828, %v2775
      %v2830 = vpop.permute.xlu0 %2829
      %2831 = vset.pattern.permute.xlu0 0
      %2832 = vperm.xlu0 %2831, %v2776
      %v2833 = vpop.permute.xlu0 %2832
      %vm2834 = vcmp.eq.s32.totalorder %v2779, 1
      %vm2835 = vcmp.eq.s32.totalorder %v2782, 1
      %vm2836 = vcmp.eq.s32.totalorder %v2785, 1
      %vm2837 = vcmp.eq.s32.totalorder %v2788, 1
      %vm2838 = vcmp.eq.s32.totalorder %v2791, 1
      %vm2839 = vcmp.eq.s32.totalorder %v2794, 1
      %vm2840 = vcmp.eq.s32.totalorder %v2797, 1
      %vm2841 = vcmp.eq.s32.totalorder %v2800, 1
      %vm2842 = vcmp.eq.s32.totalorder %v2803, 1
      %vm2843 = vcmp.eq.s32.totalorder %v2806, 1
      %vm2844 = vcmp.eq.s32.totalorder %v2809, 1
      %vm2845 = vcmp.eq.s32.totalorder %v2812, 1
      %vm2846 = vcmp.eq.s32.totalorder %v2815, 1
      %vm2847 = vcmp.eq.s32.totalorder %v2818, 1
      %vm2848 = vcmp.eq.s32.totalorder %v2821, 1
      %vm2849 = vcmp.eq.s32.totalorder %v2824, 1
      %vm2850 = vcmp.eq.s32.totalorder %v2827, 1
      %vm2851 = vcmp.eq.s32.totalorder %v2830, 1
      %vm2852 = vcmp.eq.s32.totalorder %v2833, 1
      %v2853 = vsel %vm2834, %v2600, 0.0
      %v2854 = vsel %vm2835, %v2601, 0.0
      %v2855 = vsel %vm2836, %v2602, 0.0
      %v2856 = vsel %vm2837, %v2603, 0.0
      %v2857 = vsel %vm2838, %v2604, 0.0
      %v2858 = vsel %vm2839, %v2605, 0.0
      %v2859 = vsel %vm2840, %v2606, 0.0
      %v2860 = vsel %vm2841, %v2607, 0.0
      %v2861 = vsel %vm2842, %v2608, 0.0
      %v2862 = vsel %vm2843, %v2609, 0.0
      %v2863 = vsel %vm2844, %v2610, 0.0
      %v2864 = vsel %vm2845, %v2611, 0.0
      %v2865 = vsel %vm2846, %v2612, 0.0
      %v2866 = vsel %vm2847, %v2613, 0.0
      %v2867 = vsel %vm2848, %v2614, 0.0
      %v2868 = vsel %vm2849, %v2615, 0.0
      %v2869 = vsel %vm2850, %v2616, 0.0
      %v2870 = vsel %vm2851, %v2617, 0.0
      %v2871 = vsel %vm2852, %v2618, 0.0
      %v2872 = vadd.f32 %v2853, %v2854
      %v2873 = vadd.f32 %v2872, %v2855
      %v2874 = vadd.f32 %v2873, %v2856
      %v2875 = vadd.f32 %v2874, %v2857
      %v2876 = vadd.f32 %v2875, %v2858
      %v2877 = vadd.f32 %v2876, %v2859
      %v2878 = vadd.f32 %v2877, %v2860
      %v2879 = vadd.f32 %v2878, %v2861
      %v2880 = vadd.f32 %v2879, %v2862
      %v2881 = vadd.f32 %v2880, %v2863
      %v2882 = vadd.f32 %v2881, %v2864
      %v2883 = vadd.f32 %v2882, %v2865
      %v2884 = vadd.f32 %v2883, %v2866
      %v2885 = vadd.f32 %v2884, %v2867
      %v2886 = vadd.f32 %v2885, %v2868
      %v2887 = vadd.f32 %v2886, %v2869
      %v2888 = vadd.f32 %v2887, %v2870
      %v2889 = vadd.f32 %v2888, %v2871
      %v2890 = vrot.slane %v2889, 4
      %v2891 = vadd.f32 %v2889, %v2890
      %v2892 = vrot.slane %v2891, 2
      %v2893 = vadd.f32 %v2891, %v2892
      %v2894 = vrot.slane %v2893, 1
      %v2895 = vadd.f32 %v2893, %v2894
      %2896 = vst [vmem:[%s399] sm:$0x1] %v2895
      %v2897 = vmul.f32 %v2853, %v2853
      %v2898 = vmul.f32 %v2854, %v2854
      %v2899 = vmul.f32 %v2855, %v2855
      %v2900 = vmul.f32 %v2856, %v2856
      %v2901 = vmul.f32 %v2857, %v2857
      %v2902 = vmul.f32 %v2858, %v2858
      %v2903 = vmul.f32 %v2859, %v2859
      %v2904 = vmul.f32 %v2860, %v2860
      %v2905 = vmul.f32 %v2861, %v2861
      %v2906 = vmul.f32 %v2862, %v2862
      %v2907 = vmul.f32 %v2863, %v2863
      %v2908 = vmul.f32 %v2864, %v2864
      %v2909 = vmul.f32 %v2865, %v2865
      %v2910 = vmul.f32 %v2866, %v2866
      %v2911 = vmul.f32 %v2867, %v2867
      %v2912 = vmul.f32 %v2868, %v2868
      %v2913 = vmul.f32 %v2869, %v2869
      %v2914 = vmul.f32 %v2870, %v2870
      %v2915 = vmul.f32 %v2871, %v2871
      %v2916 = vadd.f32 %v2897, %v2898
      %v2917 = vadd.f32 %v2916, %v2899
      %v2918 = vadd.f32 %v2917, %v2900
      %v2919 = vadd.f32 %v2918, %v2901
      %v2920 = vadd.f32 %v2919, %v2902
      %v2921 = vadd.f32 %v2920, %v2903
      %v2922 = vadd.f32 %v2921, %v2904
      %v2923 = vadd.f32 %v2922, %v2905
      %v2924 = vadd.f32 %v2923, %v2906
      %v2925 = vadd.f32 %v2924, %v2907
      %v2926 = vadd.f32 %v2925, %v2908
      %v2927 = vadd.f32 %v2926, %v2909
      %v2928 = vadd.f32 %v2927, %v2910
      %v2929 = vadd.f32 %v2928, %v2911
      %v2930 = vadd.f32 %v2929, %v2912
      %v2931 = vadd.f32 %v2930, %v2913
      %v2932 = vadd.f32 %v2931, %v2914
      %v2933 = vadd.f32 %v2932, %v2915
      %v2934 = vrot.slane %v2933, 4
      %v2935 = vadd.f32 %v2933, %v2934
      %v2936 = vrot.slane %v2935, 2
      %v2937 = vadd.f32 %v2935, %v2936
      %v2938 = vrot.slane %v2937, 1
      %v2939 = vadd.f32 %v2937, %v2938
      %2940 = vst [vmem:[%s399 + $0x1] sm:$0x1] %v2939
      %s2941 = smul.u32 19, %s25
      %p2942 = scmp.lt.s32.totalorder %s24, 1
      %s2943 = scalar_select %p2942, %s24, 1
      %p2944 = scmp.lt.s32.totalorder %s2941, 56
      %s2945 = scalar_select %p2944, %s2941, 56
      %s2946 = smul.addr %s2943, 57
      %s2947 = sadd.s32 %s2945, %s2946
      %s2948 = smul.addr %s2947, 8
      %s2949 = scalar_lea.vmem %s7, %s2948
      %p2950 = scmp.lt.s32.totalorder %s24, 1
      %s2951 = scalar_select %p2950, %s24, 1
      %p2952 = scmp.lt.s32.totalorder %s25, 2
      %s2953 = scalar_select %p2952, %s25, 2
      %s2954 = smul.addr %s2951, 3
      %s2955 = sadd.s32 %s2953, %s2954
      %s2956 = smul.addr %s2955, 8
      %s2957 = scalar_lea.vmem %s8, %s2956
      // Predicated region
      $region49: #{conv_block_forward.3} parent=47 // pred_check
        %p2958 = pneg %p213
      $region50: #{conv_block_forward.3} parent=47 // pred_check_branch
        %2960 = sbr.rel (%p2958) target = $region52
      $region51: #{conv_block_forward.3} parent=47 // pred_region
        %s2961 = smul.u32 19, %s25
      $region52: #{conv_block_forward.3} parent=47 // pred_fallthru
        _
      // Predicated region
      $region53: #{conv_block_forward.3} parent=47 // pred_check
        %p2962 = pneg %p241
      $region54: #{conv_block_forward.3} parent=47 // pred_check_branch
        %2964 = sbr.rel (%p2962) target = $region56
      $region55: #{conv_block_forward.3} parent=47 // pred_region
        _
      $region56: #{conv_block_forward.3} parent=47 // pred_fallthru
        _
    $region48: #{conv_block_forward.3} parent=5 // pred_fallthru
      _
    %p2965 = scmp.le.s32.totalorder 2, %s15
    // Predicated region
    $region57: #{conv_block_forward.3} parent=5 // pred_check
      %p2966 = pneg %p2965
    $region58: #{conv_block_forward.3} parent=5 // pred_check_branch
      %2968 = sbr.rel (%p2966) target = $region60
    $region59: #{conv_block_forward.3} parent=5 // pred_region
      %s2969 = ssub.s32 %s15, 2
      // Predicated region
      $region61: #{conv_block_forward.3} parent=59 // pred_check
        %p2970 = pneg %p219
      $region62: #{conv_block_forward.3} parent=59 // pred_check_branch
        %2972 = sbr.rel (%p2970) target = $region64
      $region63: #{conv_block_forward.3} parent=59 // pred_region
        %s2973 = smul.u32 19, %s27
        %p2974 = scmp.lt.s32.totalorder %s26, 1
        %s2975 = scalar_select %p2974, %s26, 1
        %p2976 = scmp.lt.s32.totalorder %s2973, 56
        %s2977 = scalar_select %p2976, %s2973, 56
        %s2978 = smul.addr %s2975, 57
        %s2979 = sadd.s32 %s2977, %s2978
        %s2980 = smul.addr %s2979, 8
        %s2981 = scalar_lea.vmem %s7, %s2980
      $region64: #{conv_block_forward.3} parent=59 // pred_fallthru
        _
      // Predicated region
      $region65: #{conv_block_forward.3} parent=59 // pred_check
        %p2982 = pneg %p247
      $region66: #{conv_block_forward.3} parent=59 // pred_check_branch
        %2984 = sbr.rel (%p2982) target = $region68
      $region67: #{conv_block_forward.3} parent=59 // pred_region
        %p2985 = scmp.lt.s32.totalorder %s26, 1
        %s2986 = scalar_select %p2985, %s26, 1
        %p2987 = scmp.lt.s32.totalorder %s27, 2
        %s2988 = scalar_select %p2987, %s27, 2
        %s2989 = smul.addr %s2986, 3
        %s2990 = sadd.s32 %s2988, %s2989
        %s2991 = smul.addr %s2990, 8
        %s2992 = scalar_lea.vmem %s8, %s2991
      $region68: #{conv_block_forward.3} parent=59 // pred_fallthru
        _
    $region60: #{conv_block_forward.3} parent=5 // pred_fallthru
      _
  $region6: #{conv_block_forward.3} parent=0 // loop_footer
    %s19 = sadd.s32 1, %s15
  $region7: #{conv_block_forward.3} parent=0 // loop_footer_branch
    %14 = sbr.rel target = $region3
  $region8: #{conv_block_forward.3} parent=0 // loop_exit
    _

</llo_original>
